<compile_context>
chip_gen: v5e
topology: v5e:2x2
jax: 0.10.0
libtpu: 0.0.40
codegen_flags: <defaults>
</compile_context>

<pallas_src>
import jax
import jax.numpy as jnp
from jax.experimental import pallas as pl
from jax.experimental.pallas import tpu as pltpu

GLOBAL_AVERAGE = 3.581477826039139

_VMEM = pl.BlockSpec(memory_space=pltpu.MemorySpace.VMEM)
_SMEM = pl.BlockSpec(memory_space=pltpu.MemorySpace.SMEM)


def _round_up(x, m):
    return (x + m - 1) // m * m


# ---------------- 3-layer item MLP (Linear-ReLU-Linear-ReLU-Linear), row-gridded ----------------
def _mlp_kernel(x_ref, w1_ref, b1_ref, w2_ref, b2_ref, w3_ref, b3_ref, out_ref):
    x = x_ref[...]
    h = jnp.maximum(
        jnp.dot(x, w1_ref[...], preferred_element_type=jnp.float32) + b1_ref[...], 0.0)
    h = jnp.maximum(
        jnp.dot(h, w2_ref[...], preferred_element_type=jnp.float32) + b2_ref[...], 0.0)
    out_ref[...] = (
        jnp.dot(h, w3_ref[...], preferred_element_type=jnp.float32) + b3_ref[...])


def mlp_forward(x, w1, b1, w2, b2, w3, b3, *, tm=256):
    # TODO(synk): on v7x (64 MiB VMEM/TC) halve tm (e.g. 128) if hidden dims grow large.
    n, d = x.shape
    h1 = w1.shape[1]
    f = w3.shape[1]
    tm = min(tm, _round_up(n, 8))          # small-N: one (8-aligned) block
    n_pad = _round_up(n, tm)
    if n_pad != n:
        x = jnp.pad(x, ((0, n_pad - n), (0, 0)))
    full = lambda i: (0, 0)                # weights: resident full blocks
    out = pl.pallas_call(
        _mlp_kernel,
        out_shape=jax.ShapeDtypeStruct((n_pad, f), jnp.float32),
        grid=(n_pad // tm,),
        in_specs=[
            pl.BlockSpec((tm, d), lambda i: (i, 0)),
            pl.BlockSpec((d, h1), full),
            pl.BlockSpec((1, h1), full),
            pl.BlockSpec((h1, h1), full),
            pl.BlockSpec((1, h1), full),
            pl.BlockSpec((h1, f), full),
            pl.BlockSpec((1, f), full),
        ],
        out_specs=pl.BlockSpec((tm, f), lambda i: (i, 0)),
        compiler_params=pltpu.CompilerParams(dimension_semantics=("parallel",)),
    )(x, w1, b1, w2, b2, w3, b3)
    return out[:n]


# -------- single-layer LSTM (last hidden state) + fused hybrid-combine epilogue -----------------
def _lstm_combine_kernel(interp_ref, x_ref, wih_ref, whh_ref, b_ref,
                         ie_ref, ub_ref, ib_ref, uf_ref, itf_ref, out_ref):
    bsz, s, f = x_ref.shape
    hdim = whh_ref.shape[0]

    # Hoisted input projection: one [B*S, F] @ [F, 4H] matmul instead of S tiny matmuls
    # inside the serial recurrence.
    x_flat = x_ref[...].reshape(bsz * s, f)
    gx = (jnp.dot(x_flat, wih_ref[...], preferred_element_type=jnp.float32)
          + b_ref[...]).reshape(bsz, s, 4 * hdim)

    w_hh = whh_ref[...]
    h = jnp.zeros((bsz, hdim), jnp.float32)
    c = jnp.zeros((bsz, hdim), jnp.float32)
    # S is a small static constant -> fully unrolled so the recurrent matmul (MXU),
    # sigmoid/tanh (EUP) and elementwise gate math (VPU) can interleave across steps.
    for t in range(s):
        gates = gx[:, t, :] + jnp.dot(h, w_hh, preferred_element_type=jnp.float32)
        i_g = jax.nn.sigmoid(gates[:, 0 * hdim:1 * hdim])
        f_g = jax.nn.sigmoid(gates[:, 1 * hdim:2 * hdim])
        g_g = jnp.tanh(gates[:, 2 * hdim:3 * hdim])
        o_g = jax.nn.sigmoid(gates[:, 3 * hdim:4 * hdim])
        c = f_g * c + i_g * g_g
        h = o_g * jnp.tanh(c)

    # Fused hybrid combine epilogue (no separate kernel / HBM round-trip).
    a = interp_ref[0]
    mf = jnp.sum(uf_ref[...] * itf_ref[...], axis=-1, keepdims=True)       # diag(UF @ IF^T)
    content = jnp.sum(h * ie_ref[...], axis=-1, keepdims=True)             # diag(UE @ IE^T)
    out_ref[...] = (GLOBAL_AVERAGE + ub_ref[...] + ib_ref[...]
                    + a * mf + (1.0 - a) * content)


def lstm_combine(interp, x_bsf, w_ih, w_hh, b, item_emb, ub, ib, uf, itf):
    bsz = x_bsf.shape[0]
    bpad = _round_up(max(bsz, 8), 8)       # fill vreg sublanes / MXU rows
    if bpad != bsz:
        padb = lambda arr: jnp.pad(arr, ((0, bpad - bsz),) + ((0, 0),) * (arr.ndim - 1))
        x_bsf, item_emb, ub, ib, uf, itf = map(padb, (x_bsf, item_emb, ub, ib, uf, itf))
    out = pl.pallas_call(
        _lstm_combine_kernel,
        out_shape=jax.ShapeDtypeStruct((bpad, 1), jnp.float32),
        in_specs=[_SMEM] + [_VMEM] * 9,
        out_specs=_VMEM,
    )(interp, x_bsf, w_ih, w_hh, b, item_emb, ub, ib, uf, itf)
    return out[:bsz]


# ---------------- parameter init (deterministic, matches nn.Module shapes) ----------------------
def init_params(key, num_users, num_items, num_factors, item_hiddim, user_hiddim, item_input_dim):
    assert user_hiddim == num_factors, "ContentRecommender requires user_hiddim == num_factors"
    ks = jax.random.split(key, 14)

    def lin(kw, kb, fan_in, fan_out):
        bound = 1.0 / jnp.sqrt(fan_in)
        w = jax.random.uniform(kw, (fan_in, fan_out), jnp.float32, -bound, bound)  # stored [in, out]
        b = jax.random.uniform(kb, (1, fan_out), jnp.float32, -bound, bound)
        return w, b

    w1, b1 = lin(ks[0], ks[1], item_input_dim, item_hiddim)
    w2, b2 = lin(ks[2], ks[3], item_hiddim, item_hiddim)
    w3, b3 = lin(ks[4], ks[5], item_hiddim, num_factors)

    hb = 1.0 / jnp.sqrt(user_hiddim)
    w_ih = jax.random.uniform(ks[6], (num_factors, 4 * user_hiddim), jnp.float32, -hb, hb)
    w_hh = jax.random.uniform(ks[7], (user_hiddim, 4 * user_hiddim), jnp.float32, -hb, hb)
    # b = b_ih + b_hh merged (forward-equivalent; sum the two PyTorch biases when porting weights).
    b_lstm = (jax.random.uniform(ks[8], (1, 4 * user_hiddim), jnp.float32, -hb, hb)
              + jax.random.uniform(ks[9], (1, 4 * user_hiddim), jnp.float32, -hb, hb))

    return dict(
        mlp=(w1, b1, w2, b2, w3, b3),
        lstm=(w_ih, w_hh, b_lstm),
        user_factors=jax.random.normal(ks[10], (num_users, num_factors), jnp.float32),
        item_factors=jax.random.normal(ks[11], (num_items, num_factors), jnp.float32),
        user_biases=jax.random.uniform(ks[12], (num_users, 1), jnp.float32, -0.25, 0.25),
        item_biases=jax.random.uniform(ks[13], (num_items, 1), jnp.float32, -0.25, 0.25),
        interp=jnp.array([0.5], jnp.float32),
        # NOTE: only arrays in this pytree (no python ints) so jax.jit tracing is clean.
    )


# ---------------- HybridRecommender.forward ------------------------------------------------------
def hybrid_forward(params, users, items, user_item_inputs, item_inputs):
    bsz = users.shape[0]
    n_hist = user_item_inputs.shape[0]
    seq_len = n_hist // bsz
    f = params["user_factors"].shape[1]            # static shape, not a traced value

    # Shared item MLP over user-history rows AND candidate-item rows in ONE pallas_call.
    mlp_in = jnp.concatenate([user_item_inputs, item_inputs], axis=0)     # [B*S + B, D]
    emb = mlp_forward(mlp_in, *params["mlp"])                             # [B*S + B, F]
    ui_emb = emb[:n_hist].reshape(bsz, seq_len, f)                        # [B, S, F] (free reshape)
    item_emb = emb[n_hist:]                                               # [B, F]

    # Embedding lookups (plain-JAX glue).
    ub = params["user_biases"][users]                                     # [B, 1]
    ib = params["item_biases"][items]                                     # [B, 1]
    uf = params["user_factors"][users]                                    # [B, F]
    itf = params["item_factors"][items]                                   # [B, F]

    out = lstm_combine(params["interp"], ui_emb, *params["lstm"],
                       item_emb, ub, ib, uf, itf)                         # [B, 1]
    return out[:, 0]                                                      # [B]


if __name__ == "__main__":
    # Small, forward-consistent shapes.
    NUM_USERS, NUM_ITEMS = 10, 12
    NUM_FACTORS, ITEM_HIDDIM, USER_HIDDIM = 32, 64, 32   # user_hiddim must equal num_factors
    ITEM_INPUT_DIM = 20                                  # synthetic stand-in for item_inputs_1m.npy width
    B, S = 2, 8

    key = jax.random.PRNGKey(0)
    kp, ku, ki, kx, ky = jax.random.split(key, 5)

    params = init_params(kp, NUM_USERS, NUM_ITEMS, NUM_FACTORS, ITEM_HIDDIM, USER_HIDDIM,
                         ITEM_INPUT_DIM)

    users = jax.random.randint(ku, (B,), 0, NUM_USERS, dtype=jnp.int32)
    items = jax.random.randint(ki, (B,), 0, NUM_ITEMS, dtype=jnp.int32)
    user_item_inputs = jax.random.normal(kx, (B * S, ITEM_INPUT_DIM), jnp.float32)
    item_inputs = jax.random.normal(ky, (B, ITEM_INPUT_DIM), jnp.float32)

    preds = jax.jit(hybrid_forward)(params, users, items, user_item_inputs, item_inputs)
    jax.block_until_ready(preds)
    assert preds.shape == (B,) and preds.dtype == jnp.float32
    print("KERNEL_OK")
</pallas_src>

<mosaic_0001>
module attributes {stable_mosaic.version = 11 : i64} {
  func.func @_mlp_kernel(%arg0: i32, %arg1: memref<24x20xf32, #tpu.memory_space<vmem>>, %arg2: memref<20x64xf32, #tpu.memory_space<vmem>>, %arg3: memref<1x64xf32, #tpu.memory_space<vmem>>, %arg4: memref<64x64xf32, #tpu.memory_space<vmem>>, %arg5: memref<1x64xf32, #tpu.memory_space<vmem>>, %arg6: memref<64x32xf32, #tpu.memory_space<vmem>>, %arg7: memref<1x32xf32, #tpu.memory_space<vmem>>, %arg8: memref<24x32xf32, #tpu.memory_space<vmem>>) attributes {dimension_semantics = [#tpu.dimension_semantics<parallel>], iteration_bounds = array<i64: 1>, scalar_prefetch = 0 : i64, scratch_operands = 0 : i64, tpu.core_type = #tpu.core_type<tc>, window_params = [{transform_indices = @transform_0, window_bounds = array<i64: 24, 20>}, {pipeline_mode = #tpu.pipeline_mode<synchronous>, transform_indices = @transform_1, window_bounds = array<i64: 20, 64>}, {pipeline_mode = #tpu.pipeline_mode<synchronous>, transform_indices = @transform_2, window_bounds = array<i64: 1, 64>}, {pipeline_mode = #tpu.pipeline_mode<synchronous>, transform_indices = @transform_3, window_bounds = array<i64: 64, 64>}, {pipeline_mode = #tpu.pipeline_mode<synchronous>, transform_indices = @transform_4, window_bounds = array<i64: 1, 64>}, {pipeline_mode = #tpu.pipeline_mode<synchronous>, transform_indices = @transform_5, window_bounds = array<i64: 64, 32>}, {pipeline_mode = #tpu.pipeline_mode<synchronous>, transform_indices = @transform_6, window_bounds = array<i64: 1, 32>}, {transform_indices = @transform_7, window_bounds = array<i64: 24, 32>}]} {
    %c0 = arith.constant 0 : index
    %c0_0 = arith.constant 0 : index
    %0 = vector.load %arg1[%c0, %c0_0] : memref<24x20xf32, #tpu.memory_space<vmem>>, vector<24x20xf32>
    %c0_1 = arith.constant 0 : index
    %c0_2 = arith.constant 0 : index
    %1 = vector.load %arg2[%c0_1, %c0_2] : memref<20x64xf32, #tpu.memory_space<vmem>>, vector<20x64xf32>
    %cst = arith.constant dense<0.000000e+00> : vector<24x64xf32>
    %2 = tpu.matmul %0, %1, %cst {dimension_numbers = #tpu.dot_dimension_numbers<[1], [0], [0], [1], [0, 0, 1, 1], [], []>} : vector<24x20xf32>, vector<20x64xf32>, vector<24x64xf32> -> vector<24x64xf32>
    %c0_3 = arith.constant 0 : index
    %c0_4 = arith.constant 0 : index
    %3 = vector.load %arg3[%c0_3, %c0_4] : memref<1x64xf32, #tpu.memory_space<vmem>>, vector<1x64xf32>
    %4 = vector.broadcast %3 : vector<1x64xf32> to vector<24x64xf32>
    %5 = arith.addf %2, %4 : vector<24x64xf32>
    %cst_5 = arith.constant 0.000000e+00 : f32
    %6 = vector.broadcast %cst_5 : f32 to vector<24x64xf32>
    %7 = arith.maximumf %5, %6 : vector<24x64xf32>
    %c0_6 = arith.constant 0 : index
    %c0_7 = arith.constant 0 : index
    %8 = vector.load %arg4[%c0_6, %c0_7] : memref<64x64xf32, #tpu.memory_space<vmem>>, vector<64x64xf32>
    %cst_8 = arith.constant dense<0.000000e+00> : vector<24x64xf32>
    %9 = tpu.matmul %7, %8, %cst_8 {dimension_numbers = #tpu.dot_dimension_numbers<[1], [0], [0], [1], [0, 0, 1, 1], [], []>} : vector<24x64xf32>, vector<64x64xf32>, vector<24x64xf32> -> vector<24x64xf32>
    %c0_9 = arith.constant 0 : index
    %c0_10 = arith.constant 0 : index
    %10 = vector.load %arg5[%c0_9, %c0_10] : memref<1x64xf32, #tpu.memory_space<vmem>>, vector<1x64xf32>
    %11 = vector.broadcast %10 : vector<1x64xf32> to vector<24x64xf32>
    %12 = arith.addf %9, %11 : vector<24x64xf32>
    %cst_11 = arith.constant 0.000000e+00 : f32
    %13 = vector.broadcast %cst_11 : f32 to vector<24x64xf32>
    %14 = arith.maximumf %12, %13 : vector<24x64xf32>
    %c0_12 = arith.constant 0 : index
    %c0_13 = arith.constant 0 : index
    %15 = vector.load %arg6[%c0_12, %c0_13] : memref<64x32xf32, #tpu.memory_space<vmem>>, vector<64x32xf32>
    %cst_14 = arith.constant dense<0.000000e+00> : vector<24x32xf32>
    %16 = tpu.matmul %14, %15, %cst_14 {dimension_numbers = #tpu.dot_dimension_numbers<[1], [0], [0], [1], [0, 0, 1, 1], [], []>} : vector<24x64xf32>, vector<64x32xf32>, vector<24x32xf32> -> vector<24x32xf32>
    %c0_15 = arith.constant 0 : index
    %c0_16 = arith.constant 0 : index
    %17 = vector.load %arg7[%c0_15, %c0_16] : memref<1x32xf32, #tpu.memory_space<vmem>>, vector<1x32xf32>
    %18 = vector.broadcast %17 : vector<1x32xf32> to vector<24x32xf32>
    %19 = arith.addf %16, %18 : vector<24x32xf32>
    %c0_17 = arith.constant 0 : index
    %c0_18 = arith.constant 0 : index
    %20 = vector.load %arg8[%c0_17, %c0_18] : memref<24x32xf32, #tpu.memory_space<vmem>>, vector<24x32xf32>
    tpu.vector_store %arg8[%c0_17, %c0_18], %19 {strides = array<i32>} : memref<24x32xf32, #tpu.memory_space<vmem>>, vector<24x32xf32>,
    return
  }
  func.func @transform_0(%arg0: i32) -> (i32, i32) {
    %c0_i32 = arith.constant 0 : i32
    %c0_i32_0 = arith.constant 0 : i32
    return %arg0, %c0_i32 : i32, i32
  }
  func.func @transform_1(%arg0: i32) -> (i32, i32) {
    %c0_i32 = arith.constant 0 : i32
    %c0_i32_0 = arith.constant 0 : i32
    %c0_i32_1 = arith.constant 0 : i32
    return %c0_i32, %c0_i32_0 : i32, i32
  }
  func.func @transform_2(%arg0: i32) -> (i32, i32) {
    %c0_i32 = arith.constant 0 : i32
    %c0_i32_0 = arith.constant 0 : i32
    %c0_i32_1 = arith.constant 0 : i32
    return %c0_i32, %c0_i32_0 : i32, i32
  }
  func.func @transform_3(%arg0: i32) -> (i32, i32) {
    %c0_i32 = arith.constant 0 : i32
    %c0_i32_0 = arith.constant 0 : i32
    %c0_i32_1 = arith.constant 0 : i32
    return %c0_i32, %c0_i32_0 : i32, i32
  }
  func.func @transform_4(%arg0: i32) -> (i32, i32) {
    %c0_i32 = arith.constant 0 : i32
    %c0_i32_0 = arith.constant 0 : i32
    %c0_i32_1 = arith.constant 0 : i32
    return %c0_i32, %c0_i32_0 : i32, i32
  }
  func.func @transform_5(%arg0: i32) -> (i32, i32) {
    %c0_i32 = arith.constant 0 : i32
    %c0_i32_0 = arith.constant 0 : i32
    %c0_i32_1 = arith.constant 0 : i32
    return %c0_i32, %c0_i32_0 : i32, i32
  }
  func.func @transform_6(%arg0: i32) -> (i32, i32) {
    %c0_i32 = arith.constant 0 : i32
    %c0_i32_0 = arith.constant 0 : i32
    %c0_i32_1 = arith.constant 0 : i32
    return %c0_i32, %c0_i32_0 : i32, i32
  }
  func.func @transform_7(%arg0: i32) -> (i32, i32) {
    %c0_i32 = arith.constant 0 : i32
    %c0_i32_0 = arith.constant 0 : i32
    return %arg0, %c0_i32 : i32, i32
  }
}

module attributes {stable_mosaic.version = 11 : i64} {
  func.func @_lstm_combine_kernel(%arg0: memref<1xf32, #tpu.memory_space<smem>>, %arg1: memref<8x8x32xf32, #tpu.memory_space<vmem>>, %arg2: memref<32x128xf32, #tpu.memory_space<vmem>>, %arg3: memref<32x128xf32, #tpu.memory_space<vmem>>, %arg4: memref<1x128xf32, #tpu.memory_space<vmem>>, %arg5: memref<8x32xf32, #tpu.memory_space<vmem>>, %arg6: memref<8x1xf32, #tpu.memory_space<vmem>>, %arg7: memref<8x1xf32, #tpu.memory_space<vmem>>, %arg8: memref<8x32xf32, #tpu.memory_space<vmem>>, %arg9: memref<8x32xf32, #tpu.memory_space<vmem>>, %arg10: memref<8x1xf32, #tpu.memory_space<vmem>>) attributes {dimension_semantics = [], scalar_prefetch = 0 : i64, scratch_operands = 0 : i64, tpu.core_type = #tpu.core_type<tc>} {
    %c0 = arith.constant 0 : index
    %c0_0 = arith.constant 0 : index
    %c0_1 = arith.constant 0 : index
    %0 = vector.load %arg1[%c0, %c0_0, %c0_1] : memref<8x8x32xf32, #tpu.memory_space<vmem>>, vector<8x8x32xf32>
    %1 = vector.shape_cast %0 : vector<8x8x32xf32> to vector<64x32xf32>
    %c0_2 = arith.constant 0 : index
    %c0_3 = arith.constant 0 : index
    %2 = vector.load %arg2[%c0_2, %c0_3] : memref<32x128xf32, #tpu.memory_space<vmem>>, vector<32x128xf32>
    %cst = arith.constant dense<0.000000e+00> : vector<64x128xf32>
    %3 = tpu.matmul %1, %2, %cst {dimension_numbers = #tpu.dot_dimension_numbers<[1], [0], [0], [1], [0, 0, 1, 1], [], []>} : vector<64x32xf32>, vector<32x128xf32>, vector<64x128xf32> -> vector<64x128xf32>
    %c0_4 = arith.constant 0 : index
    %c0_5 = arith.constant 0 : index
    %4 = vector.load %arg4[%c0_4, %c0_5] : memref<1x128xf32, #tpu.memory_space<vmem>>, vector<1x128xf32>
    %5 = vector.broadcast %4 : vector<1x128xf32> to vector<64x128xf32>
    %6 = arith.addf %3, %5 : vector<64x128xf32>
    %7 = vector.shape_cast %6 : vector<64x128xf32> to vector<8x8x128xf32>
    %c0_6 = arith.constant 0 : index
    %c0_7 = arith.constant 0 : index
    %8 = vector.load %arg3[%c0_6, %c0_7] : memref<32x128xf32, #tpu.memory_space<vmem>>, vector<32x128xf32>
    %cst_8 = arith.constant 0.000000e+00 : f32
    %9 = vector.broadcast %cst_8 : f32 to vector<8x32xf32>
    %cst_9 = arith.constant 0.000000e+00 : f32
    %10 = vector.broadcast %cst_9 : f32 to vector<8x32xf32>
    %11 = vector.extract_strided_slice %7 {offsets = [0, 0, 0], sizes = [8, 1, 128], strides = [1, 1, 1]} : vector<8x8x128xf32> to vector<8x1x128xf32>
    %12 = vector.shape_cast %11 : vector<8x1x128xf32> to vector<8x128xf32>
    %cst_10 = arith.constant dense<0.000000e+00> : vector<8x128xf32>
    %13 = tpu.matmul %9, %8, %cst_10 {dimension_numbers = #tpu.dot_dimension_numbers<[1], [0], [0], [1], [0, 0, 1, 1], [], []>} : vector<8x32xf32>, vector<32x128xf32>, vector<8x128xf32> -> vector<8x128xf32>
    %14 = arith.addf %12, %13 : vector<8x128xf32>
    %15 = vector.extract_strided_slice %14 {offsets = [0, 0], sizes = [8, 32], strides = [1, 1]} : vector<8x128xf32> to vector<8x32xf32>
    %16 = arith.negf %15 : vector<8x32xf32>
    %17 = math.exp %16 : vector<8x32xf32>
    %cst_11 = arith.constant 1.000000e+00 : f32
    %18 = vector.broadcast %cst_11 : f32 to vector<8x32xf32>
    %19 = arith.addf %18, %17 : vector<8x32xf32>
    %20 = arith.divf %18, %19 : vector<8x32xf32>
    %21 = vector.extract_strided_slice %14 {offsets = [0, 32], sizes = [8, 32], strides = [1, 1]} : vector<8x128xf32> to vector<8x32xf32>
    %22 = arith.negf %21 : vector<8x32xf32>
    %23 = math.exp %22 : vector<8x32xf32>
    %cst_12 = arith.constant 1.000000e+00 : f32
    %24 = vector.broadcast %cst_12 : f32 to vector<8x32xf32>
    %25 = arith.addf %24, %23 : vector<8x32xf32>
    %26 = arith.divf %24, %25 : vector<8x32xf32>
    %27 = vector.extract_strided_slice %14 {offsets = [0, 64], sizes = [8, 32], strides = [1, 1]} : vector<8x128xf32> to vector<8x32xf32>
    %28 = math.tanh %27 : vector<8x32xf32>
    %29 = vector.extract_strided_slice %14 {offsets = [0, 96], sizes = [8, 32], strides = [1, 1]} : vector<8x128xf32> to vector<8x32xf32>
    %30 = arith.negf %29 : vector<8x32xf32>
    %31 = math.exp %30 : vector<8x32xf32>
    %cst_13 = arith.constant 1.000000e+00 : f32
    %32 = vector.broadcast %cst_13 : f32 to vector<8x32xf32>
    %33 = arith.addf %32, %31 : vector<8x32xf32>
    %34 = arith.divf %32, %33 : vector<8x32xf32>
    %35 = arith.mulf %26, %10 : vector<8x32xf32>
    %36 = arith.mulf %20, %28 : vector<8x32xf32>
    %37 = arith.addf %35, %36 : vector<8x32xf32>
    %38 = math.tanh %37 : vector<8x32xf32>
    %39 = arith.mulf %34, %38 : vector<8x32xf32>
    %40 = vector.extract_strided_slice %7 {offsets = [0, 1, 0], sizes = [8, 1, 128], strides = [1, 1, 1]} : vector<8x8x128xf32> to vector<8x1x128xf32>
    %41 = vector.shape_cast %40 : vector<8x1x128xf32> to vector<8x128xf32>
    %cst_14 = arith.constant dense<0.000000e+00> : vector<8x128xf32>
    %42 = tpu.matmul %39, %8, %cst_14 {dimension_numbers = #tpu.dot_dimension_numbers<[1], [0], [0], [1], [0, 0, 1, 1], [], []>} : vector<8x32xf32>, vector<32x128xf32>, vector<8x128xf32> -> vector<8x128xf32>
    %43 = arith.addf %41, %42 : vector<8x128xf32>
    %44 = vector.extract_strided_slice %43 {offsets = [0, 0], sizes = [8, 32], strides = [1, 1]} : vector<8x128xf32> to vector<8x32xf32>
    %45 = arith.negf %44 : vector<8x32xf32>
    %46 = math.exp %45 : vector<8x32xf32>
    %cst_15 = arith.constant 1.000000e+00 : f32
    %47 = vector.broadcast %cst_15 : f32 to vector<8x32xf32>
    %48 = arith.addf %47, %46 : vector<8x32xf32>
    %49 = arith.divf %47, %48 : vector<8x32xf32>
    %50 = vector.extract_strided_slice %43 {offsets = [0, 32], sizes = [8, 32], strides = [1, 1]} : vector<8x128xf32> to vector<8x32xf32>
    %51 = arith.negf %50 : vector<8x32xf32>
    %52 = math.exp %51 : vector<8x32xf32>
    %cst_16 = arith.constant 1.000000e+00 : f32
    %53 = vector.broadcast %cst_16 : f32 to vector<8x32xf32>
    %54 = arith.addf %53, %52 : vector<8x32xf32>
    %55 = arith.divf %53, %54 : vector<8x32xf32>
    %56 = vector.extract_strided_slice %43 {offsets = [0, 64], sizes = [8, 32], strides = [1, 1]} : vector<8x128xf32> to vector<8x32xf32>
    %57 = math.tanh %56 : vector<8x32xf32>
    %58 = vector.extract_strided_slice %43 {offsets = [0, 96], sizes = [8, 32], strides = [1, 1]} : vector<8x128xf32> to vector<8x32xf32>
    %59 = arith.negf %58 : vector<8x32xf32>
    %60 = math.exp %59 : vector<8x32xf32>
    %cst_17 = arith.constant 1.000000e+00 : f32
    %61 = vector.broadcast %cst_17 : f32 to vector<8x32xf32>
    %62 = arith.addf %61, %60 : vector<8x32xf32>
    %63 = arith.divf %61, %62 : vector<8x32xf32>
    %64 = arith.mulf %55, %37 : vector<8x32xf32>
    %65 = arith.mulf %49, %57 : vector<8x32xf32>
    %66 = arith.addf %64, %65 : vector<8x32xf32>
    %67 = math.tanh %66 : vector<8x32xf32>
    %68 = arith.mulf %63, %67 : vector<8x32xf32>
    %69 = vector.extract_strided_slice %7 {offsets = [0, 2, 0], sizes = [8, 1, 128], strides = [1, 1, 1]} : vector<8x8x128xf32> to vector<8x1x128xf32>
    %70 = vector.shape_cast %69 : vector<8x1x128xf32> to vector<8x128xf32>
    %cst_18 = arith.constant dense<0.000000e+00> : vector<8x128xf32>
    %71 = tpu.matmul %68, %8, %cst_18 {dimension_numbers = #tpu.dot_dimension_numbers<[1], [0], [0], [1], [0, 0, 1, 1], [], []>} : vector<8x32xf32>, vector<32x128xf32>, vector<8x128xf32> -> vector<8x128xf32>
    %72 = arith.addf %70, %71 : vector<8x128xf32>
    %73 = vector.extract_strided_slice %72 {offsets = [0, 0], sizes = [8, 32], strides = [1, 1]} : vector<8x128xf32> to vector<8x32xf32>
    %74 = arith.negf %73 : vector<8x32xf32>
    %75 = math.exp %74 : vector<8x32xf32>
    %cst_19 = arith.constant 1.000000e+00 : f32
    %76 = vector.broadcast %cst_19 : f32 to vector<8x32xf32>
    %77 = arith.addf %76, %75 : vector<8x32xf32>
    %78 = arith.divf %76, %77 : vector<8x32xf32>
    %79 = vector.extract_strided_slice %72 {offsets = [0, 32], sizes = [8, 32], strides = [1, 1]} : vector<8x128xf32> to vector<8x32xf32>
    %80 = arith.negf %79 : vector<8x32xf32>
    %81 = math.exp %80 : vector<8x32xf32>
    %cst_20 = arith.constant 1.000000e+00 : f32
    %82 = vector.broadcast %cst_20 : f32 to vector<8x32xf32>
    %83 = arith.addf %82, %81 : vector<8x32xf32>
    %84 = arith.divf %82, %83 : vector<8x32xf32>
    %85 = vector.extract_strided_slice %72 {offsets = [0, 64], sizes = [8, 32], strides = [1, 1]} : vector<8x128xf32> to vector<8x32xf32>
    %86 = math.tanh %85 : vector<8x32xf32>
    %87 = vector.extract_strided_slice %72 {offsets = [0, 96], sizes = [8, 32], strides = [1, 1]} : vector<8x128xf32> to vector<8x32xf32>
    %88 = arith.negf %87 : vector<8x32xf32>
    %89 = math.exp %88 : vector<8x32xf32>
    %cst_21 = arith.constant 1.000000e+00 : f32
    %90 = vector.broadcast %cst_21 : f32 to vector<8x32xf32>
    %91 = arith.addf %90, %89 : vector<8x32xf32>
    %92 = arith.divf %90, %91 : vector<8x32xf32>
    %93 = arith.mulf %84, %66 : vector<8x32xf32>
    %94 = arith.mulf %78, %86 : vector<8x32xf32>
    %95 = arith.addf %93, %94 : vector<8x32xf32>
    %96 = math.tanh %95 : vector<8x32xf32>
    %97 = arith.mulf %92, %96 : vector<8x32xf32>
    %98 = vector.extract_strided_slice %7 {offsets = [0, 3, 0], sizes = [8, 1, 128], strides = [1, 1, 1]} : vector<8x8x128xf32> to vector<8x1x128xf32>
    %99 = vector.shape_cast %98 : vector<8x1x128xf32> to vector<8x128xf32>
    %cst_22 = arith.constant dense<0.000000e+00> : vector<8x128xf32>
    %100 = tpu.matmul %97, %8, %cst_22 {dimension_numbers = #tpu.dot_dimension_numbers<[1], [0], [0], [1], [0, 0, 1, 1], [], []>} : vector<8x32xf32>, vector<32x128xf32>, vector<8x128xf32> -> vector<8x128xf32>
    %101 = arith.addf %99, %100 : vector<8x128xf32>
    %102 = vector.extract_strided_slice %101 {offsets = [0, 0], sizes = [8, 32], strides = [1, 1]} : vector<8x128xf32> to vector<8x32xf32>
    %103 = arith.negf %102 : vector<8x32xf32>
    %104 = math.exp %103 : vector<8x32xf32>
    %cst_23 = arith.constant 1.000000e+00 : f32
    %105 = vector.broadcast %cst_23 : f32 to vector<8x32xf32>
    %106 = arith.addf %105, %104 : vector<8x32xf32>
    %107 = arith.divf %105, %106 : vector<8x32xf32>
    %108 = vector.extract_strided_slice %101 {offsets = [0, 32], sizes = [8, 32], strides = [1, 1]} : vector<8x128xf32> to vector<8x32xf32>
    %109 = arith.negf %108 : vector<8x32xf32>
    %110 = math.exp %109 : vector<8x32xf32>
    %cst_24 = arith.constant 1.000000e+00 : f32
    %111 = vector.broadcast %cst_24 : f32 to vector<8x32xf32>
    %112 = arith.addf %111, %110 : vector<8x32xf32>
    %113 = arith.divf %111, %112 : vector<8x32xf32>
    %114 = vector.extract_strided_slice %101 {offsets = [0, 64], sizes = [8, 32], strides = [1, 1]} : vector<8x128xf32> to vector<8x32xf32>
    %115 = math.tanh %114 : vector<8x32xf32>
    %116 = vector.extract_strided_slice %101 {offsets = [0, 96], sizes = [8, 32], strides = [1, 1]} : vector<8x128xf32> to vector<8x32xf32>
    %117 = arith.negf %116 : vector<8x32xf32>
    %118 = math.exp %117 : vector<8x32xf32>
    %cst_25 = arith.constant 1.000000e+00 : f32
    %119 = vector.broadcast %cst_25 : f32 to vector<8x32xf32>
    %120 = arith.addf %119, %118 : vector<8x32xf32>
    %121 = arith.divf %119, %120 : vector<8x32xf32>
    %122 = arith.mulf %113, %95 : vector<8x32xf32>
    %123 = arith.mulf %107, %115 : vector<8x32xf32>
    %124 = arith.addf %122, %123 : vector<8x32xf32>
    %125 = math.tanh %124 : vector<8x32xf32>
    %126 = arith.mulf %121, %125 : vector<8x32xf32>
    %127 = vector.extract_strided_slice %7 {offsets = [0, 4, 0], sizes = [8, 1, 128], strides = [1, 1, 1]} : vector<8x8x128xf32> to vector<8x1x128xf32>
    %128 = vector.shape_cast %127 : vector<8x1x128xf32> to vector<8x128xf32>
    %cst_26 = arith.constant dense<0.000000e+00> : vector<8x128xf32>
    %129 = tpu.matmul %126, %8, %cst_26 {dimension_numbers = #tpu.dot_dimension_numbers<[1], [0], [0], [1], [0, 0, 1, 1], [], []>} : vector<8x32xf32>, vector<32x128xf32>, vector<8x128xf32> -> vector<8x128xf32>
    %130 = arith.addf %128, %129 : vector<8x128xf32>
    %131 = vector.extract_strided_slice %130 {offsets = [0, 0], sizes = [8, 32], strides = [1, 1]} : vector<8x128xf32> to vector<8x32xf32>
    %132 = arith.negf %131 : vector<8x32xf32>
    %133 = math.exp %132 : vector<8x32xf32>
    %cst_27 = arith.constant 1.000000e+00 : f32
    %134 = vector.broadcast %cst_27 : f32 to vector<8x32xf32>
    %135 = arith.addf %134, %133 : vector<8x32xf32>
    %136 = arith.divf %134, %135 : vector<8x32xf32>
    %137 = vector.extract_strided_slice %130 {offsets = [0, 32], sizes = [8, 32], strides = [1, 1]} : vector<8x128xf32> to vector<8x32xf32>
    %138 = arith.negf %137 : vector<8x32xf32>
    %139 = math.exp %138 : vector<8x32xf32>
    %cst_28 = arith.constant 1.000000e+00 : f32
    %140 = vector.broadcast %cst_28 : f32 to vector<8x32xf32>
    %141 = arith.addf %140, %139 : vector<8x32xf32>
    %142 = arith.divf %140, %141 : vector<8x32xf32>
    %143 = vector.extract_strided_slice %130 {offsets = [0, 64], sizes = [8, 32], strides = [1, 1]} : vector<8x128xf32> to vector<8x32xf32>
    %144 = math.tanh %143 : vector<8x32xf32>
    %145 = vector.extract_strided_slice %130 {offsets = [0, 96], sizes = [8, 32], strides = [1, 1]} : vector<8x128xf32> to vector<8x32xf32>
    %146 = arith.negf %145 : vector<8x32xf32>
    %147 = math.exp %146 : vector<8x32xf32>
    %cst_29 = arith.constant 1.000000e+00 : f32
    %148 = vector.broadcast %cst_29 : f32 to vector<8x32xf32>
    %149 = arith.addf %148, %147 : vector<8x32xf32>
    %150 = arith.divf %148, %149 : vector<8x32xf32>
    %151 = arith.mulf %142, %124 : vector<8x32xf32>
    %152 = arith.mulf %136, %144 : vector<8x32xf32>
    %153 = arith.addf %151, %152 : vector<8x32xf32>
    %154 = math.tanh %153 : vector<8x32xf32>
    %155 = arith.mulf %150, %154 : vector<8x32xf32>
    %156 = vector.extract_strided_slice %7 {offsets = [0, 5, 0], sizes = [8, 1, 128], strides = [1, 1, 1]} : vector<8x8x128xf32> to vector<8x1x128xf32>
    %157 = vector.shape_cast %156 : vector<8x1x128xf32> to vector<8x128xf32>
    %cst_30 = arith.constant dense<0.000000e+00> : vector<8x128xf32>
    %158 = tpu.matmul %155, %8, %cst_30 {dimension_numbers = #tpu.dot_dimension_numbers<[1], [0], [0], [1], [0, 0, 1, 1], [], []>} : vector<8x32xf32>, vector<32x128xf32>, vector<8x128xf32> -> vector<8x128xf32>
    %159 = arith.addf %157, %158 : vector<8x128xf32>
    %160 = vector.extract_strided_slice %159 {offsets = [0, 0], sizes = [8, 32], strides = [1, 1]} : vector<8x128xf32> to vector<8x32xf32>
    %161 = arith.negf %160 : vector<8x32xf32>
    %162 = math.exp %161 : vector<8x32xf32>
    %cst_31 = arith.constant 1.000000e+00 : f32
    %163 = vector.broadcast %cst_31 : f32 to vector<8x32xf32>
    %164 = arith.addf %163, %162 : vector<8x32xf32>
    %165 = arith.divf %163, %164 : vector<8x32xf32>
    %166 = vector.extract_strided_slice %159 {offsets = [0, 32], sizes = [8, 32], strides = [1, 1]} : vector<8x128xf32> to vector<8x32xf32>
    %167 = arith.negf %166 : vector<8x32xf32>
    %168 = math.exp %167 : vector<8x32xf32>
    %cst_32 = arith.constant 1.000000e+00 : f32
    %169 = vector.broadcast %cst_32 : f32 to vector<8x32xf32>
    %170 = arith.addf %169, %168 : vector<8x32xf32>
    %171 = arith.divf %169, %170 : vector<8x32xf32>
    %172 = vector.extract_strided_slice %159 {offsets = [0, 64], sizes = [8, 32], strides = [1, 1]} : vector<8x128xf32> to vector<8x32xf32>
    %173 = math.tanh %172 : vector<8x32xf32>
    %174 = vector.extract_strided_slice %159 {offsets = [0, 96], sizes = [8, 32], strides = [1, 1]} : vector<8x128xf32> to vector<8x32xf32>
    %175 = arith.negf %174 : vector<8x32xf32>
    %176 = math.exp %175 : vector<8x32xf32>
    %cst_33 = arith.constant 1.000000e+00 : f32
    %177 = vector.broadcast %cst_33 : f32 to vector<8x32xf32>
    %178 = arith.addf %177, %176 : vector<8x32xf32>
    %179 = arith.divf %177, %178 : vector<8x32xf32>
    %180 = arith.mulf %171, %153 : vector<8x32xf32>
    %181 = arith.mulf %165, %173 : vector<8x32xf32>
    %182 = arith.addf %180, %181 : vector<8x32xf32>
    %183 = math.tanh %182 : vector<8x32xf32>
    %184 = arith.mulf %179, %183 : vector<8x32xf32>
    %185 = vector.extract_strided_slice %7 {offsets = [0, 6, 0], sizes = [8, 1, 128], strides = [1, 1, 1]} : vector<8x8x128xf32> to vector<8x1x128xf32>
    %186 = vector.shape_cast %185 : vector<8x1x128xf32> to vector<8x128xf32>
    %cst_34 = arith.constant dense<0.000000e+00> : vector<8x128xf32>
    %187 = tpu.matmul %184, %8, %cst_34 {dimension_numbers = #tpu.dot_dimension_numbers<[1], [0], [0], [1], [0, 0, 1, 1], [], []>} : vector<8x32xf32>, vector<32x128xf32>, vector<8x128xf32> -> vector<8x128xf32>
    %188 = arith.addf %186, %187 : vector<8x128xf32>
    %189 = vector.extract_strided_slice %188 {offsets = [0, 0], sizes = [8, 32], strides = [1, 1]} : vector<8x128xf32> to vector<8x32xf32>
    %190 = arith.negf %189 : vector<8x32xf32>
    %191 = math.exp %190 : vector<8x32xf32>
    %cst_35 = arith.constant 1.000000e+00 : f32
    %192 = vector.broadcast %cst_35 : f32 to vector<8x32xf32>
    %193 = arith.addf %192, %191 : vector<8x32xf32>
    %194 = arith.divf %192, %193 : vector<8x32xf32>
    %195 = vector.extract_strided_slice %188 {offsets = [0, 32], sizes = [8, 32], strides = [1, 1]} : vector<8x128xf32> to vector<8x32xf32>
    %196 = arith.negf %195 : vector<8x32xf32>
    %197 = math.exp %196 : vector<8x32xf32>
    %cst_36 = arith.constant 1.000000e+00 : f32
    %198 = vector.broadcast %cst_36 : f32 to vector<8x32xf32>
    %199 = arith.addf %198, %197 : vector<8x32xf32>
    %200 = arith.divf %198, %199 : vector<8x32xf32>
    %201 = vector.extract_strided_slice %188 {offsets = [0, 64], sizes = [8, 32], strides = [1, 1]} : vector<8x128xf32> to vector<8x32xf32>
    %202 = math.tanh %201 : vector<8x32xf32>
    %203 = vector.extract_strided_slice %188 {offsets = [0, 96], sizes = [8, 32], strides = [1, 1]} : vector<8x128xf32> to vector<8x32xf32>
    %204 = arith.negf %203 : vector<8x32xf32>
    %205 = math.exp %204 : vector<8x32xf32>
    %cst_37 = arith.constant 1.000000e+00 : f32
    %206 = vector.broadcast %cst_37 : f32 to vector<8x32xf32>
    %207 = arith.addf %206, %205 : vector<8x32xf32>
    %208 = arith.divf %206, %207 : vector<8x32xf32>
    %209 = arith.mulf %200, %182 : vector<8x32xf32>
    %210 = arith.mulf %194, %202 : vector<8x32xf32>
    %211 = arith.addf %209, %210 : vector<8x32xf32>
    %212 = math.tanh %211 : vector<8x32xf32>
    %213 = arith.mulf %208, %212 : vector<8x32xf32>
    %214 = vector.extract_strided_slice %7 {offsets = [0, 7, 0], sizes = [8, 1, 128], strides = [1, 1, 1]} : vector<8x8x128xf32> to vector<8x1x128xf32>
    %215 = vector.shape_cast %214 : vector<8x1x128xf32> to vector<8x128xf32>
    %cst_38 = arith.constant dense<0.000000e+00> : vector<8x128xf32>
    %216 = tpu.matmul %213, %8, %cst_38 {dimension_numbers = #tpu.dot_dimension_numbers<[1], [0], [0], [1], [0, 0, 1, 1], [], []>} : vector<8x32xf32>, vector<32x128xf32>, vector<8x128xf32> -> vector<8x128xf32>
    %217 = arith.addf %215, %216 : vector<8x128xf32>
    %218 = vector.extract_strided_slice %217 {offsets = [0, 0], sizes = [8, 32], strides = [1, 1]} : vector<8x128xf32> to vector<8x32xf32>
    %219 = arith.negf %218 : vector<8x32xf32>
    %220 = math.exp %219 : vector<8x32xf32>
    %cst_39 = arith.constant 1.000000e+00 : f32
    %221 = vector.broadcast %cst_39 : f32 to vector<8x32xf32>
    %222 = arith.addf %221, %220 : vector<8x32xf32>
    %223 = arith.divf %221, %222 : vector<8x32xf32>
    %224 = vector.extract_strided_slice %217 {offsets = [0, 32], sizes = [8, 32], strides = [1, 1]} : vector<8x128xf32> to vector<8x32xf32>
    %225 = arith.negf %224 : vector<8x32xf32>
    %226 = math.exp %225 : vector<8x32xf32>
    %cst_40 = arith.constant 1.000000e+00 : f32
    %227 = vector.broadcast %cst_40 : f32 to vector<8x32xf32>
    %228 = arith.addf %227, %226 : vector<8x32xf32>
    %229 = arith.divf %227, %228 : vector<8x32xf32>
    %230 = vector.extract_strided_slice %217 {offsets = [0, 64], sizes = [8, 32], strides = [1, 1]} : vector<8x128xf32> to vector<8x32xf32>
    %231 = math.tanh %230 : vector<8x32xf32>
    %232 = vector.extract_strided_slice %217 {offsets = [0, 96], sizes = [8, 32], strides = [1, 1]} : vector<8x128xf32> to vector<8x32xf32>
    %233 = arith.negf %232 : vector<8x32xf32>
    %234 = math.exp %233 : vector<8x32xf32>
    %cst_41 = arith.constant 1.000000e+00 : f32
    %235 = vector.broadcast %cst_41 : f32 to vector<8x32xf32>
    %236 = arith.addf %235, %234 : vector<8x32xf32>
    %237 = arith.divf %235, %236 : vector<8x32xf32>
    %238 = arith.mulf %229, %211 : vector<8x32xf32>
    %239 = arith.mulf %223, %231 : vector<8x32xf32>
    %240 = arith.addf %238, %239 : vector<8x32xf32>
    %241 = math.tanh %240 : vector<8x32xf32>
    %242 = arith.mulf %237, %241 : vector<8x32xf32>
    %c0_42 = arith.constant 0 : index
    %243 = memref.load %arg0[%c0_42] : memref<1xf32, #tpu.memory_space<smem>>
    %c0_43 = arith.constant 0 : index
    %c0_44 = arith.constant 0 : index
    %244 = vector.load %arg8[%c0_43, %c0_44] : memref<8x32xf32, #tpu.memory_space<vmem>>, vector<8x32xf32>
    %c0_45 = arith.constant 0 : index
    %c0_46 = arith.constant 0 : index
    %245 = vector.load %arg9[%c0_45, %c0_46] : memref<8x32xf32, #tpu.memory_space<vmem>>, vector<8x32xf32>
    %246 = arith.mulf %244, %245 : vector<8x32xf32>
    %cst_47 = arith.constant dense<0.000000e+00> : vector<8xf32>
    %247 = vector.multi_reduction <add>, %246, %cst_47 [1] : vector<8x32xf32> to vector<8xf32>
    %248 = vector.shape_cast %247 : vector<8xf32> to vector<8x1xf32>
    %c0_48 = arith.constant 0 : index
    %c0_49 = arith.constant 0 : index
    %249 = vector.load %arg5[%c0_48, %c0_49] : memref<8x32xf32, #tpu.memory_space<vmem>>, vector<8x32xf32>
    %250 = arith.mulf %242, %249 : vector<8x32xf32>
    %cst_50 = arith.constant dense<0.000000e+00> : vector<8xf32>
    %251 = vector.multi_reduction <add>, %250, %cst_50 [1] : vector<8x32xf32> to vector<8xf32>
    %252 = vector.shape_cast %251 : vector<8xf32> to vector<8x1xf32>
    %c0_51 = arith.constant 0 : index
    %c0_52 = arith.constant 0 : index
    %253 = vector.load %arg6[%c0_51, %c0_52] : memref<8x1xf32, #tpu.memory_space<vmem>>, vector<8x1xf32>
    %cst_53 = arith.constant 3.58147788 : f32
    %254 = vector.broadcast %cst_53 : f32 to vector<8x1xf32>
    %255 = arith.addf %254, %253 : vector<8x1xf32>
    %c0_54 = arith.constant 0 : index
    %c0_55 = arith.constant 0 : index
    %256 = vector.load %arg7[%c0_54, %c0_55] : memref<8x1xf32, #tpu.memory_space<vmem>>, vector<8x1xf32>
    %257 = arith.addf %255, %256 : vector<8x1xf32>
    %258 = vector.broadcast %243 : f32 to vector<8x1xf32>
    %259 = arith.mulf %258, %248 : vector<8x1xf32>
    %260 = arith.addf %257, %259 : vector<8x1xf32>
    %cst_56 = arith.constant 1.000000e+00 : f32
    %261 = arith.subf %cst_56, %243 : f32
    %262 = vector.broadcast %261 : f32 to vector<8x1xf32>
    %263 = arith.mulf %262, %252 : vector<8x1xf32>
    %264 = arith.addf %260, %263 : vector<8x1xf32>
    %c0_57 = arith.constant 0 : index
    %c0_58 = arith.constant 0 : index
    %265 = vector.load %arg10[%c0_57, %c0_58] : memref<8x1xf32, #tpu.memory_space<vmem>>, vector<8x1xf32>
    tpu.vector_store %arg10[%c0_57, %c0_58], %264 {strides = array<i32>} : memref<8x1xf32, #tpu.memory_space<vmem>>, vector<8x1xf32>,
    return
  }
}

</mosaic_0001>

<llo_original>
// kernel: hybrid_forward.2
$region0: #{hybrid_forward.2}
  #allocation0 [shape = 'u32[]', space=smem, size = 0x4, offset = 0x4, fixed_abs, tag = 'smem constant byte address 0x4 - core index']
  #allocation1 [shape = 'u32[72,128]{1,0:T(1,128)}', space=vmem, size = 0x9000, scoped, tag = 'internal scratch']
  %s0 = inlined_call_operand.vmem [shape: f32[24,20], index: 0, kind: input, shape index: {}]
  %s1 = inlined_call_operand.vmem [shape: f32[20,64], index: 1, kind: input, shape index: {}]
  %s2 = inlined_call_operand.vmem [shape: f32[1,64], index: 2, kind: input, shape index: {}]
  %s3 = inlined_call_operand.vmem [shape: f32[64,64], index: 3, kind: input, shape index: {}]
  %s4 = inlined_call_operand.vmem [shape: f32[1,64], index: 4, kind: input, shape index: {}]
  %s5 = inlined_call_operand.vmem [shape: f32[64,32], index: 5, kind: input, shape index: {}]
  %s6 = inlined_call_operand.vmem [shape: f32[1,32], index: 6, kind: input, shape index: {}]
  %s7 = inlined_call_operand.vmem [shape: f32[24,32], index: 7, kind: output, shape index: {}]
  %s8 = sld [smem:[#allocation0]]
  $region38: #{hybrid_forward.2} parent=0
    _
  %s10 = ssub.s32 1, %s8
  %s11 = scalar_select 0, %s10, %s8
  // Predicated region
  $region2: #{hybrid_forward.2} parent=0 // pred_check
    _
  $region3: #{hybrid_forward.2} parent=0 // pred_check_branch
    %13 = sbr.rel (0) target = $region5
  $region4: #{hybrid_forward.2} parent=0 // pred_region
    _
  $region5: #{hybrid_forward.2} parent=0 // pred_fallthru
    _
  // Predicated region
  $region6: #{hybrid_forward.2} parent=0 // pred_check
    _
  $region7: #{hybrid_forward.2} parent=0 // pred_check_branch
    %15 = sbr.rel (0) target = $region9
  $region8: #{hybrid_forward.2} parent=0 // pred_region
    _
  $region9: #{hybrid_forward.2} parent=0 // pred_fallthru
    _
  // Predicated region
  $region10: #{hybrid_forward.2} parent=0 // pred_check
    _
  $region11: #{hybrid_forward.2} parent=0 // pred_check_branch
    %17 = sbr.rel (0) target = $region13
  $region12: #{hybrid_forward.2} parent=0 // pred_region
    _
  $region13: #{hybrid_forward.2} parent=0 // pred_fallthru
    _
  // Predicated region
  $region14: #{hybrid_forward.2} parent=0 // pred_check
    _
  $region15: #{hybrid_forward.2} parent=0 // pred_check_branch
    %19 = sbr.rel (0) target = $region17
  $region16: #{hybrid_forward.2} parent=0 // pred_region
    _
  $region17: #{hybrid_forward.2} parent=0 // pred_fallthru
    _
  // Predicated region
  $region18: #{hybrid_forward.2} parent=0 // pred_check
    _
  $region19: #{hybrid_forward.2} parent=0 // pred_check_branch
    %21 = sbr.rel (0) target = $region21
  $region20: #{hybrid_forward.2} parent=0 // pred_region
    _
  $region21: #{hybrid_forward.2} parent=0 // pred_fallthru
    _
  // Predicated region
  $region22: #{hybrid_forward.2} parent=0 // pred_check
    _
  $region23: #{hybrid_forward.2} parent=0 // pred_check_branch
    %23 = sbr.rel (0) target = $region25
  $region24: #{hybrid_forward.2} parent=0 // pred_region
    _
  $region25: #{hybrid_forward.2} parent=0 // pred_fallthru
    _
  // Predicated region
  $region26: #{hybrid_forward.2} parent=0 // pred_check
    _
  $region27: #{hybrid_forward.2} parent=0 // pred_check_branch
    %25 = sbr.rel (0) target = $region29
  $region28: #{hybrid_forward.2} parent=0 // pred_region
    _
  $region29: #{hybrid_forward.2} parent=0 // pred_fallthru
    _
  %v26 = vld [vmem:[%s0] sm:$0xff]
  %v27 = vld [vmem:[%s0 + $0x8] sm:$0xff]
  %v28 = vld [vmem:[%s0 + $0x10] sm:$0xff]
  %v29 = vld [vmem:[%s1] sm:$0xff]
  %v30 = vld [vmem:[%s1 + $0x8] sm:$0xff]
  %v31 = vld [vmem:[%s1 + $0x10] sm:$0xf]
  %v32 = vld [vmem:[%s2] sm:$0x1]
  %v34 = vperm.slane %v32, 0
  %vm36 = vcmask 162816
  %v38 = vsel %vm36, %v26, 0
  %v41 = vsel %vm36, %v27, 0
  %v44 = vsel %vm36, %v28, 0
  %vm46 = vcmask 1043456
  %v48 = vsel %vm46, %v31, 0
  %50 = vmatpush.msra.mxu0 0.0
  %51 = vmatpush.msra.mxu0 0.0
  %52 = vmatpush.msra.mxu0 0.0
  %53 = vmatpush.msra.mxu0 0.0
  %54 = vmatpush.msra.mxu0 0.0
  %55 = vmatpush.msra.mxu0 0.0
  %56 = vmatpush.msra.mxu0 0.0
  %57 = vmatpush.msra.mxu0 0.0
  %58 = vmatpush.msra.mxu0 0.0
  %59 = vmatpush.msra.mxu0 0.0
  %60 = vmatpush.msra.mxu0 0.0
  %61 = vmatpush.msra.mxu0 0.0
  %62 = vmatpush.msra.mxu0 0.0
  %63 = vmatpush.msra.mxu0 %v48
  %64 = vmatpush.msra.mxu0 %v30
  %65 = vmatpush.msra.mxu0 %v29
  %66 = vmatmul.f32.gmra.mxu0 %v38
  %v67 = vpop.f32.mrf.mxu0
  %v68 = vadd.f32 %v34, %v67
  %69 = vmatmul.f32.gmra.mxu0 %v41
  %v70 = vpop.f32.mrf.mxu0
  %v71 = vadd.f32 %v34, %v70
  %72 = vmatmul.f32.gmra.mxu0 %v44
  %v73 = vpop.f32.mrf.mxu0
  %v74 = vadd.f32 %v34, %v73
  %75 = vdwg.mxu0
  %v76 = vmax.f32 %v68, 0.0
  %v77 = vmax.f32 %v71, 0.0
  %v78 = vmax.f32 %v74, 0.0
  %v79 = vld [vmem:[%s3] sm:$0xff]
  %v80 = vld [vmem:[%s3 + $0x8] sm:$0xff]
  %v81 = vld [vmem:[%s3 + $0x10] sm:$0xff]
  %v82 = vld [vmem:[%s3 + $0x18] sm:$0xff]
  %v83 = vld [vmem:[%s3 + $0x20] sm:$0xff]
  %v84 = vld [vmem:[%s3 + $0x28] sm:$0xff]
  %v85 = vld [vmem:[%s3 + $0x30] sm:$0xff]
  %v86 = vld [vmem:[%s3 + $0x38] sm:$0xff]
  %v87 = vld [vmem:[%s4] sm:$0x1]
  %v89 = vperm.slane %v87, 0
  %vm91 = vcmask 523264
  %v93 = vsel %vm91, %v76, 0
  %v96 = vsel %vm91, %v77, 0
  %v99 = vsel %vm91, %v78, 0
  %101 = vmatpush.msra.mxu0 0.0
  %102 = vmatpush.msra.mxu0 0.0
  %103 = vmatpush.msra.mxu0 0.0
  %104 = vmatpush.msra.mxu0 0.0
  %105 = vmatpush.msra.mxu0 0.0
  %106 = vmatpush.msra.mxu0 0.0
  %107 = vmatpush.msra.mxu0 0.0
  %108 = vmatpush.msra.mxu0 0.0
  %109 = vmatpush.msra.mxu0 %v86
  %110 = vmatpush.msra.mxu0 %v85
  %111 = vmatpush.msra.mxu0 %v84
  %112 = vmatpush.msra.mxu0 %v83
  %113 = vmatpush.msra.mxu0 %v82
  %114 = vmatpush.msra.mxu0 %v81
  %115 = vmatpush.msra.mxu0 %v80
  %116 = vmatpush.msra.mxu0 %v79
  %117 = vmatmul.f32.gmra.mxu0 %v93
  %v118 = vpop.f32.mrf.mxu0
  %v119 = vadd.f32 %v89, %v118
  %120 = vmatmul.f32.gmra.mxu0 %v96
  %v121 = vpop.f32.mrf.mxu0
  %v122 = vadd.f32 %v89, %v121
  %123 = vmatmul.f32.gmra.mxu0 %v99
  %v124 = vpop.f32.mrf.mxu0
  %v125 = vadd.f32 %v89, %v124
  %126 = vdwg.mxu0
  %v127 = vmax.f32 %v119, 0.0
  %v128 = vmax.f32 %v122, 0.0
  %v129 = vmax.f32 %v125, 0.0
  %v130 = vld [vmem:[%s5] sm:$0xff]
  %v131 = vld [vmem:[%s5 + $0x8] sm:$0xff]
  %v132 = vld [vmem:[%s5 + $0x10] sm:$0xff]
  %v133 = vld [vmem:[%s5 + $0x18] sm:$0xff]
  %v134 = vld [vmem:[%s5 + $0x20] sm:$0xff]
  %v135 = vld [vmem:[%s5 + $0x28] sm:$0xff]
  %v136 = vld [vmem:[%s5 + $0x30] sm:$0xff]
  %v137 = vld [vmem:[%s5 + $0x38] sm:$0xff]
  %v138 = vld [vmem:[%s6] sm:$0x1]
  %v140 = vperm.slane %v138, 0
  %v143 = vsel %vm91, %v127, 0
  %v146 = vsel %vm91, %v128, 0
  %v149 = vsel %vm91, %v129, 0
  %151 = vmatpush.msra.mxu0 0.0
  %152 = vmatpush.msra.mxu0 0.0
  %153 = vmatpush.msra.mxu0 0.0
  %154 = vmatpush.msra.mxu0 0.0
  %155 = vmatpush.msra.mxu0 0.0
  %156 = vmatpush.msra.mxu0 0.0
  %157 = vmatpush.msra.mxu0 0.0
  %158 = vmatpush.msra.mxu0 0.0
  %159 = vmatpush.msra.mxu0 %v137
  %160 = vmatpush.msra.mxu0 %v136
  %161 = vmatpush.msra.mxu0 %v135
  %162 = vmatpush.msra.mxu0 %v134
  %163 = vmatpush.msra.mxu0 %v133
  %164 = vmatpush.msra.mxu0 %v132
  %165 = vmatpush.msra.mxu0 %v131
  %166 = vmatpush.msra.mxu0 %v130
  %167 = vmatmul.f32.gmra.mxu0 %v143
  %v168 = vpop.f32.mrf.mxu0
  %v169 = vadd.f32 %v140, %v168
  %170 = vmatmul.f32.gmra.mxu0 %v146
  %v171 = vpop.f32.mrf.mxu0
  %v172 = vadd.f32 %v140, %v171
  %173 = vmatmul.f32.gmra.mxu0 %v149
  %v174 = vpop.f32.mrf.mxu0
  %v175 = vadd.f32 %v140, %v174
  %176 = vdwg.mxu0
  %vm177 = vcmask 261120
  %178 = vst.msk [vmem:[%s7] sm:$0xff] %vm177, %v169
  %179 = vst.msk [vmem:[%s7 + $0x8] sm:$0xff] %vm177, %v172
  %180 = vst.msk [vmem:[%s7 + $0x10] sm:$0xff] %vm177, %v175
  // Predicated region
  $region30: #{hybrid_forward.2} parent=0 // pred_check
    _
  $region31: #{hybrid_forward.2} parent=0 // pred_check_branch
    %182 = sbr.rel (0) target = $region33
  $region32: #{hybrid_forward.2} parent=0 // pred_region
    _
  $region33: #{hybrid_forward.2} parent=0 // pred_fallthru
    _
  // Predicated region
  $region34: #{hybrid_forward.2} parent=0 // pred_check
    _
  $region35: #{hybrid_forward.2} parent=0 // pred_check_branch
    %184 = sbr.rel (0) target = $region37
  $region36: #{hybrid_forward.2} parent=0 // pred_region
    _
  $region37: #{hybrid_forward.2} parent=0 // pred_fallthru
    _

// kernel: hybrid_forward.3
$region0: #{hybrid_forward.3}
  #allocation0 [shape = 'u32[]', space=smem, size = 0x4, offset = 0x4, fixed_abs, tag = 'smem constant byte address 0x4 - core index']
  #allocation1 [shape = 'u32[72,128]{1,0:T(1,128)}', space=vmem, size = 0x9000, scoped, tag = 'internal scratch']
  #allocation2 [shape = 'f32[1]{0:T(128)S(6)}', space=smem, size = 0x200, scoped, tag = 'scoped memory for hybrid_forward.3']
  %s0 = inlined_call_operand.<no memory space> [shape: f32[1], index: 0, kind: input, shape index: {}]
  %s1 = inlined_call_operand.vmem [shape: f32[8,8,32], index: 1, kind: input, shape index: {}]
  %s2 = inlined_call_operand.vmem [shape: f32[32,128], index: 2, kind: input, shape index: {}]
  %s3 = inlined_call_operand.vmem [shape: f32[32,128], index: 3, kind: input, shape index: {}]
  %s4 = inlined_call_operand.vmem [shape: f32[1,128], index: 4, kind: input, shape index: {}]
  %s5 = inlined_call_operand.vmem [shape: f32[8,32], index: 5, kind: input, shape index: {}]
  %s6 = inlined_call_operand.vmem [shape: f32[8,1], index: 6, kind: input, shape index: {}]
  %s7 = inlined_call_operand.vmem [shape: f32[8,1], index: 7, kind: input, shape index: {}]
  %s8 = inlined_call_operand.vmem [shape: f32[8,32], index: 8, kind: input, shape index: {}]
  %s9 = inlined_call_operand.vmem [shape: f32[8,32], index: 9, kind: input, shape index: {}]
  %s10 = inlined_call_operand.vmem [shape: f32[8,1], index: 10, kind: output, shape index: {}]
  %s11 = sld [smem:[#allocation0]]
  $region50: #{hybrid_forward.3} parent=0
    _
  %s13 = ssub.s32 1, %s11
  %s14 = scalar_select 0, %s13, %s11
  %15 = sst [smem:[#allocation2]] %s0
  // Predicated region
  $region2: #{hybrid_forward.3} parent=0 // pred_check
    _
  $region3: #{hybrid_forward.3} parent=0 // pred_check_branch
    %17 = sbr.rel (0) target = $region5
  $region4: #{hybrid_forward.3} parent=0 // pred_region
    _
  $region5: #{hybrid_forward.3} parent=0 // pred_fallthru
    _
  // Predicated region
  $region6: #{hybrid_forward.3} parent=0 // pred_check
    _
  $region7: #{hybrid_forward.3} parent=0 // pred_check_branch
    %19 = sbr.rel (0) target = $region9
  $region8: #{hybrid_forward.3} parent=0 // pred_region
    _
  $region9: #{hybrid_forward.3} parent=0 // pred_fallthru
    _
  // Predicated region
  $region10: #{hybrid_forward.3} parent=0 // pred_check
    _
  $region11: #{hybrid_forward.3} parent=0 // pred_check_branch
    %21 = sbr.rel (0) target = $region13
  $region12: #{hybrid_forward.3} parent=0 // pred_region
    _
  $region13: #{hybrid_forward.3} parent=0 // pred_fallthru
    _
  // Predicated region
  $region14: #{hybrid_forward.3} parent=0 // pred_check
    _
  $region15: #{hybrid_forward.3} parent=0 // pred_check_branch
    %23 = sbr.rel (0) target = $region17
  $region16: #{hybrid_forward.3} parent=0 // pred_region
    _
  $region17: #{hybrid_forward.3} parent=0 // pred_fallthru
    _
  // Predicated region
  $region18: #{hybrid_forward.3} parent=0 // pred_check
    _
  $region19: #{hybrid_forward.3} parent=0 // pred_check_branch
    %25 = sbr.rel (0) target = $region21
  $region20: #{hybrid_forward.3} parent=0 // pred_region
    _
  $region21: #{hybrid_forward.3} parent=0 // pred_fallthru
    _
  // Predicated region
  $region22: #{hybrid_forward.3} parent=0 // pred_check
    _
  $region23: #{hybrid_forward.3} parent=0 // pred_check_branch
    %27 = sbr.rel (0) target = $region25
  $region24: #{hybrid_forward.3} parent=0 // pred_region
    _
  $region25: #{hybrid_forward.3} parent=0 // pred_fallthru
    _
  // Predicated region
  $region26: #{hybrid_forward.3} parent=0 // pred_check
    _
  $region27: #{hybrid_forward.3} parent=0 // pred_check_branch
    %29 = sbr.rel (0) target = $region29
  $region28: #{hybrid_forward.3} parent=0 // pred_region
    _
  $region29: #{hybrid_forward.3} parent=0 // pred_fallthru
    _
  // Predicated region
  $region30: #{hybrid_forward.3} parent=0 // pred_check
    _
  $region31: #{hybrid_forward.3} parent=0 // pred_check_branch
    %31 = sbr.rel (0) target = $region33
  $region32: #{hybrid_forward.3} parent=0 // pred_region
    _
  $region33: #{hybrid_forward.3} parent=0 // pred_fallthru
    _
  // Predicated region
  $region34: #{hybrid_forward.3} parent=0 // pred_check
    _
  $region35: #{hybrid_forward.3} parent=0 // pred_check_branch
    %33 = sbr.rel (0) target = $region37
  $region36: #{hybrid_forward.3} parent=0 // pred_region
    _
  $region37: #{hybrid_forward.3} parent=0 // pred_fallthru
    _
  // Predicated region
  $region38: #{hybrid_forward.3} parent=0 // pred_check
    _
  $region39: #{hybrid_forward.3} parent=0 // pred_check_branch
    %35 = sbr.rel (0) target = $region41
  $region40: #{hybrid_forward.3} parent=0 // pred_region
    _
  $region41: #{hybrid_forward.3} parent=0 // pred_fallthru
    _
  %v36 = vld [vmem:[%s1] sm:$0xff]
  %v37 = vld [vmem:[%s1 + $0x8] sm:$0xff]
  %v38 = vld [vmem:[%s1 + $0x10] sm:$0xff]
  %v39 = vld [vmem:[%s1 + $0x18] sm:$0xff]
  %v40 = vld [vmem:[%s1 + $0x20] sm:$0xff]
  %v41 = vld [vmem:[%s1 + $0x28] sm:$0xff]
  %v42 = vld [vmem:[%s1 + $0x30] sm:$0xff]
  %v43 = vld [vmem:[%s1 + $0x38] sm:$0xff]
  %v44 = vld [vmem:[%s2] sm:$0xff]
  %v45 = vld [vmem:[%s2 + $0x8] sm:$0xff]
  %v46 = vld [vmem:[%s2 + $0x10] sm:$0xff]
  %v47 = vld [vmem:[%s2 + $0x18] sm:$0xff]
  %v48 = vld [vmem:[%s4] sm:$0x1]
  %v50 = vperm.slane %v48, 0
  %vm52 = vcmask 261120
  %v54 = vsel %vm52, %v36, 0
  %v57 = vsel %vm52, %v37, 0
  %v60 = vsel %vm52, %v38, 0
  %v63 = vsel %vm52, %v39, 0
  %v66 = vsel %vm52, %v40, 0
  %v69 = vsel %vm52, %v41, 0
  %v72 = vsel %vm52, %v42, 0
  %v75 = vsel %vm52, %v43, 0
  %77 = vmatpush.msra.mxu0 0.0
  %78 = vmatpush.msra.mxu0 0.0
  %79 = vmatpush.msra.mxu0 0.0
  %80 = vmatpush.msra.mxu0 0.0
  %81 = vmatpush.msra.mxu0 0.0
  %82 = vmatpush.msra.mxu0 0.0
  %83 = vmatpush.msra.mxu0 0.0
  %84 = vmatpush.msra.mxu0 0.0
  %85 = vmatpush.msra.mxu0 0.0
  %86 = vmatpush.msra.mxu0 0.0
  %87 = vmatpush.msra.mxu0 0.0
  %88 = vmatpush.msra.mxu0 0.0
  %89 = vmatpush.msra.mxu0 %v47
  %90 = vmatpush.msra.mxu0 %v46
  %91 = vmatpush.msra.mxu0 %v45
  %92 = vmatpush.msra.mxu0 %v44
  %93 = vmatmul.f32.gmra.mxu0 %v54
  %v94 = vpop.f32.mrf.mxu0
  %v95 = vadd.f32 %v50, %v94
  %96 = vmatmul.f32.gmra.mxu0 %v57
  %v97 = vpop.f32.mrf.mxu0
  %v98 = vadd.f32 %v50, %v97
  %99 = vmatmul.f32.gmra.mxu0 %v60
  %v100 = vpop.f32.mrf.mxu0
  %v101 = vadd.f32 %v50, %v100
  %102 = vmatmul.f32.gmra.mxu0 %v63
  %v103 = vpop.f32.mrf.mxu0
  %v104 = vadd.f32 %v50, %v103
  %105 = vmatmul.f32.gmra.mxu0 %v66
  %v106 = vpop.f32.mrf.mxu0
  %v107 = vadd.f32 %v50, %v106
  %108 = vmatmul.f32.gmra.mxu0 %v69
  %v109 = vpop.f32.mrf.mxu0
  %v110 = vadd.f32 %v50, %v109
  %111 = vmatmul.f32.gmra.mxu0 %v72
  %v112 = vpop.f32.mrf.mxu0
  %v113 = vadd.f32 %v50, %v112
  %114 = vmatmul.f32.gmra.mxu0 %v75
  %v115 = vpop.f32.mrf.mxu0
  %v116 = vadd.f32 %v50, %v115
  %117 = vdwg.mxu0
  %v118 = vld [vmem:[%s3] sm:$0xff]
  %v119 = vld [vmem:[%s3 + $0x8] sm:$0xff]
  %v120 = vld [vmem:[%s3 + $0x10] sm:$0xff]
  %v121 = vld [vmem:[%s3 + $0x18] sm:$0xff]
  %v123 = vsel %vm52, 0.0, 0
  %125 = vmatpush.msra.mxu0 0.0
  %126 = vmatpush.msra.mxu0 0.0
  %127 = vmatpush.msra.mxu0 0.0
  %128 = vmatpush.msra.mxu0 0.0
  %129 = vmatpush.msra.mxu0 0.0
  %130 = vmatpush.msra.mxu0 0.0
  %131 = vmatpush.msra.mxu0 0.0
  %132 = vmatpush.msra.mxu0 0.0
  %133 = vmatpush.msra.mxu0 0.0
  %134 = vmatpush.msra.mxu0 0.0
  %135 = vmatpush.msra.mxu0 0.0
  %136 = vmatpush.msra.mxu0 0.0
  %137 = vmatpush.msra.mxu0 %v121
  %138 = vmatpush.msra.mxu0 %v120
  %139 = vmatpush.msra.mxu0 %v119
  %140 = vmatpush.msra.mxu0 %v118
  %141 = vmatmul.f32.gmra.mxu0 %v123
  %v142 = vpop.f32.mrf.mxu0
  %v143 = vadd.f32 0.0, %v142
  %144 = vdwg.mxu0
  %v146 = vrot.slane %v143, 1
  %v147 = vrot.slane %v143, 2
  %v148 = vrot.slane %v143, 3
  %v149 = vrot.slane %v143, 4
  %v150 = vrot.slane %v143, 5
  %v151 = vrot.slane %v143, 6
  %v152 = vrot.slane %v143, 7
  %v161 = vadd.f32 %v95, %v143
  %v162 = vadd.f32 %v98, %v146
  %v163 = vadd.f32 %v101, %v147
  %v164 = vadd.f32 %v104, %v148
  %v165 = vadd.f32 %v107, %v149
  %v166 = vadd.f32 %v110, %v150
  %v167 = vadd.f32 %v113, %v151
  %v168 = vadd.f32 %v116, %v152
  %v169 = vxor.u32 %v161, 2147483648
  %v170 = vxor.u32 %v162, 2147483648
  %v171 = vxor.u32 %v163, 2147483648
  %v172 = vxor.u32 %v164, 2147483648
  %v173 = vxor.u32 %v165, 2147483648
  %v174 = vxor.u32 %v166, 2147483648
  %v175 = vxor.u32 %v167, 2147483648
  %v176 = vxor.u32 %v168, 2147483648
  %v177 = vmul.f32 %v169, 1.442695
  %v178 = vpow.pop %v177
  %v179 = vmul.f32 %v170, 1.442695
  %v180 = vpow.pop %v179
  %v181 = vmul.f32 %v171, 1.442695
  %v182 = vpow.pop %v181
  %v183 = vmul.f32 %v172, 1.442695
  %v184 = vpow.pop %v183
  %v185 = vmul.f32 %v173, 1.442695
  %v186 = vpow.pop %v185
  %v187 = vmul.f32 %v174, 1.442695
  %v188 = vpow.pop %v187
  %v189 = vmul.f32 %v175, 1.442695
  %v190 = vpow.pop %v189
  %v191 = vmul.f32 %v176, 1.442695
  %v192 = vpow.pop %v191
  %v193 = vadd.f32 %v178, 1.0
  %v194 = vadd.f32 %v180, 1.0
  %v195 = vadd.f32 %v182, 1.0
  %v196 = vadd.f32 %v184, 1.0
  %v197 = vadd.f32 %v186, 1.0
  %v198 = vadd.f32 %v188, 1.0
  %v199 = vadd.f32 %v190, 1.0
  %v200 = vadd.f32 %v192, 1.0
  %v201 = vrcp.pop %v193
  %v202 = vmul.f32 %v193, %v201
  %v203 = vsub.f32 1.0, %v202
  %v204 = vmul.f32 %v201, %v203
  %v205 = vadd.f32 %v201, %v204
  %vm206 = vweird.f32 %v193
  %vm207 = vweird.f32 %v201
  %vm208 = vmor %vm206, %vm207
  %v209 = vsel %vm208, %v201, %v205
  %v210 = vand.u32 2147483647, %v193
  %vm211 = vcmp.eq.f32.partialorder %v210, 8.507059e+37
  %v212 = vand.u32 %v193, 2147483648
  %v213 = vor.u32 1.1754944e-38, %v212
  %v214 = vsel %vm211, %v213, %v209
  %v215 = vmul.f32 1.0, %v214
  %v216 = vrcp.pop %v194
  %v217 = vmul.f32 %v194, %v216
  %v218 = vsub.f32 1.0, %v217
  %v219 = vmul.f32 %v216, %v218
  %v220 = vadd.f32 %v216, %v219
  %vm221 = vweird.f32 %v194
  %vm222 = vweird.f32 %v216
  %vm223 = vmor %vm221, %vm222
  %v224 = vsel %vm223, %v216, %v220
  %v225 = vand.u32 2147483647, %v194
  %vm226 = vcmp.eq.f32.partialorder %v225, 8.507059e+37
  %v227 = vand.u32 %v194, 2147483648
  %v228 = vor.u32 1.1754944e-38, %v227
  %v229 = vsel %vm226, %v228, %v224
  %v230 = vmul.f32 1.0, %v229
  %v231 = vrcp.pop %v195
  %v232 = vmul.f32 %v195, %v231
  %v233 = vsub.f32 1.0, %v232
  %v234 = vmul.f32 %v231, %v233
  %v235 = vadd.f32 %v231, %v234
  %vm236 = vweird.f32 %v195
  %vm237 = vweird.f32 %v231
  %vm238 = vmor %vm236, %vm237
  %v239 = vsel %vm238, %v231, %v235
  %v240 = vand.u32 2147483647, %v195
  %vm241 = vcmp.eq.f32.partialorder %v240, 8.507059e+37
  %v242 = vand.u32 %v195, 2147483648
  %v243 = vor.u32 1.1754944e-38, %v242
  %v244 = vsel %vm241, %v243, %v239
  %v245 = vmul.f32 1.0, %v244
  %v246 = vrcp.pop %v196
  %v247 = vmul.f32 %v196, %v246
  %v248 = vsub.f32 1.0, %v247
  %v249 = vmul.f32 %v246, %v248
  %v250 = vadd.f32 %v246, %v249
  %vm251 = vweird.f32 %v196
  %vm252 = vweird.f32 %v246
  %vm253 = vmor %vm251, %vm252
  %v254 = vsel %vm253, %v246, %v250
  %v255 = vand.u32 2147483647, %v196
  %vm256 = vcmp.eq.f32.partialorder %v255, 8.507059e+37
  %v257 = vand.u32 %v196, 2147483648
  %v258 = vor.u32 1.1754944e-38, %v257
  %v259 = vsel %vm256, %v258, %v254
  %v260 = vmul.f32 1.0, %v259
  %v261 = vrcp.pop %v197
  %v262 = vmul.f32 %v197, %v261
  %v263 = vsub.f32 1.0, %v262
  %v264 = vmul.f32 %v261, %v263
  %v265 = vadd.f32 %v261, %v264
  %vm266 = vweird.f32 %v197
  %vm267 = vweird.f32 %v261
  %vm268 = vmor %vm266, %vm267
  %v269 = vsel %vm268, %v261, %v265
  %v270 = vand.u32 2147483647, %v197
  %vm271 = vcmp.eq.f32.partialorder %v270, 8.507059e+37
  %v272 = vand.u32 %v197, 2147483648
  %v273 = vor.u32 1.1754944e-38, %v272
  %v274 = vsel %vm271, %v273, %v269
  %v275 = vmul.f32 1.0, %v274
  %v276 = vrcp.pop %v198
  %v277 = vmul.f32 %v198, %v276
  %v278 = vsub.f32 1.0, %v277
  %v279 = vmul.f32 %v276, %v278
  %v280 = vadd.f32 %v276, %v279
  %vm281 = vweird.f32 %v198
  %vm282 = vweird.f32 %v276
  %vm283 = vmor %vm281, %vm282
  %v284 = vsel %vm283, %v276, %v280
  %v285 = vand.u32 2147483647, %v198
  %vm286 = vcmp.eq.f32.partialorder %v285, 8.507059e+37
  %v287 = vand.u32 %v198, 2147483648
  %v288 = vor.u32 1.1754944e-38, %v287
  %v289 = vsel %vm286, %v288, %v284
  %v290 = vmul.f32 1.0, %v289
  %v291 = vrcp.pop %v199
  %v292 = vmul.f32 %v199, %v291
  %v293 = vsub.f32 1.0, %v292
  %v294 = vmul.f32 %v291, %v293
  %v295 = vadd.f32 %v291, %v294
  %vm296 = vweird.f32 %v199
  %vm297 = vweird.f32 %v291
  %vm298 = vmor %vm296, %vm297
  %v299 = vsel %vm298, %v291, %v295
  %v300 = vand.u32 2147483647, %v199
  %vm301 = vcmp.eq.f32.partialorder %v300, 8.507059e+37
  %v302 = vand.u32 %v199, 2147483648
  %v303 = vor.u32 1.1754944e-38, %v302
  %v304 = vsel %vm301, %v303, %v299
  %v305 = vmul.f32 1.0, %v304
  %v306 = vrcp.pop %v200
  %v307 = vmul.f32 %v200, %v306
  %v308 = vsub.f32 1.0, %v307
  %v309 = vmul.f32 %v306, %v308
  %v310 = vadd.f32 %v306, %v309
  %vm311 = vweird.f32 %v200
  %vm312 = vweird.f32 %v306
  %vm313 = vmor %vm311, %vm312
  %v314 = vsel %vm313, %v306, %v310
  %v315 = vand.u32 2147483647, %v200
  %vm316 = vcmp.eq.f32.partialorder %v315, 8.507059e+37
  %v317 = vand.u32 %v200, 2147483648
  %v318 = vor.u32 1.1754944e-38, %v317
  %v319 = vsel %vm316, %v318, %v314
  %v320 = vmul.f32 1.0, %v319
  %v321 = vtanh.pop %v161
  %v322 = vtanh.pop %v162
  %v323 = vtanh.pop %v163
  %v324 = vtanh.pop %v164
  %v325 = vtanh.pop %v165
  %v326 = vtanh.pop %v166
  %v327 = vtanh.pop %v167
  %v328 = vtanh.pop %v168
  %v329 = vmul.f32 %v215, 0.0
  %v330 = vmul.f32 %v230, 0.0
  %v331 = vmul.f32 %v245, 0.0
  %v332 = vmul.f32 %v260, 0.0
  %v333 = vmul.f32 %v275, 0.0
  %v334 = vmul.f32 %v290, 0.0
  %v335 = vmul.f32 %v305, 0.0
  %v336 = vmul.f32 %v320, 0.0
  %345 = vrot.lane.b32.xlu0 %v321, 64
  %v346 = vpop.permute.xlu0 %345
  %347 = vrot.lane.b32.xlu0 %v322, 64
  %v348 = vpop.permute.xlu0 %347
  %349 = vrot.lane.b32.xlu0 %v323, 64
  %v350 = vpop.permute.xlu0 %349
  %351 = vrot.lane.b32.xlu0 %v324, 64
  %v352 = vpop.permute.xlu0 %351
  %353 = vrot.lane.b32.xlu0 %v325, 64
  %v354 = vpop.permute.xlu0 %353
  %355 = vrot.lane.b32.xlu0 %v326, 64
  %v356 = vpop.permute.xlu0 %355
  %357 = vrot.lane.b32.xlu0 %v327, 64
  %v358 = vpop.permute.xlu0 %357
  %359 = vrot.lane.b32.xlu0 %v328, 64
  %v360 = vpop.permute.xlu0 %359
  %v369 = vmul.f32 %v215, %v346
  %v370 = vmul.f32 %v230, %v348
  %v371 = vmul.f32 %v245, %v350
  %v372 = vmul.f32 %v260, %v352
  %v373 = vmul.f32 %v275, %v354
  %v374 = vmul.f32 %v290, %v356
  %v375 = vmul.f32 %v305, %v358
  %v376 = vmul.f32 %v320, %v360
  %385 = vrot.lane.b32.xlu0 %v369, 32
  %v386 = vpop.permute.xlu0 %385
  %387 = vrot.lane.b32.xlu0 %v370, 32
  %v388 = vpop.permute.xlu0 %387
  %389 = vrot.lane.b32.xlu0 %v371, 32
  %v390 = vpop.permute.xlu0 %389
  %391 = vrot.lane.b32.xlu0 %v372, 32
  %v392 = vpop.permute.xlu0 %391
  %393 = vrot.lane.b32.xlu0 %v373, 32
  %v394 = vpop.permute.xlu0 %393
  %395 = vrot.lane.b32.xlu0 %v374, 32
  %v396 = vpop.permute.xlu0 %395
  %397 = vrot.lane.b32.xlu0 %v375, 32
  %v398 = vpop.permute.xlu0 %397
  %399 = vrot.lane.b32.xlu0 %v376, 32
  %v400 = vpop.permute.xlu0 %399
  %v409 = vadd.f32 %v329, %v386
  %v410 = vadd.f32 %v330, %v388
  %v411 = vadd.f32 %v331, %v390
  %v412 = vadd.f32 %v332, %v392
  %v413 = vadd.f32 %v333, %v394
  %v414 = vadd.f32 %v334, %v396
  %v415 = vadd.f32 %v335, %v398
  %v416 = vadd.f32 %v336, %v400
  %v417 = vtanh.pop %v409
  %v418 = vtanh.pop %v410
  %v419 = vtanh.pop %v411
  %v420 = vtanh.pop %v412
  %v421 = vtanh.pop %v413
  %v422 = vtanh.pop %v414
  %v423 = vtanh.pop %v415
  %v424 = vtanh.pop %v416
  %433 = vrot.lane.b32.xlu0 %v417, 64
  %v434 = vpop.permute.xlu0 %433
  %435 = vrot.lane.b32.xlu0 %v418, 64
  %v436 = vpop.permute.xlu0 %435
  %437 = vrot.lane.b32.xlu0 %v419, 64
  %v438 = vpop.permute.xlu0 %437
  %439 = vrot.lane.b32.xlu0 %v420, 64
  %v440 = vpop.permute.xlu0 %439
  %441 = vrot.lane.b32.xlu0 %v421, 64
  %v442 = vpop.permute.xlu0 %441
  %443 = vrot.lane.b32.xlu0 %v422, 64
  %v444 = vpop.permute.xlu0 %443
  %445 = vrot.lane.b32.xlu0 %v423, 64
  %v446 = vpop.permute.xlu0 %445
  %447 = vrot.lane.b32.xlu0 %v424, 64
  %v448 = vpop.permute.xlu0 %447
  %v457 = vmul.f32 %v215, %v434
  %v458 = vmul.f32 %v230, %v436
  %v459 = vmul.f32 %v245, %v438
  %v460 = vmul.f32 %v260, %v440
  %v461 = vmul.f32 %v275, %v442
  %v462 = vmul.f32 %v290, %v444
  %v463 = vmul.f32 %v305, %v446
  %v464 = vmul.f32 %v320, %v448
  %v473 = vrot.slane %v458, 7
  %vm474 = vcmask 1041409
  %v475 = vsel %vm474, %v473, %v457
  %v476 = vrot.slane %v459, 6
  %vm477 = vcmask 1042434
  %v478 = vsel %vm477, %v476, %v475
  %v479 = vrot.slane %v460, 5
  %vm480 = vcmask 1043459
  %v481 = vsel %vm480, %v479, %v478
  %v482 = vrot.slane %v461, 4
  %vm483 = vcmask 1044484
  %v484 = vsel %vm483, %v482, %v481
  %v485 = vrot.slane %v462, 3
  %vm486 = vcmask 1045509
  %v487 = vsel %vm486, %v485, %v484
  %v488 = vrot.slane %v463, 2
  %vm489 = vcmask 1046534
  %v490 = vsel %vm489, %v488, %v487
  %v491 = vrot.slane %v464, 1
  %vm492 = vcmask 1047559
  %v493 = vsel %vm492, %v491, %v490
  %494 = vrot.lane.b32.xlu0 %v493, 32
  %v495 = vpop.permute.xlu0 %494
  %v496 = vsel %vm52, %v495, 0
  %498 = vmatpush.msra.mxu0 0.0
  %499 = vmatpush.msra.mxu0 0.0
  %500 = vmatpush.msra.mxu0 0.0
  %501 = vmatpush.msra.mxu0 0.0
  %502 = vmatpush.msra.mxu0 0.0
  %503 = vmatpush.msra.mxu0 0.0
  %504 = vmatpush.msra.mxu0 0.0
  %505 = vmatpush.msra.mxu0 0.0
  %506 = vmatpush.msra.mxu0 0.0
  %507 = vmatpush.msra.mxu0 0.0
  %508 = vmatpush.msra.mxu0 0.0
  %509 = vmatpush.msra.mxu0 0.0
  %510 = vmatpush.msra.mxu0 %v121
  %511 = vmatpush.msra.mxu0 %v120
  %512 = vmatpush.msra.mxu0 %v119
  %513 = vmatpush.msra.mxu0 %v118
  %514 = vmatmul.f32.gmra.mxu0 %v496
  %v515 = vpop.f32.mrf.mxu0
  %v516 = vadd.f32 0.0, %v515
  %517 = vdwg.mxu0
  %v519 = vrot.slane %v516, 7
  %v520 = vrot.slane %v516, 1
  %v521 = vrot.slane %v516, 2
  %v522 = vrot.slane %v516, 3
  %v523 = vrot.slane %v516, 4
  %v524 = vrot.slane %v516, 5
  %v525 = vrot.slane %v516, 6
  %v534 = vadd.f32 %v95, %v519
  %v535 = vadd.f32 %v98, %v516
  %v536 = vadd.f32 %v101, %v520
  %v537 = vadd.f32 %v104, %v521
  %v538 = vadd.f32 %v107, %v522
  %v539 = vadd.f32 %v110, %v523
  %v540 = vadd.f32 %v113, %v524
  %v541 = vadd.f32 %v116, %v525
  %v542 = vxor.u32 %v534, 2147483648
  %v543 = vxor.u32 %v535, 2147483648
  %v544 = vxor.u32 %v536, 2147483648
  %v545 = vxor.u32 %v537, 2147483648
  %v546 = vxor.u32 %v538, 2147483648
  %v547 = vxor.u32 %v539, 2147483648
  %v548 = vxor.u32 %v540, 2147483648
  %v549 = vxor.u32 %v541, 2147483648
  %v550 = vmul.f32 %v542, 1.442695
  %v551 = vpow.pop %v550
  %v552 = vmul.f32 %v543, 1.442695
  %v553 = vpow.pop %v552
  %v554 = vmul.f32 %v544, 1.442695
  %v555 = vpow.pop %v554
  %v556 = vmul.f32 %v545, 1.442695
  %v557 = vpow.pop %v556
  %v558 = vmul.f32 %v546, 1.442695
  %v559 = vpow.pop %v558
  %v560 = vmul.f32 %v547, 1.442695
  %v561 = vpow.pop %v560
  %v562 = vmul.f32 %v548, 1.442695
  %v563 = vpow.pop %v562
  %v564 = vmul.f32 %v549, 1.442695
  %v565 = vpow.pop %v564
  %v566 = vadd.f32 %v551, 1.0
  %v567 = vadd.f32 %v553, 1.0
  %v568 = vadd.f32 %v555, 1.0
  %v569 = vadd.f32 %v557, 1.0
  %v570 = vadd.f32 %v559, 1.0
  %v571 = vadd.f32 %v561, 1.0
  %v572 = vadd.f32 %v563, 1.0
  %v573 = vadd.f32 %v565, 1.0
  %v574 = vrcp.pop %v566
  %v575 = vmul.f32 %v566, %v574
  %v576 = vsub.f32 1.0, %v575
  %v577 = vmul.f32 %v574, %v576
  %v578 = vadd.f32 %v574, %v577
  %vm579 = vweird.f32 %v566
  %vm580 = vweird.f32 %v574
  %vm581 = vmor %vm579, %vm580
  %v582 = vsel %vm581, %v574, %v578
  %v583 = vand.u32 2147483647, %v566
  %vm584 = vcmp.eq.f32.partialorder %v583, 8.507059e+37
  %v585 = vand.u32 %v566, 2147483648
  %v586 = vor.u32 1.1754944e-38, %v585
  %v587 = vsel %vm584, %v586, %v582
  %v588 = vmul.f32 1.0, %v587
  %v589 = vrcp.pop %v567
  %v590 = vmul.f32 %v567, %v589
  %v591 = vsub.f32 1.0, %v590
  %v592 = vmul.f32 %v589, %v591
  %v593 = vadd.f32 %v589, %v592
  %vm594 = vweird.f32 %v567
  %vm595 = vweird.f32 %v589
  %vm596 = vmor %vm594, %vm595
  %v597 = vsel %vm596, %v589, %v593
  %v598 = vand.u32 2147483647, %v567
  %vm599 = vcmp.eq.f32.partialorder %v598, 8.507059e+37
  %v600 = vand.u32 %v567, 2147483648
  %v601 = vor.u32 1.1754944e-38, %v600
  %v602 = vsel %vm599, %v601, %v597
  %v603 = vmul.f32 1.0, %v602
  %v604 = vrcp.pop %v568
  %v605 = vmul.f32 %v568, %v604
  %v606 = vsub.f32 1.0, %v605
  %v607 = vmul.f32 %v604, %v606
  %v608 = vadd.f32 %v604, %v607
  %vm609 = vweird.f32 %v568
  %vm610 = vweird.f32 %v604
  %vm611 = vmor %vm609, %vm610
  %v612 = vsel %vm611, %v604, %v608
  %v613 = vand.u32 2147483647, %v568
  %vm614 = vcmp.eq.f32.partialorder %v613, 8.507059e+37
  %v615 = vand.u32 %v568, 2147483648
  %v616 = vor.u32 1.1754944e-38, %v615
  %v617 = vsel %vm614, %v616, %v612
  %v618 = vmul.f32 1.0, %v617
  %v619 = vrcp.pop %v569
  %v620 = vmul.f32 %v569, %v619
  %v621 = vsub.f32 1.0, %v620
  %v622 = vmul.f32 %v619, %v621
  %v623 = vadd.f32 %v619, %v622
  %vm624 = vweird.f32 %v569
  %vm625 = vweird.f32 %v619
  %vm626 = vmor %vm624, %vm625
  %v627 = vsel %vm626, %v619, %v623
  %v628 = vand.u32 2147483647, %v569
  %vm629 = vcmp.eq.f32.partialorder %v628, 8.507059e+37
  %v630 = vand.u32 %v569, 2147483648
  %v631 = vor.u32 1.1754944e-38, %v630
  %v632 = vsel %vm629, %v631, %v627
  %v633 = vmul.f32 1.0, %v632
  %v634 = vrcp.pop %v570
  %v635 = vmul.f32 %v570, %v634
  %v636 = vsub.f32 1.0, %v635
  %v637 = vmul.f32 %v634, %v636
  %v638 = vadd.f32 %v634, %v637
  %vm639 = vweird.f32 %v570
  %vm640 = vweird.f32 %v634
  %vm641 = vmor %vm639, %vm640
  %v642 = vsel %vm641, %v634, %v638
  %v643 = vand.u32 2147483647, %v570
  %vm644 = vcmp.eq.f32.partialorder %v643, 8.507059e+37
  %v645 = vand.u32 %v570, 2147483648
  %v646 = vor.u32 1.1754944e-38, %v645
  %v647 = vsel %vm644, %v646, %v642
  %v648 = vmul.f32 1.0, %v647
  %v649 = vrcp.pop %v571
  %v650 = vmul.f32 %v571, %v649
  %v651 = vsub.f32 1.0, %v650
  %v652 = vmul.f32 %v649, %v651
  %v653 = vadd.f32 %v649, %v652
  %vm654 = vweird.f32 %v571
  %vm655 = vweird.f32 %v649
  %vm656 = vmor %vm654, %vm655
  %v657 = vsel %vm656, %v649, %v653
  %v658 = vand.u32 2147483647, %v571
  %vm659 = vcmp.eq.f32.partialorder %v658, 8.507059e+37
  %v660 = vand.u32 %v571, 2147483648
  %v661 = vor.u32 1.1754944e-38, %v660
  %v662 = vsel %vm659, %v661, %v657
  %v663 = vmul.f32 1.0, %v662
  %v664 = vrcp.pop %v572
  %v665 = vmul.f32 %v572, %v664
  %v666 = vsub.f32 1.0, %v665
  %v667 = vmul.f32 %v664, %v666
  %v668 = vadd.f32 %v664, %v667
  %vm669 = vweird.f32 %v572
  %vm670 = vweird.f32 %v664
  %vm671 = vmor %vm669, %vm670
  %v672 = vsel %vm671, %v664, %v668
  %v673 = vand.u32 2147483647, %v572
  %vm674 = vcmp.eq.f32.partialorder %v673, 8.507059e+37
  %v675 = vand.u32 %v572, 2147483648
  %v676 = vor.u32 1.1754944e-38, %v675
  %v677 = vsel %vm674, %v676, %v672
  %v678 = vmul.f32 1.0, %v677
  %v679 = vrcp.pop %v573
  %v680 = vmul.f32 %v573, %v679
  %v681 = vsub.f32 1.0, %v680
  %v682 = vmul.f32 %v679, %v681
  %v683 = vadd.f32 %v679, %v682
  %vm684 = vweird.f32 %v573
  %vm685 = vweird.f32 %v679
  %vm686 = vmor %vm684, %vm685
  %v687 = vsel %vm686, %v679, %v683
  %v688 = vand.u32 2147483647, %v573
  %vm689 = vcmp.eq.f32.partialorder %v688, 8.507059e+37
  %v690 = vand.u32 %v573, 2147483648
  %v691 = vor.u32 1.1754944e-38, %v690
  %v692 = vsel %vm689, %v691, %v687
  %v693 = vmul.f32 1.0, %v692
  %v694 = vtanh.pop %v534
  %v695 = vtanh.pop %v535
  %v696 = vtanh.pop %v536
  %v697 = vtanh.pop %v537
  %v698 = vtanh.pop %v538
  %v699 = vtanh.pop %v539
  %v700 = vtanh.pop %v540
  %v701 = vtanh.pop %v541
  %v710 = vrot.slane %v409, 7
  %v711 = vrot.slane %v410, 7
  %v712 = vrot.slane %v411, 7
  %v713 = vrot.slane %v412, 7
  %v714 = vrot.slane %v413, 7
  %v715 = vrot.slane %v414, 7
  %v716 = vrot.slane %v415, 7
  %v717 = vrot.slane %v416, 7
  %v726 = vmul.f32 %v588, %v710
  %v727 = vmul.f32 %v603, %v711
  %v728 = vmul.f32 %v618, %v712
  %v729 = vmul.f32 %v633, %v713
  %v730 = vmul.f32 %v648, %v714
  %v731 = vmul.f32 %v663, %v715
  %v732 = vmul.f32 %v678, %v716
  %v733 = vmul.f32 %v693, %v717
  %742 = vrot.lane.b32.xlu0 %v694, 64
  %v743 = vpop.permute.xlu0 %742
  %744 = vrot.lane.b32.xlu0 %v695, 64
  %v745 = vpop.permute.xlu0 %744
  %746 = vrot.lane.b32.xlu0 %v696, 64
  %v747 = vpop.permute.xlu0 %746
  %748 = vrot.lane.b32.xlu0 %v697, 64
  %v749 = vpop.permute.xlu0 %748
  %750 = vrot.lane.b32.xlu0 %v698, 64
  %v751 = vpop.permute.xlu0 %750
  %752 = vrot.lane.b32.xlu0 %v699, 64
  %v753 = vpop.permute.xlu0 %752
  %754 = vrot.lane.b32.xlu0 %v700, 64
  %v755 = vpop.permute.xlu0 %754
  %756 = vrot.lane.b32.xlu0 %v701, 64
  %v757 = vpop.permute.xlu0 %756
  %v766 = vmul.f32 %v588, %v743
  %v767 = vmul.f32 %v603, %v745
  %v768 = vmul.f32 %v618, %v747
  %v769 = vmul.f32 %v633, %v749
  %v770 = vmul.f32 %v648, %v751
  %v771 = vmul.f32 %v663, %v753
  %v772 = vmul.f32 %v678, %v755
  %v773 = vmul.f32 %v693, %v757
  %782 = vrot.lane.b32.xlu0 %v766, 32
  %v783 = vpop.permute.xlu0 %782
  %784 = vrot.lane.b32.xlu0 %v767, 32
  %v785 = vpop.permute.xlu0 %784
  %786 = vrot.lane.b32.xlu0 %v768, 32
  %v787 = vpop.permute.xlu0 %786
  %788 = vrot.lane.b32.xlu0 %v769, 32
  %v789 = vpop.permute.xlu0 %788
  %790 = vrot.lane.b32.xlu0 %v770, 32
  %v791 = vpop.permute.xlu0 %790
  %792 = vrot.lane.b32.xlu0 %v771, 32
  %v793 = vpop.permute.xlu0 %792
  %794 = vrot.lane.b32.xlu0 %v772, 32
  %v795 = vpop.permute.xlu0 %794
  %796 = vrot.lane.b32.xlu0 %v773, 32
  %v797 = vpop.permute.xlu0 %796
  %v806 = vadd.f32 %v726, %v783
  %v807 = vadd.f32 %v727, %v785
  %v808 = vadd.f32 %v728, %v787
  %v809 = vadd.f32 %v729, %v789
  %v810 = vadd.f32 %v730, %v791
  %v811 = vadd.f32 %v731, %v793
  %v812 = vadd.f32 %v732, %v795
  %v813 = vadd.f32 %v733, %v797
  %v814 = vtanh.pop %v806
  %v815 = vtanh.pop %v807
  %v816 = vtanh.pop %v808
  %v817 = vtanh.pop %v809
  %v818 = vtanh.pop %v810
  %v819 = vtanh.pop %v811
  %v820 = vtanh.pop %v812
  %v821 = vtanh.pop %v813
  %830 = vrot.lane.b32.xlu0 %v814, 64
  %v831 = vpop.permute.xlu0 %830
  %832 = vrot.lane.b32.xlu0 %v815, 64
  %v833 = vpop.permute.xlu0 %832
  %834 = vrot.lane.b32.xlu0 %v816, 64
  %v835 = vpop.permute.xlu0 %834
  %836 = vrot.lane.b32.xlu0 %v817, 64
  %v837 = vpop.permute.xlu0 %836
  %838 = vrot.lane.b32.xlu0 %v818, 64
  %v839 = vpop.permute.xlu0 %838
  %840 = vrot.lane.b32.xlu0 %v819, 64
  %v841 = vpop.permute.xlu0 %840
  %842 = vrot.lane.b32.xlu0 %v820, 64
  %v843 = vpop.permute.xlu0 %842
  %844 = vrot.lane.b32.xlu0 %v821, 64
  %v845 = vpop.permute.xlu0 %844
  %v854 = vmul.f32 %v588, %v831
  %v855 = vmul.f32 %v603, %v833
  %v856 = vmul.f32 %v618, %v835
  %v857 = vmul.f32 %v633, %v837
  %v858 = vmul.f32 %v648, %v839
  %v859 = vmul.f32 %v663, %v841
  %v860 = vmul.f32 %v678, %v843
  %v861 = vmul.f32 %v693, %v845
  %v870 = vrot.slane %v854, 1
  %v871 = vsel %vm474, %v855, %v870
  %v872 = vrot.slane %v856, 7
  %v873 = vsel %vm477, %v872, %v871
  %v874 = vrot.slane %v857, 6
  %v875 = vsel %vm480, %v874, %v873
  %v876 = vrot.slane %v858, 5
  %v877 = vsel %vm483, %v876, %v875
  %v878 = vrot.slane %v859, 4
  %v879 = vsel %vm486, %v878, %v877
  %v880 = vrot.slane %v860, 3
  %v881 = vsel %vm489, %v880, %v879
  %v882 = vrot.slane %v861, 2
  %v883 = vsel %vm492, %v882, %v881
  %884 = vrot.lane.b32.xlu0 %v883, 32
  %v885 = vpop.permute.xlu0 %884
  %v886 = vsel %vm52, %v885, 0
  %888 = vmatpush.msra.mxu0 0.0
  %889 = vmatpush.msra.mxu0 0.0
  %890 = vmatpush.msra.mxu0 0.0
  %891 = vmatpush.msra.mxu0 0.0
  %892 = vmatpush.msra.mxu0 0.0
  %893 = vmatpush.msra.mxu0 0.0
  %894 = vmatpush.msra.mxu0 0.0
  %895 = vmatpush.msra.mxu0 0.0
  %896 = vmatpush.msra.mxu0 0.0
  %897 = vmatpush.msra.mxu0 0.0
  %898 = vmatpush.msra.mxu0 0.0
  %899 = vmatpush.msra.mxu0 0.0
  %900 = vmatpush.msra.mxu0 %v121
  %901 = vmatpush.msra.mxu0 %v120
  %902 = vmatpush.msra.mxu0 %v119
  %903 = vmatpush.msra.mxu0 %v118
  %904 = vmatmul.f32.gmra.mxu0 %v886
  %v905 = vpop.f32.mrf.mxu0
  %v906 = vadd.f32 0.0, %v905
  %907 = vdwg.mxu0
  %v909 = vrot.slane %v906, 6
  %v910 = vrot.slane %v906, 7
  %v911 = vrot.slane %v906, 1
  %v912 = vrot.slane %v906, 2
  %v913 = vrot.slane %v906, 3
  %v914 = vrot.slane %v906, 4
  %v915 = vrot.slane %v906, 5
  %v924 = vadd.f32 %v95, %v909
  %v925 = vadd.f32 %v98, %v910
  %v926 = vadd.f32 %v101, %v906
  %v927 = vadd.f32 %v104, %v911
  %v928 = vadd.f32 %v107, %v912
  %v929 = vadd.f32 %v110, %v913
  %v930 = vadd.f32 %v113, %v914
  %v931 = vadd.f32 %v116, %v915
  %v932 = vxor.u32 %v924, 2147483648
  %v933 = vxor.u32 %v925, 2147483648
  %v934 = vxor.u32 %v926, 2147483648
  %v935 = vxor.u32 %v927, 2147483648
  %v936 = vxor.u32 %v928, 2147483648
  %v937 = vxor.u32 %v929, 2147483648
  %v938 = vxor.u32 %v930, 2147483648
  %v939 = vxor.u32 %v931, 2147483648
  %v940 = vmul.f32 %v932, 1.442695
  %v941 = vpow.pop %v940
  %v942 = vmul.f32 %v933, 1.442695
  %v943 = vpow.pop %v942
  %v944 = vmul.f32 %v934, 1.442695
  %v945 = vpow.pop %v944
  %v946 = vmul.f32 %v935, 1.442695
  %v947 = vpow.pop %v946
  %v948 = vmul.f32 %v936, 1.442695
  %v949 = vpow.pop %v948
  %v950 = vmul.f32 %v937, 1.442695
  %v951 = vpow.pop %v950
  %v952 = vmul.f32 %v938, 1.442695
  %v953 = vpow.pop %v952
  %v954 = vmul.f32 %v939, 1.442695
  %v955 = vpow.pop %v954
  %v956 = vadd.f32 %v941, 1.0
  %v957 = vadd.f32 %v943, 1.0
  %v958 = vadd.f32 %v945, 1.0
  %v959 = vadd.f32 %v947, 1.0
  %v960 = vadd.f32 %v949, 1.0
  %v961 = vadd.f32 %v951, 1.0
  %v962 = vadd.f32 %v953, 1.0
  %v963 = vadd.f32 %v955, 1.0
  %v964 = vrcp.pop %v956
  %v965 = vmul.f32 %v956, %v964
  %v966 = vsub.f32 1.0, %v965
  %v967 = vmul.f32 %v964, %v966
  %v968 = vadd.f32 %v964, %v967
  %vm969 = vweird.f32 %v956
  %vm970 = vweird.f32 %v964
  %vm971 = vmor %vm969, %vm970
  %v972 = vsel %vm971, %v964, %v968
  %v973 = vand.u32 2147483647, %v956
  %vm974 = vcmp.eq.f32.partialorder %v973, 8.507059e+37
  %v975 = vand.u32 %v956, 2147483648
  %v976 = vor.u32 1.1754944e-38, %v975
  %v977 = vsel %vm974, %v976, %v972
  %v978 = vmul.f32 1.0, %v977
  %v979 = vrcp.pop %v957
  %v980 = vmul.f32 %v957, %v979
  %v981 = vsub.f32 1.0, %v980
  %v982 = vmul.f32 %v979, %v981
  %v983 = vadd.f32 %v979, %v982
  %vm984 = vweird.f32 %v957
  %vm985 = vweird.f32 %v979
  %vm986 = vmor %vm984, %vm985
  %v987 = vsel %vm986, %v979, %v983
  %v988 = vand.u32 2147483647, %v957
  %vm989 = vcmp.eq.f32.partialorder %v988, 8.507059e+37
  %v990 = vand.u32 %v957, 2147483648
  %v991 = vor.u32 1.1754944e-38, %v990
  %v992 = vsel %vm989, %v991, %v987
  %v993 = vmul.f32 1.0, %v992
  %v994 = vrcp.pop %v958
  %v995 = vmul.f32 %v958, %v994
  %v996 = vsub.f32 1.0, %v995
  %v997 = vmul.f32 %v994, %v996
  %v998 = vadd.f32 %v994, %v997
  %vm999 = vweird.f32 %v958
  %vm1000 = vweird.f32 %v994
  %vm1001 = vmor %vm999, %vm1000
  %v1002 = vsel %vm1001, %v994, %v998
  %v1003 = vand.u32 2147483647, %v958
  %vm1004 = vcmp.eq.f32.partialorder %v1003, 8.507059e+37
  %v1005 = vand.u32 %v958, 2147483648
  %v1006 = vor.u32 1.1754944e-38, %v1005
  %v1007 = vsel %vm1004, %v1006, %v1002
  %v1008 = vmul.f32 1.0, %v1007
  %v1009 = vrcp.pop %v959
  %v1010 = vmul.f32 %v959, %v1009
  %v1011 = vsub.f32 1.0, %v1010
  %v1012 = vmul.f32 %v1009, %v1011
  %v1013 = vadd.f32 %v1009, %v1012
  %vm1014 = vweird.f32 %v959
  %vm1015 = vweird.f32 %v1009
  %vm1016 = vmor %vm1014, %vm1015
  %v1017 = vsel %vm1016, %v1009, %v1013
  %v1018 = vand.u32 2147483647, %v959
  %vm1019 = vcmp.eq.f32.partialorder %v1018, 8.507059e+37
  %v1020 = vand.u32 %v959, 2147483648
  %v1021 = vor.u32 1.1754944e-38, %v1020
  %v1022 = vsel %vm1019, %v1021, %v1017
  %v1023 = vmul.f32 1.0, %v1022
  %v1024 = vrcp.pop %v960
  %v1025 = vmul.f32 %v960, %v1024
  %v1026 = vsub.f32 1.0, %v1025
  %v1027 = vmul.f32 %v1024, %v1026
  %v1028 = vadd.f32 %v1024, %v1027
  %vm1029 = vweird.f32 %v960
  %vm1030 = vweird.f32 %v1024
  %vm1031 = vmor %vm1029, %vm1030
  %v1032 = vsel %vm1031, %v1024, %v1028
  %v1033 = vand.u32 2147483647, %v960
  %vm1034 = vcmp.eq.f32.partialorder %v1033, 8.507059e+37
  %v1035 = vand.u32 %v960, 2147483648
  %v1036 = vor.u32 1.1754944e-38, %v1035
  %v1037 = vsel %vm1034, %v1036, %v1032
  %v1038 = vmul.f32 1.0, %v1037
  %v1039 = vrcp.pop %v961
  %v1040 = vmul.f32 %v961, %v1039
  %v1041 = vsub.f32 1.0, %v1040
  %v1042 = vmul.f32 %v1039, %v1041
  %v1043 = vadd.f32 %v1039, %v1042
  %vm1044 = vweird.f32 %v961
  %vm1045 = vweird.f32 %v1039
  %vm1046 = vmor %vm1044, %vm1045
  %v1047 = vsel %vm1046, %v1039, %v1043
  %v1048 = vand.u32 2147483647, %v961
  %vm1049 = vcmp.eq.f32.partialorder %v1048, 8.507059e+37
  %v1050 = vand.u32 %v961, 2147483648
  %v1051 = vor.u32 1.1754944e-38, %v1050
  %v1052 = vsel %vm1049, %v1051, %v1047
  %v1053 = vmul.f32 1.0, %v1052
  %v1054 = vrcp.pop %v962
  %v1055 = vmul.f32 %v962, %v1054
  %v1056 = vsub.f32 1.0, %v1055
  %v1057 = vmul.f32 %v1054, %v1056
  %v1058 = vadd.f32 %v1054, %v1057
  %vm1059 = vweird.f32 %v962
  %vm1060 = vweird.f32 %v1054
  %vm1061 = vmor %vm1059, %vm1060
  %v1062 = vsel %vm1061, %v1054, %v1058
  %v1063 = vand.u32 2147483647, %v962
  %vm1064 = vcmp.eq.f32.partialorder %v1063, 8.507059e+37
  %v1065 = vand.u32 %v962, 2147483648
  %v1066 = vor.u32 1.1754944e-38, %v1065
  %v1067 = vsel %vm1064, %v1066, %v1062
  %v1068 = vmul.f32 1.0, %v1067
  %v1069 = vrcp.pop %v963
  %v1070 = vmul.f32 %v963, %v1069
  %v1071 = vsub.f32 1.0, %v1070
  %v1072 = vmul.f32 %v1069, %v1071
  %v1073 = vadd.f32 %v1069, %v1072
  %vm1074 = vweird.f32 %v963
  %vm1075 = vweird.f32 %v1069
  %vm1076 = vmor %vm1074, %vm1075
  %v1077 = vsel %vm1076, %v1069, %v1073
  %v1078 = vand.u32 2147483647, %v963
  %vm1079 = vcmp.eq.f32.partialorder %v1078, 8.507059e+37
  %v1080 = vand.u32 %v963, 2147483648
  %v1081 = vor.u32 1.1754944e-38, %v1080
  %v1082 = vsel %vm1079, %v1081, %v1077
  %v1083 = vmul.f32 1.0, %v1082
  %v1084 = vtanh.pop %v924
  %v1085 = vtanh.pop %v925
  %v1086 = vtanh.pop %v926
  %v1087 = vtanh.pop %v927
  %v1088 = vtanh.pop %v928
  %v1089 = vtanh.pop %v929
  %v1090 = vtanh.pop %v930
  %v1091 = vtanh.pop %v931
  %v1100 = vrot.slane %v806, 7
  %v1101 = vrot.slane %v807, 7
  %v1102 = vrot.slane %v808, 7
  %v1103 = vrot.slane %v809, 7
  %v1104 = vrot.slane %v810, 7
  %v1105 = vrot.slane %v811, 7
  %v1106 = vrot.slane %v812, 7
  %v1107 = vrot.slane %v813, 7
  %v1116 = vmul.f32 %v978, %v1100
  %v1117 = vmul.f32 %v993, %v1101
  %v1118 = vmul.f32 %v1008, %v1102
  %v1119 = vmul.f32 %v1023, %v1103
  %v1120 = vmul.f32 %v1038, %v1104
  %v1121 = vmul.f32 %v1053, %v1105
  %v1122 = vmul.f32 %v1068, %v1106
  %v1123 = vmul.f32 %v1083, %v1107
  %1132 = vrot.lane.b32.xlu0 %v1084, 64
  %v1133 = vpop.permute.xlu0 %1132
  %1134 = vrot.lane.b32.xlu0 %v1085, 64
  %v1135 = vpop.permute.xlu0 %1134
  %1136 = vrot.lane.b32.xlu0 %v1086, 64
  %v1137 = vpop.permute.xlu0 %1136
  %1138 = vrot.lane.b32.xlu0 %v1087, 64
  %v1139 = vpop.permute.xlu0 %1138
  %1140 = vrot.lane.b32.xlu0 %v1088, 64
  %v1141 = vpop.permute.xlu0 %1140
  %1142 = vrot.lane.b32.xlu0 %v1089, 64
  %v1143 = vpop.permute.xlu0 %1142
  %1144 = vrot.lane.b32.xlu0 %v1090, 64
  %v1145 = vpop.permute.xlu0 %1144
  %1146 = vrot.lane.b32.xlu0 %v1091, 64
  %v1147 = vpop.permute.xlu0 %1146
  %v1156 = vmul.f32 %v978, %v1133
  %v1157 = vmul.f32 %v993, %v1135
  %v1158 = vmul.f32 %v1008, %v1137
  %v1159 = vmul.f32 %v1023, %v1139
  %v1160 = vmul.f32 %v1038, %v1141
  %v1161 = vmul.f32 %v1053, %v1143
  %v1162 = vmul.f32 %v1068, %v1145
  %v1163 = vmul.f32 %v1083, %v1147
  %1172 = vrot.lane.b32.xlu0 %v1156, 32
  %v1173 = vpop.permute.xlu0 %1172
  %1174 = vrot.lane.b32.xlu0 %v1157, 32
  %v1175 = vpop.permute.xlu0 %1174
  %1176 = vrot.lane.b32.xlu0 %v1158, 32
  %v1177 = vpop.permute.xlu0 %1176
  %1178 = vrot.lane.b32.xlu0 %v1159, 32
  %v1179 = vpop.permute.xlu0 %1178
  %1180 = vrot.lane.b32.xlu0 %v1160, 32
  %v1181 = vpop.permute.xlu0 %1180
  %1182 = vrot.lane.b32.xlu0 %v1161, 32
  %v1183 = vpop.permute.xlu0 %1182
  %1184 = vrot.lane.b32.xlu0 %v1162, 32
  %v1185 = vpop.permute.xlu0 %1184
  %1186 = vrot.lane.b32.xlu0 %v1163, 32
  %v1187 = vpop.permute.xlu0 %1186
  %v1196 = vadd.f32 %v1116, %v1173
  %v1197 = vadd.f32 %v1117, %v1175
  %v1198 = vadd.f32 %v1118, %v1177
  %v1199 = vadd.f32 %v1119, %v1179
  %v1200 = vadd.f32 %v1120, %v1181
  %v1201 = vadd.f32 %v1121, %v1183
  %v1202 = vadd.f32 %v1122, %v1185
  %v1203 = vadd.f32 %v1123, %v1187
  %v1204 = vtanh.pop %v1196
  %v1205 = vtanh.pop %v1197
  %v1206 = vtanh.pop %v1198
  %v1207 = vtanh.pop %v1199
  %v1208 = vtanh.pop %v1200
  %v1209 = vtanh.pop %v1201
  %v1210 = vtanh.pop %v1202
  %v1211 = vtanh.pop %v1203
  %1220 = vrot.lane.b32.xlu0 %v1204, 64
  %v1221 = vpop.permute.xlu0 %1220
  %1222 = vrot.lane.b32.xlu0 %v1205, 64
  %v1223 = vpop.permute.xlu0 %1222
  %1224 = vrot.lane.b32.xlu0 %v1206, 64
  %v1225 = vpop.permute.xlu0 %1224
  %1226 = vrot.lane.b32.xlu0 %v1207, 64
  %v1227 = vpop.permute.xlu0 %1226
  %1228 = vrot.lane.b32.xlu0 %v1208, 64
  %v1229 = vpop.permute.xlu0 %1228
  %1230 = vrot.lane.b32.xlu0 %v1209, 64
  %v1231 = vpop.permute.xlu0 %1230
  %1232 = vrot.lane.b32.xlu0 %v1210, 64
  %v1233 = vpop.permute.xlu0 %1232
  %1234 = vrot.lane.b32.xlu0 %v1211, 64
  %v1235 = vpop.permute.xlu0 %1234
  %v1244 = vmul.f32 %v978, %v1221
  %v1245 = vmul.f32 %v993, %v1223
  %v1246 = vmul.f32 %v1008, %v1225
  %v1247 = vmul.f32 %v1023, %v1227
  %v1248 = vmul.f32 %v1038, %v1229
  %v1249 = vmul.f32 %v1053, %v1231
  %v1250 = vmul.f32 %v1068, %v1233
  %v1251 = vmul.f32 %v1083, %v1235
  %v1260 = vrot.slane %v1244, 2
  %v1261 = vrot.slane %v1245, 1
  %v1262 = vsel %vm474, %v1261, %v1260
  %v1263 = vsel %vm477, %v1246, %v1262
  %v1264 = vrot.slane %v1247, 7
  %v1265 = vsel %vm480, %v1264, %v1263
  %v1266 = vrot.slane %v1248, 6
  %v1267 = vsel %vm483, %v1266, %v1265
  %v1268 = vrot.slane %v1249, 5
  %v1269 = vsel %vm486, %v1268, %v1267
  %v1270 = vrot.slane %v1250, 4
  %v1271 = vsel %vm489, %v1270, %v1269
  %v1272 = vrot.slane %v1251, 3
  %v1273 = vsel %vm492, %v1272, %v1271
  %1274 = vrot.lane.b32.xlu0 %v1273, 32
  %v1275 = vpop.permute.xlu0 %1274
  %v1276 = vsel %vm52, %v1275, 0
  %1278 = vmatpush.msra.mxu0 0.0
  %1279 = vmatpush.msra.mxu0 0.0
  %1280 = vmatpush.msra.mxu0 0.0
  %1281 = vmatpush.msra.mxu0 0.0
  %1282 = vmatpush.msra.mxu0 0.0
  %1283 = vmatpush.msra.mxu0 0.0
  %1284 = vmatpush.msra.mxu0 0.0
  %1285 = vmatpush.msra.mxu0 0.0
  %1286 = vmatpush.msra.mxu0 0.0
  %1287 = vmatpush.msra.mxu0 0.0
  %1288 = vmatpush.msra.mxu0 0.0
  %1289 = vmatpush.msra.mxu0 0.0
  %1290 = vmatpush.msra.mxu0 %v121
  %1291 = vmatpush.msra.mxu0 %v120
  %1292 = vmatpush.msra.mxu0 %v119
  %1293 = vmatpush.msra.mxu0 %v118
  %1294 = vmatmul.f32.gmra.mxu0 %v1276
  %v1295 = vpop.f32.mrf.mxu0
  %v1296 = vadd.f32 0.0, %v1295
  %1297 = vdwg.mxu0
  %v1299 = vrot.slane %v1296, 5
  %v1300 = vrot.slane %v1296, 6
  %v1301 = vrot.slane %v1296, 7
  %v1302 = vrot.slane %v1296, 1
  %v1303 = vrot.slane %v1296, 2
  %v1304 = vrot.slane %v1296, 3
  %v1305 = vrot.slane %v1296, 4
  %v1314 = vadd.f32 %v95, %v1299
  %v1315 = vadd.f32 %v98, %v1300
  %v1316 = vadd.f32 %v101, %v1301
  %v1317 = vadd.f32 %v104, %v1296
  %v1318 = vadd.f32 %v107, %v1302
  %v1319 = vadd.f32 %v110, %v1303
  %v1320 = vadd.f32 %v113, %v1304
  %v1321 = vadd.f32 %v116, %v1305
  %v1322 = vxor.u32 %v1314, 2147483648
  %v1323 = vxor.u32 %v1315, 2147483648
  %v1324 = vxor.u32 %v1316, 2147483648
  %v1325 = vxor.u32 %v1317, 2147483648
  %v1326 = vxor.u32 %v1318, 2147483648
  %v1327 = vxor.u32 %v1319, 2147483648
  %v1328 = vxor.u32 %v1320, 2147483648
  %v1329 = vxor.u32 %v1321, 2147483648
  %v1330 = vmul.f32 %v1322, 1.442695
  %v1331 = vpow.pop %v1330
  %v1332 = vmul.f32 %v1323, 1.442695
  %v1333 = vpow.pop %v1332
  %v1334 = vmul.f32 %v1324, 1.442695
  %v1335 = vpow.pop %v1334
  %v1336 = vmul.f32 %v1325, 1.442695
  %v1337 = vpow.pop %v1336
  %v1338 = vmul.f32 %v1326, 1.442695
  %v1339 = vpow.pop %v1338
  %v1340 = vmul.f32 %v1327, 1.442695
  %v1341 = vpow.pop %v1340
  %v1342 = vmul.f32 %v1328, 1.442695
  %v1343 = vpow.pop %v1342
  %v1344 = vmul.f32 %v1329, 1.442695
  %v1345 = vpow.pop %v1344
  %v1346 = vadd.f32 %v1331, 1.0
  %v1347 = vadd.f32 %v1333, 1.0
  %v1348 = vadd.f32 %v1335, 1.0
  %v1349 = vadd.f32 %v1337, 1.0
  %v1350 = vadd.f32 %v1339, 1.0
  %v1351 = vadd.f32 %v1341, 1.0
  %v1352 = vadd.f32 %v1343, 1.0
  %v1353 = vadd.f32 %v1345, 1.0
  %v1354 = vrcp.pop %v1346
  %v1355 = vmul.f32 %v1346, %v1354
  %v1356 = vsub.f32 1.0, %v1355
  %v1357 = vmul.f32 %v1354, %v1356
  %v1358 = vadd.f32 %v1354, %v1357
  %vm1359 = vweird.f32 %v1346
  %vm1360 = vweird.f32 %v1354
  %vm1361 = vmor %vm1359, %vm1360
  %v1362 = vsel %vm1361, %v1354, %v1358
  %v1363 = vand.u32 2147483647, %v1346
  %vm1364 = vcmp.eq.f32.partialorder %v1363, 8.507059e+37
  %v1365 = vand.u32 %v1346, 2147483648
  %v1366 = vor.u32 1.1754944e-38, %v1365
  %v1367 = vsel %vm1364, %v1366, %v1362
  %v1368 = vmul.f32 1.0, %v1367
  %v1369 = vrcp.pop %v1347
  %v1370 = vmul.f32 %v1347, %v1369
  %v1371 = vsub.f32 1.0, %v1370
  %v1372 = vmul.f32 %v1369, %v1371
  %v1373 = vadd.f32 %v1369, %v1372
  %vm1374 = vweird.f32 %v1347
  %vm1375 = vweird.f32 %v1369
  %vm1376 = vmor %vm1374, %vm1375
  %v1377 = vsel %vm1376, %v1369, %v1373
  %v1378 = vand.u32 2147483647, %v1347
  %vm1379 = vcmp.eq.f32.partialorder %v1378, 8.507059e+37
  %v1380 = vand.u32 %v1347, 2147483648
  %v1381 = vor.u32 1.1754944e-38, %v1380
  %v1382 = vsel %vm1379, %v1381, %v1377
  %v1383 = vmul.f32 1.0, %v1382
  %v1384 = vrcp.pop %v1348
  %v1385 = vmul.f32 %v1348, %v1384
  %v1386 = vsub.f32 1.0, %v1385
  %v1387 = vmul.f32 %v1384, %v1386
  %v1388 = vadd.f32 %v1384, %v1387
  %vm1389 = vweird.f32 %v1348
  %vm1390 = vweird.f32 %v1384
  %vm1391 = vmor %vm1389, %vm1390
  %v1392 = vsel %vm1391, %v1384, %v1388
  %v1393 = vand.u32 2147483647, %v1348
  %vm1394 = vcmp.eq.f32.partialorder %v1393, 8.507059e+37
  %v1395 = vand.u32 %v1348, 2147483648
  %v1396 = vor.u32 1.1754944e-38, %v1395
  %v1397 = vsel %vm1394, %v1396, %v1392
  %v1398 = vmul.f32 1.0, %v1397
  %v1399 = vrcp.pop %v1349
  %v1400 = vmul.f32 %v1349, %v1399
  %v1401 = vsub.f32 1.0, %v1400
  %v1402 = vmul.f32 %v1399, %v1401
  %v1403 = vadd.f32 %v1399, %v1402
  %vm1404 = vweird.f32 %v1349
  %vm1405 = vweird.f32 %v1399
  %vm1406 = vmor %vm1404, %vm1405
  %v1407 = vsel %vm1406, %v1399, %v1403
  %v1408 = vand.u32 2147483647, %v1349
  %vm1409 = vcmp.eq.f32.partialorder %v1408, 8.507059e+37
  %v1410 = vand.u32 %v1349, 2147483648
  %v1411 = vor.u32 1.1754944e-38, %v1410
  %v1412 = vsel %vm1409, %v1411, %v1407
  %v1413 = vmul.f32 1.0, %v1412
  %v1414 = vrcp.pop %v1350
  %v1415 = vmul.f32 %v1350, %v1414
  %v1416 = vsub.f32 1.0, %v1415
  %v1417 = vmul.f32 %v1414, %v1416
  %v1418 = vadd.f32 %v1414, %v1417
  %vm1419 = vweird.f32 %v1350
  %vm1420 = vweird.f32 %v1414
  %vm1421 = vmor %vm1419, %vm1420
  %v1422 = vsel %vm1421, %v1414, %v1418
  %v1423 = vand.u32 2147483647, %v1350
  %vm1424 = vcmp.eq.f32.partialorder %v1423, 8.507059e+37
  %v1425 = vand.u32 %v1350, 2147483648
  %v1426 = vor.u32 1.1754944e-38, %v1425
  %v1427 = vsel %vm1424, %v1426, %v1422
  %v1428 = vmul.f32 1.0, %v1427
  %v1429 = vrcp.pop %v1351
  %v1430 = vmul.f32 %v1351, %v1429
  %v1431 = vsub.f32 1.0, %v1430
  %v1432 = vmul.f32 %v1429, %v1431
  %v1433 = vadd.f32 %v1429, %v1432
  %vm1434 = vweird.f32 %v1351
  %vm1435 = vweird.f32 %v1429
  %vm1436 = vmor %vm1434, %vm1435
  %v1437 = vsel %vm1436, %v1429, %v1433
  %v1438 = vand.u32 2147483647, %v1351
  %vm1439 = vcmp.eq.f32.partialorder %v1438, 8.507059e+37
  %v1440 = vand.u32 %v1351, 2147483648
  %v1441 = vor.u32 1.1754944e-38, %v1440
  %v1442 = vsel %vm1439, %v1441, %v1437
  %v1443 = vmul.f32 1.0, %v1442
  %v1444 = vrcp.pop %v1352
  %v1445 = vmul.f32 %v1352, %v1444
  %v1446 = vsub.f32 1.0, %v1445
  %v1447 = vmul.f32 %v1444, %v1446
  %v1448 = vadd.f32 %v1444, %v1447
  %vm1449 = vweird.f32 %v1352
  %vm1450 = vweird.f32 %v1444
  %vm1451 = vmor %vm1449, %vm1450
  %v1452 = vsel %vm1451, %v1444, %v1448
  %v1453 = vand.u32 2147483647, %v1352
  %vm1454 = vcmp.eq.f32.partialorder %v1453, 8.507059e+37
  %v1455 = vand.u32 %v1352, 2147483648
  %v1456 = vor.u32 1.1754944e-38, %v1455
  %v1457 = vsel %vm1454, %v1456, %v1452
  %v1458 = vmul.f32 1.0, %v1457
  %v1459 = vrcp.pop %v1353
  %v1460 = vmul.f32 %v1353, %v1459
  %v1461 = vsub.f32 1.0, %v1460
  %v1462 = vmul.f32 %v1459, %v1461
  %v1463 = vadd.f32 %v1459, %v1462
  %vm1464 = vweird.f32 %v1353
  %vm1465 = vweird.f32 %v1459
  %vm1466 = vmor %vm1464, %vm1465
  %v1467 = vsel %vm1466, %v1459, %v1463
  %v1468 = vand.u32 2147483647, %v1353
  %vm1469 = vcmp.eq.f32.partialorder %v1468, 8.507059e+37
  %v1470 = vand.u32 %v1353, 2147483648
  %v1471 = vor.u32 1.1754944e-38, %v1470
  %v1472 = vsel %vm1469, %v1471, %v1467
  %v1473 = vmul.f32 1.0, %v1472
  %v1474 = vtanh.pop %v1314
  %v1475 = vtanh.pop %v1315
  %v1476 = vtanh.pop %v1316
  %v1477 = vtanh.pop %v1317
  %v1478 = vtanh.pop %v1318
  %v1479 = vtanh.pop %v1319
  %v1480 = vtanh.pop %v1320
  %v1481 = vtanh.pop %v1321
  %v1490 = vrot.slane %v1196, 7
  %v1491 = vrot.slane %v1197, 7
  %v1492 = vrot.slane %v1198, 7
  %v1493 = vrot.slane %v1199, 7
  %v1494 = vrot.slane %v1200, 7
  %v1495 = vrot.slane %v1201, 7
  %v1496 = vrot.slane %v1202, 7
  %v1497 = vrot.slane %v1203, 7
  %v1506 = vmul.f32 %v1368, %v1490
  %v1507 = vmul.f32 %v1383, %v1491
  %v1508 = vmul.f32 %v1398, %v1492
  %v1509 = vmul.f32 %v1413, %v1493
  %v1510 = vmul.f32 %v1428, %v1494
  %v1511 = vmul.f32 %v1443, %v1495
  %v1512 = vmul.f32 %v1458, %v1496
  %v1513 = vmul.f32 %v1473, %v1497
  %1522 = vrot.lane.b32.xlu0 %v1474, 64
  %v1523 = vpop.permute.xlu0 %1522
  %1524 = vrot.lane.b32.xlu0 %v1475, 64
  %v1525 = vpop.permute.xlu0 %1524
  %1526 = vrot.lane.b32.xlu0 %v1476, 64
  %v1527 = vpop.permute.xlu0 %1526
  %1528 = vrot.lane.b32.xlu0 %v1477, 64
  %v1529 = vpop.permute.xlu0 %1528
  %1530 = vrot.lane.b32.xlu0 %v1478, 64
  %v1531 = vpop.permute.xlu0 %1530
  %1532 = vrot.lane.b32.xlu0 %v1479, 64
  %v1533 = vpop.permute.xlu0 %1532
  %1534 = vrot.lane.b32.xlu0 %v1480, 64
  %v1535 = vpop.permute.xlu0 %1534
  %1536 = vrot.lane.b32.xlu0 %v1481, 64
  %v1537 = vpop.permute.xlu0 %1536
  %v1546 = vmul.f32 %v1368, %v1523
  %v1547 = vmul.f32 %v1383, %v1525
  %v1548 = vmul.f32 %v1398, %v1527
  %v1549 = vmul.f32 %v1413, %v1529
  %v1550 = vmul.f32 %v1428, %v1531
  %v1551 = vmul.f32 %v1443, %v1533
  %v1552 = vmul.f32 %v1458, %v1535
  %v1553 = vmul.f32 %v1473, %v1537
  %1562 = vrot.lane.b32.xlu0 %v1546, 32
  %v1563 = vpop.permute.xlu0 %1562
  %1564 = vrot.lane.b32.xlu0 %v1547, 32
  %v1565 = vpop.permute.xlu0 %1564
  %1566 = vrot.lane.b32.xlu0 %v1548, 32
  %v1567 = vpop.permute.xlu0 %1566
  %1568 = vrot.lane.b32.xlu0 %v1549, 32
  %v1569 = vpop.permute.xlu0 %1568
  %1570 = vrot.lane.b32.xlu0 %v1550, 32
  %v1571 = vpop.permute.xlu0 %1570
  %1572 = vrot.lane.b32.xlu0 %v1551, 32
  %v1573 = vpop.permute.xlu0 %1572
  %1574 = vrot.lane.b32.xlu0 %v1552, 32
  %v1575 = vpop.permute.xlu0 %1574
  %1576 = vrot.lane.b32.xlu0 %v1553, 32
  %v1577 = vpop.permute.xlu0 %1576
  %v1586 = vadd.f32 %v1506, %v1563
  %v1587 = vadd.f32 %v1507, %v1565
  %v1588 = vadd.f32 %v1508, %v1567
  %v1589 = vadd.f32 %v1509, %v1569
  %v1590 = vadd.f32 %v1510, %v1571
  %v1591 = vadd.f32 %v1511, %v1573
  %v1592 = vadd.f32 %v1512, %v1575
  %v1593 = vadd.f32 %v1513, %v1577
  %v1594 = vtanh.pop %v1586
  %v1595 = vtanh.pop %v1587
  %v1596 = vtanh.pop %v1588
  %v1597 = vtanh.pop %v1589
  %v1598 = vtanh.pop %v1590
  %v1599 = vtanh.pop %v1591
  %v1600 = vtanh.pop %v1592
  %v1601 = vtanh.pop %v1593
  %1610 = vrot.lane.b32.xlu0 %v1594, 64
  %v1611 = vpop.permute.xlu0 %1610
  %1612 = vrot.lane.b32.xlu0 %v1595, 64
  %v1613 = vpop.permute.xlu0 %1612
  %1614 = vrot.lane.b32.xlu0 %v1596, 64
  %v1615 = vpop.permute.xlu0 %1614
  %1616 = vrot.lane.b32.xlu0 %v1597, 64
  %v1617 = vpop.permute.xlu0 %1616
  %1618 = vrot.lane.b32.xlu0 %v1598, 64
  %v1619 = vpop.permute.xlu0 %1618
  %1620 = vrot.lane.b32.xlu0 %v1599, 64
  %v1621 = vpop.permute.xlu0 %1620
  %1622 = vrot.lane.b32.xlu0 %v1600, 64
  %v1623 = vpop.permute.xlu0 %1622
  %1624 = vrot.lane.b32.xlu0 %v1601, 64
  %v1625 = vpop.permute.xlu0 %1624
  %v1634 = vmul.f32 %v1368, %v1611
  %v1635 = vmul.f32 %v1383, %v1613
  %v1636 = vmul.f32 %v1398, %v1615
  %v1637 = vmul.f32 %v1413, %v1617
  %v1638 = vmul.f32 %v1428, %v1619
  %v1639 = vmul.f32 %v1443, %v1621
  %v1640 = vmul.f32 %v1458, %v1623
  %v1641 = vmul.f32 %v1473, %v1625
  %v1650 = vrot.slane %v1634, 3
  %v1651 = vrot.slane %v1635, 2
  %v1652 = vsel %vm474, %v1651, %v1650
  %v1653 = vrot.slane %v1636, 1
  %v1654 = vsel %vm477, %v1653, %v1652
  %v1655 = vsel %vm480, %v1637, %v1654
  %v1656 = vrot.slane %v1638, 7
  %v1657 = vsel %vm483, %v1656, %v1655
  %v1658 = vrot.slane %v1639, 6
  %v1659 = vsel %vm486, %v1658, %v1657
  %v1660 = vrot.slane %v1640, 5
  %v1661 = vsel %vm489, %v1660, %v1659
  %v1662 = vrot.slane %v1641, 4
  %v1663 = vsel %vm492, %v1662, %v1661
  %1664 = vrot.lane.b32.xlu0 %v1663, 32
  %v1665 = vpop.permute.xlu0 %1664
  %v1666 = vsel %vm52, %v1665, 0
  %1668 = vmatpush.msra.mxu0 0.0
  %1669 = vmatpush.msra.mxu0 0.0
  %1670 = vmatpush.msra.mxu0 0.0
  %1671 = vmatpush.msra.mxu0 0.0
  %1672 = vmatpush.msra.mxu0 0.0
  %1673 = vmatpush.msra.mxu0 0.0
  %1674 = vmatpush.msra.mxu0 0.0
  %1675 = vmatpush.msra.mxu0 0.0
  %1676 = vmatpush.msra.mxu0 0.0
  %1677 = vmatpush.msra.mxu0 0.0
  %1678 = vmatpush.msra.mxu0 0.0
  %1679 = vmatpush.msra.mxu0 0.0
  %1680 = vmatpush.msra.mxu0 %v121
  %1681 = vmatpush.msra.mxu0 %v120
  %1682 = vmatpush.msra.mxu0 %v119
  %1683 = vmatpush.msra.mxu0 %v118
  %1684 = vmatmul.f32.gmra.mxu0 %v1666
  %v1685 = vpop.f32.mrf.mxu0
  %v1686 = vadd.f32 0.0, %v1685
  %1687 = vdwg.mxu0
  %v1689 = vrot.slane %v1686, 4
  %v1690 = vrot.slane %v1686, 5
  %v1691 = vrot.slane %v1686, 6
  %v1692 = vrot.slane %v1686, 7
  %v1693 = vrot.slane %v1686, 1
  %v1694 = vrot.slane %v1686, 2
  %v1695 = vrot.slane %v1686, 3
  %v1704 = vadd.f32 %v95, %v1689
  %v1705 = vadd.f32 %v98, %v1690
  %v1706 = vadd.f32 %v101, %v1691
  %v1707 = vadd.f32 %v104, %v1692
  %v1708 = vadd.f32 %v107, %v1686
  %v1709 = vadd.f32 %v110, %v1693
  %v1710 = vadd.f32 %v113, %v1694
  %v1711 = vadd.f32 %v116, %v1695
  %v1712 = vxor.u32 %v1704, 2147483648
  %v1713 = vxor.u32 %v1705, 2147483648
  %v1714 = vxor.u32 %v1706, 2147483648
  %v1715 = vxor.u32 %v1707, 2147483648
  %v1716 = vxor.u32 %v1708, 2147483648
  %v1717 = vxor.u32 %v1709, 2147483648
  %v1718 = vxor.u32 %v1710, 2147483648
  %v1719 = vxor.u32 %v1711, 2147483648
  %v1720 = vmul.f32 %v1712, 1.442695
  %v1721 = vpow.pop %v1720
  %v1722 = vmul.f32 %v1713, 1.442695
  %v1723 = vpow.pop %v1722
  %v1724 = vmul.f32 %v1714, 1.442695
  %v1725 = vpow.pop %v1724
  %v1726 = vmul.f32 %v1715, 1.442695
  %v1727 = vpow.pop %v1726
  %v1728 = vmul.f32 %v1716, 1.442695
  %v1729 = vpow.pop %v1728
  %v1730 = vmul.f32 %v1717, 1.442695
  %v1731 = vpow.pop %v1730
  %v1732 = vmul.f32 %v1718, 1.442695
  %v1733 = vpow.pop %v1732
  %v1734 = vmul.f32 %v1719, 1.442695
  %v1735 = vpow.pop %v1734
  %v1736 = vadd.f32 %v1721, 1.0
  %v1737 = vadd.f32 %v1723, 1.0
  %v1738 = vadd.f32 %v1725, 1.0
  %v1739 = vadd.f32 %v1727, 1.0
  %v1740 = vadd.f32 %v1729, 1.0
  %v1741 = vadd.f32 %v1731, 1.0
  %v1742 = vadd.f32 %v1733, 1.0
  %v1743 = vadd.f32 %v1735, 1.0
  %v1744 = vrcp.pop %v1736
  %v1745 = vmul.f32 %v1736, %v1744
  %v1746 = vsub.f32 1.0, %v1745
  %v1747 = vmul.f32 %v1744, %v1746
  %v1748 = vadd.f32 %v1744, %v1747
  %vm1749 = vweird.f32 %v1736
  %vm1750 = vweird.f32 %v1744
  %vm1751 = vmor %vm1749, %vm1750
  %v1752 = vsel %vm1751, %v1744, %v1748
  %v1753 = vand.u32 2147483647, %v1736
  %vm1754 = vcmp.eq.f32.partialorder %v1753, 8.507059e+37
  %v1755 = vand.u32 %v1736, 2147483648
  %v1756 = vor.u32 1.1754944e-38, %v1755
  %v1757 = vsel %vm1754, %v1756, %v1752
  %v1758 = vmul.f32 1.0, %v1757
  %v1759 = vrcp.pop %v1737
  %v1760 = vmul.f32 %v1737, %v1759
  %v1761 = vsub.f32 1.0, %v1760
  %v1762 = vmul.f32 %v1759, %v1761
  %v1763 = vadd.f32 %v1759, %v1762
  %vm1764 = vweird.f32 %v1737
  %vm1765 = vweird.f32 %v1759
  %vm1766 = vmor %vm1764, %vm1765
  %v1767 = vsel %vm1766, %v1759, %v1763
  %v1768 = vand.u32 2147483647, %v1737
  %vm1769 = vcmp.eq.f32.partialorder %v1768, 8.507059e+37
  %v1770 = vand.u32 %v1737, 2147483648
  %v1771 = vor.u32 1.1754944e-38, %v1770
  %v1772 = vsel %vm1769, %v1771, %v1767
  %v1773 = vmul.f32 1.0, %v1772
  %v1774 = vrcp.pop %v1738
  %v1775 = vmul.f32 %v1738, %v1774
  %v1776 = vsub.f32 1.0, %v1775
  %v1777 = vmul.f32 %v1774, %v1776
  %v1778 = vadd.f32 %v1774, %v1777
  %vm1779 = vweird.f32 %v1738
  %vm1780 = vweird.f32 %v1774
  %vm1781 = vmor %vm1779, %vm1780
  %v1782 = vsel %vm1781, %v1774, %v1778
  %v1783 = vand.u32 2147483647, %v1738
  %vm1784 = vcmp.eq.f32.partialorder %v1783, 8.507059e+37
  %v1785 = vand.u32 %v1738, 2147483648
  %v1786 = vor.u32 1.1754944e-38, %v1785
  %v1787 = vsel %vm1784, %v1786, %v1782
  %v1788 = vmul.f32 1.0, %v1787
  %v1789 = vrcp.pop %v1739
  %v1790 = vmul.f32 %v1739, %v1789
  %v1791 = vsub.f32 1.0, %v1790
  %v1792 = vmul.f32 %v1789, %v1791
  %v1793 = vadd.f32 %v1789, %v1792
  %vm1794 = vweird.f32 %v1739
  %vm1795 = vweird.f32 %v1789
  %vm1796 = vmor %vm1794, %vm1795
  %v1797 = vsel %vm1796, %v1789, %v1793
  %v1798 = vand.u32 2147483647, %v1739
  %vm1799 = vcmp.eq.f32.partialorder %v1798, 8.507059e+37
  %v1800 = vand.u32 %v1739, 2147483648
  %v1801 = vor.u32 1.1754944e-38, %v1800
  %v1802 = vsel %vm1799, %v1801, %v1797
  %v1803 = vmul.f32 1.0, %v1802
  %v1804 = vrcp.pop %v1740
  %v1805 = vmul.f32 %v1740, %v1804
  %v1806 = vsub.f32 1.0, %v1805
  %v1807 = vmul.f32 %v1804, %v1806
  %v1808 = vadd.f32 %v1804, %v1807
  %vm1809 = vweird.f32 %v1740
  %vm1810 = vweird.f32 %v1804
  %vm1811 = vmor %vm1809, %vm1810
  %v1812 = vsel %vm1811, %v1804, %v1808
  %v1813 = vand.u32 2147483647, %v1740
  %vm1814 = vcmp.eq.f32.partialorder %v1813, 8.507059e+37
  %v1815 = vand.u32 %v1740, 2147483648
  %v1816 = vor.u32 1.1754944e-38, %v1815
  %v1817 = vsel %vm1814, %v1816, %v1812
  %v1818 = vmul.f32 1.0, %v1817
  %v1819 = vrcp.pop %v1741
  %v1820 = vmul.f32 %v1741, %v1819
  %v1821 = vsub.f32 1.0, %v1820
  %v1822 = vmul.f32 %v1819, %v1821
  %v1823 = vadd.f32 %v1819, %v1822
  %vm1824 = vweird.f32 %v1741
  %vm1825 = vweird.f32 %v1819
  %vm1826 = vmor %vm1824, %vm1825
  %v1827 = vsel %vm1826, %v1819, %v1823
  %v1828 = vand.u32 2147483647, %v1741
  %vm1829 = vcmp.eq.f32.partialorder %v1828, 8.507059e+37
  %v1830 = vand.u32 %v1741, 2147483648
  %v1831 = vor.u32 1.1754944e-38, %v1830
  %v1832 = vsel %vm1829, %v1831, %v1827
  %v1833 = vmul.f32 1.0, %v1832
  %v1834 = vrcp.pop %v1742
  %v1835 = vmul.f32 %v1742, %v1834
  %v1836 = vsub.f32 1.0, %v1835
  %v1837 = vmul.f32 %v1834, %v1836
  %v1838 = vadd.f32 %v1834, %v1837
  %vm1839 = vweird.f32 %v1742
  %vm1840 = vweird.f32 %v1834
  %vm1841 = vmor %vm1839, %vm1840
  %v1842 = vsel %vm1841, %v1834, %v1838
  %v1843 = vand.u32 2147483647, %v1742
  %vm1844 = vcmp.eq.f32.partialorder %v1843, 8.507059e+37
  %v1845 = vand.u32 %v1742, 2147483648
  %v1846 = vor.u32 1.1754944e-38, %v1845
  %v1847 = vsel %vm1844, %v1846, %v1842
  %v1848 = vmul.f32 1.0, %v1847
  %v1849 = vrcp.pop %v1743
  %v1850 = vmul.f32 %v1743, %v1849
  %v1851 = vsub.f32 1.0, %v1850
  %v1852 = vmul.f32 %v1849, %v1851
  %v1853 = vadd.f32 %v1849, %v1852
  %vm1854 = vweird.f32 %v1743
  %vm1855 = vweird.f32 %v1849
  %vm1856 = vmor %vm1854, %vm1855
  %v1857 = vsel %vm1856, %v1849, %v1853
  %v1858 = vand.u32 2147483647, %v1743
  %vm1859 = vcmp.eq.f32.partialorder %v1858, 8.507059e+37
  %v1860 = vand.u32 %v1743, 2147483648
  %v1861 = vor.u32 1.1754944e-38, %v1860
  %v1862 = vsel %vm1859, %v1861, %v1857
  %v1863 = vmul.f32 1.0, %v1862
  %v1864 = vtanh.pop %v1704
  %v1865 = vtanh.pop %v1705
  %v1866 = vtanh.pop %v1706
  %v1867 = vtanh.pop %v1707
  %v1868 = vtanh.pop %v1708
  %v1869 = vtanh.pop %v1709
  %v1870 = vtanh.pop %v1710
  %v1871 = vtanh.pop %v1711
  %v1880 = vrot.slane %v1586, 7
  %v1881 = vrot.slane %v1587, 7
  %v1882 = vrot.slane %v1588, 7
  %v1883 = vrot.slane %v1589, 7
  %v1884 = vrot.slane %v1590, 7
  %v1885 = vrot.slane %v1591, 7
  %v1886 = vrot.slane %v1592, 7
  %v1887 = vrot.slane %v1593, 7
  %v1896 = vmul.f32 %v1758, %v1880
  %v1897 = vmul.f32 %v1773, %v1881
  %v1898 = vmul.f32 %v1788, %v1882
  %v1899 = vmul.f32 %v1803, %v1883
  %v1900 = vmul.f32 %v1818, %v1884
  %v1901 = vmul.f32 %v1833, %v1885
  %v1902 = vmul.f32 %v1848, %v1886
  %v1903 = vmul.f32 %v1863, %v1887
  %1912 = vrot.lane.b32.xlu0 %v1864, 64
  %v1913 = vpop.permute.xlu0 %1912
  %1914 = vrot.lane.b32.xlu0 %v1865, 64
  %v1915 = vpop.permute.xlu0 %1914
  %1916 = vrot.lane.b32.xlu0 %v1866, 64
  %v1917 = vpop.permute.xlu0 %1916
  %1918 = vrot.lane.b32.xlu0 %v1867, 64
  %v1919 = vpop.permute.xlu0 %1918
  %1920 = vrot.lane.b32.xlu0 %v1868, 64
  %v1921 = vpop.permute.xlu0 %1920
  %1922 = vrot.lane.b32.xlu0 %v1869, 64
  %v1923 = vpop.permute.xlu0 %1922
  %1924 = vrot.lane.b32.xlu0 %v1870, 64
  %v1925 = vpop.permute.xlu0 %1924
  %1926 = vrot.lane.b32.xlu0 %v1871, 64
  %v1927 = vpop.permute.xlu0 %1926
  %v1936 = vmul.f32 %v1758, %v1913
  %v1937 = vmul.f32 %v1773, %v1915
  %v1938 = vmul.f32 %v1788, %v1917
  %v1939 = vmul.f32 %v1803, %v1919
  %v1940 = vmul.f32 %v1818, %v1921
  %v1941 = vmul.f32 %v1833, %v1923
  %v1942 = vmul.f32 %v1848, %v1925
  %v1943 = vmul.f32 %v1863, %v1927
  %1952 = vrot.lane.b32.xlu0 %v1936, 32
  %v1953 = vpop.permute.xlu0 %1952
  %1954 = vrot.lane.b32.xlu0 %v1937, 32
  %v1955 = vpop.permute.xlu0 %1954
  %1956 = vrot.lane.b32.xlu0 %v1938, 32
  %v1957 = vpop.permute.xlu0 %1956
  %1958 = vrot.lane.b32.xlu0 %v1939, 32
  %v1959 = vpop.permute.xlu0 %1958
  %1960 = vrot.lane.b32.xlu0 %v1940, 32
  %v1961 = vpop.permute.xlu0 %1960
  %1962 = vrot.lane.b32.xlu0 %v1941, 32
  %v1963 = vpop.permute.xlu0 %1962
  %1964 = vrot.lane.b32.xlu0 %v1942, 32
  %v1965 = vpop.permute.xlu0 %1964
  %1966 = vrot.lane.b32.xlu0 %v1943, 32
  %v1967 = vpop.permute.xlu0 %1966
  %v1976 = vadd.f32 %v1896, %v1953
  %v1977 = vadd.f32 %v1897, %v1955
  %v1978 = vadd.f32 %v1898, %v1957
  %v1979 = vadd.f32 %v1899, %v1959
  %v1980 = vadd.f32 %v1900, %v1961
  %v1981 = vadd.f32 %v1901, %v1963
  %v1982 = vadd.f32 %v1902, %v1965
  %v1983 = vadd.f32 %v1903, %v1967
  %v1984 = vtanh.pop %v1976
  %v1985 = vtanh.pop %v1977
  %v1986 = vtanh.pop %v1978
  %v1987 = vtanh.pop %v1979
  %v1988 = vtanh.pop %v1980
  %v1989 = vtanh.pop %v1981
  %v1990 = vtanh.pop %v1982
  %v1991 = vtanh.pop %v1983
  %2000 = vrot.lane.b32.xlu0 %v1984, 64
  %v2001 = vpop.permute.xlu0 %2000
  %2002 = vrot.lane.b32.xlu0 %v1985, 64
  %v2003 = vpop.permute.xlu0 %2002
  %2004 = vrot.lane.b32.xlu0 %v1986, 64
  %v2005 = vpop.permute.xlu0 %2004
  %2006 = vrot.lane.b32.xlu0 %v1987, 64
  %v2007 = vpop.permute.xlu0 %2006
  %2008 = vrot.lane.b32.xlu0 %v1988, 64
  %v2009 = vpop.permute.xlu0 %2008
  %2010 = vrot.lane.b32.xlu0 %v1989, 64
  %v2011 = vpop.permute.xlu0 %2010
  %2012 = vrot.lane.b32.xlu0 %v1990, 64
  %v2013 = vpop.permute.xlu0 %2012
  %2014 = vrot.lane.b32.xlu0 %v1991, 64
  %v2015 = vpop.permute.xlu0 %2014
  %v2024 = vmul.f32 %v1758, %v2001
  %v2025 = vmul.f32 %v1773, %v2003
  %v2026 = vmul.f32 %v1788, %v2005
  %v2027 = vmul.f32 %v1803, %v2007
  %v2028 = vmul.f32 %v1818, %v2009
  %v2029 = vmul.f32 %v1833, %v2011
  %v2030 = vmul.f32 %v1848, %v2013
  %v2031 = vmul.f32 %v1863, %v2015
  %v2040 = vrot.slane %v2024, 4
  %v2041 = vrot.slane %v2025, 3
  %v2042 = vsel %vm474, %v2041, %v2040
  %v2043 = vrot.slane %v2026, 2
  %v2044 = vsel %vm477, %v2043, %v2042
  %v2045 = vrot.slane %v2027, 1
  %v2046 = vsel %vm480, %v2045, %v2044
  %v2047 = vsel %vm483, %v2028, %v2046
  %v2048 = vrot.slane %v2029, 7
  %v2049 = vsel %vm486, %v2048, %v2047
  %v2050 = vrot.slane %v2030, 6
  %v2051 = vsel %vm489, %v2050, %v2049
  %v2052 = vrot.slane %v2031, 5
  %v2053 = vsel %vm492, %v2052, %v2051
  %2054 = vrot.lane.b32.xlu0 %v2053, 32
  %v2055 = vpop.permute.xlu0 %2054
  %v2056 = vsel %vm52, %v2055, 0
  %2058 = vmatpush.msra.mxu0 0.0
  %2059 = vmatpush.msra.mxu0 0.0
  %2060 = vmatpush.msra.mxu0 0.0
  %2061 = vmatpush.msra.mxu0 0.0
  %2062 = vmatpush.msra.mxu0 0.0
  %2063 = vmatpush.msra.mxu0 0.0
  %2064 = vmatpush.msra.mxu0 0.0
  %2065 = vmatpush.msra.mxu0 0.0
  %2066 = vmatpush.msra.mxu0 0.0
  %2067 = vmatpush.msra.mxu0 0.0
  %2068 = vmatpush.msra.mxu0 0.0
  %2069 = vmatpush.msra.mxu0 0.0
  %2070 = vmatpush.msra.mxu0 %v121
  %2071 = vmatpush.msra.mxu0 %v120
  %2072 = vmatpush.msra.mxu0 %v119
  %2073 = vmatpush.msra.mxu0 %v118
  %2074 = vmatmul.f32.gmra.mxu0 %v2056
  %v2075 = vpop.f32.mrf.mxu0
  %v2076 = vadd.f32 0.0, %v2075
  %2077 = vdwg.mxu0
  %v2079 = vrot.slane %v2076, 3
  %v2080 = vrot.slane %v2076, 4
  %v2081 = vrot.slane %v2076, 5
  %v2082 = vrot.slane %v2076, 6
  %v2083 = vrot.slane %v2076, 7
  %v2084 = vrot.slane %v2076, 1
  %v2085 = vrot.slane %v2076, 2
  %v2094 = vadd.f32 %v95, %v2079
  %v2095 = vadd.f32 %v98, %v2080
  %v2096 = vadd.f32 %v101, %v2081
  %v2097 = vadd.f32 %v104, %v2082
  %v2098 = vadd.f32 %v107, %v2083
  %v2099 = vadd.f32 %v110, %v2076
  %v2100 = vadd.f32 %v113, %v2084
  %v2101 = vadd.f32 %v116, %v2085
  %v2102 = vxor.u32 %v2094, 2147483648
  %v2103 = vxor.u32 %v2095, 2147483648
  %v2104 = vxor.u32 %v2096, 2147483648
  %v2105 = vxor.u32 %v2097, 2147483648
  %v2106 = vxor.u32 %v2098, 2147483648
  %v2107 = vxor.u32 %v2099, 2147483648
  %v2108 = vxor.u32 %v2100, 2147483648
  %v2109 = vxor.u32 %v2101, 2147483648
  %v2110 = vmul.f32 %v2102, 1.442695
  %v2111 = vpow.pop %v2110
  %v2112 = vmul.f32 %v2103, 1.442695
  %v2113 = vpow.pop %v2112
  %v2114 = vmul.f32 %v2104, 1.442695
  %v2115 = vpow.pop %v2114
  %v2116 = vmul.f32 %v2105, 1.442695
  %v2117 = vpow.pop %v2116
  %v2118 = vmul.f32 %v2106, 1.442695
  %v2119 = vpow.pop %v2118
  %v2120 = vmul.f32 %v2107, 1.442695
  %v2121 = vpow.pop %v2120
  %v2122 = vmul.f32 %v2108, 1.442695
  %v2123 = vpow.pop %v2122
  %v2124 = vmul.f32 %v2109, 1.442695
  %v2125 = vpow.pop %v2124
  %v2126 = vadd.f32 %v2111, 1.0
  %v2127 = vadd.f32 %v2113, 1.0
  %v2128 = vadd.f32 %v2115, 1.0
  %v2129 = vadd.f32 %v2117, 1.0
  %v2130 = vadd.f32 %v2119, 1.0
  %v2131 = vadd.f32 %v2121, 1.0
  %v2132 = vadd.f32 %v2123, 1.0
  %v2133 = vadd.f32 %v2125, 1.0
  %v2134 = vrcp.pop %v2126
  %v2135 = vmul.f32 %v2126, %v2134
  %v2136 = vsub.f32 1.0, %v2135
  %v2137 = vmul.f32 %v2134, %v2136
  %v2138 = vadd.f32 %v2134, %v2137
  %vm2139 = vweird.f32 %v2126
  %vm2140 = vweird.f32 %v2134
  %vm2141 = vmor %vm2139, %vm2140
  %v2142 = vsel %vm2141, %v2134, %v2138
  %v2143 = vand.u32 2147483647, %v2126
  %vm2144 = vcmp.eq.f32.partialorder %v2143, 8.507059e+37
  %v2145 = vand.u32 %v2126, 2147483648
  %v2146 = vor.u32 1.1754944e-38, %v2145
  %v2147 = vsel %vm2144, %v2146, %v2142
  %v2148 = vmul.f32 1.0, %v2147
  %v2149 = vrcp.pop %v2127
  %v2150 = vmul.f32 %v2127, %v2149
  %v2151 = vsub.f32 1.0, %v2150
  %v2152 = vmul.f32 %v2149, %v2151
  %v2153 = vadd.f32 %v2149, %v2152
  %vm2154 = vweird.f32 %v2127
  %vm2155 = vweird.f32 %v2149
  %vm2156 = vmor %vm2154, %vm2155
  %v2157 = vsel %vm2156, %v2149, %v2153
  %v2158 = vand.u32 2147483647, %v2127
  %vm2159 = vcmp.eq.f32.partialorder %v2158, 8.507059e+37
  %v2160 = vand.u32 %v2127, 2147483648
  %v2161 = vor.u32 1.1754944e-38, %v2160
  %v2162 = vsel %vm2159, %v2161, %v2157
  %v2163 = vmul.f32 1.0, %v2162
  %v2164 = vrcp.pop %v2128
  %v2165 = vmul.f32 %v2128, %v2164
  %v2166 = vsub.f32 1.0, %v2165
  %v2167 = vmul.f32 %v2164, %v2166
  %v2168 = vadd.f32 %v2164, %v2167
  %vm2169 = vweird.f32 %v2128
  %vm2170 = vweird.f32 %v2164
  %vm2171 = vmor %vm2169, %vm2170
  %v2172 = vsel %vm2171, %v2164, %v2168
  %v2173 = vand.u32 2147483647, %v2128
  %vm2174 = vcmp.eq.f32.partialorder %v2173, 8.507059e+37
  %v2175 = vand.u32 %v2128, 2147483648
  %v2176 = vor.u32 1.1754944e-38, %v2175
  %v2177 = vsel %vm2174, %v2176, %v2172
  %v2178 = vmul.f32 1.0, %v2177
  %v2179 = vrcp.pop %v2129
  %v2180 = vmul.f32 %v2129, %v2179
  %v2181 = vsub.f32 1.0, %v2180
  %v2182 = vmul.f32 %v2179, %v2181
  %v2183 = vadd.f32 %v2179, %v2182
  %vm2184 = vweird.f32 %v2129
  %vm2185 = vweird.f32 %v2179
  %vm2186 = vmor %vm2184, %vm2185
  %v2187 = vsel %vm2186, %v2179, %v2183
  %v2188 = vand.u32 2147483647, %v2129
  %vm2189 = vcmp.eq.f32.partialorder %v2188, 8.507059e+37
  %v2190 = vand.u32 %v2129, 2147483648
  %v2191 = vor.u32 1.1754944e-38, %v2190
  %v2192 = vsel %vm2189, %v2191, %v2187
  %v2193 = vmul.f32 1.0, %v2192
  %v2194 = vrcp.pop %v2130
  %v2195 = vmul.f32 %v2130, %v2194
  %v2196 = vsub.f32 1.0, %v2195
  %v2197 = vmul.f32 %v2194, %v2196
  %v2198 = vadd.f32 %v2194, %v2197
  %vm2199 = vweird.f32 %v2130
  %vm2200 = vweird.f32 %v2194
  %vm2201 = vmor %vm2199, %vm2200
  %v2202 = vsel %vm2201, %v2194, %v2198
  %v2203 = vand.u32 2147483647, %v2130
  %vm2204 = vcmp.eq.f32.partialorder %v2203, 8.507059e+37
  %v2205 = vand.u32 %v2130, 2147483648
  %v2206 = vor.u32 1.1754944e-38, %v2205
  %v2207 = vsel %vm2204, %v2206, %v2202
  %v2208 = vmul.f32 1.0, %v2207
  %v2209 = vrcp.pop %v2131
  %v2210 = vmul.f32 %v2131, %v2209
  %v2211 = vsub.f32 1.0, %v2210
  %v2212 = vmul.f32 %v2209, %v2211
  %v2213 = vadd.f32 %v2209, %v2212
  %vm2214 = vweird.f32 %v2131
  %vm2215 = vweird.f32 %v2209
  %vm2216 = vmor %vm2214, %vm2215
  %v2217 = vsel %vm2216, %v2209, %v2213
  %v2218 = vand.u32 2147483647, %v2131
  %vm2219 = vcmp.eq.f32.partialorder %v2218, 8.507059e+37
  %v2220 = vand.u32 %v2131, 2147483648
  %v2221 = vor.u32 1.1754944e-38, %v2220
  %v2222 = vsel %vm2219, %v2221, %v2217
  %v2223 = vmul.f32 1.0, %v2222
  %v2224 = vrcp.pop %v2132
  %v2225 = vmul.f32 %v2132, %v2224
  %v2226 = vsub.f32 1.0, %v2225
  %v2227 = vmul.f32 %v2224, %v2226
  %v2228 = vadd.f32 %v2224, %v2227
  %vm2229 = vweird.f32 %v2132
  %vm2230 = vweird.f32 %v2224
  %vm2231 = vmor %vm2229, %vm2230
  %v2232 = vsel %vm2231, %v2224, %v2228
  %v2233 = vand.u32 2147483647, %v2132
  %vm2234 = vcmp.eq.f32.partialorder %v2233, 8.507059e+37
  %v2235 = vand.u32 %v2132, 2147483648
  %v2236 = vor.u32 1.1754944e-38, %v2235
  %v2237 = vsel %vm2234, %v2236, %v2232
  %v2238 = vmul.f32 1.0, %v2237
  %v2239 = vrcp.pop %v2133
  %v2240 = vmul.f32 %v2133, %v2239
  %v2241 = vsub.f32 1.0, %v2240
  %v2242 = vmul.f32 %v2239, %v2241
  %v2243 = vadd.f32 %v2239, %v2242
  %vm2244 = vweird.f32 %v2133
  %vm2245 = vweird.f32 %v2239
  %vm2246 = vmor %vm2244, %vm2245
  %v2247 = vsel %vm2246, %v2239, %v2243
  %v2248 = vand.u32 2147483647, %v2133
  %vm2249 = vcmp.eq.f32.partialorder %v2248, 8.507059e+37
  %v2250 = vand.u32 %v2133, 2147483648
  %v2251 = vor.u32 1.1754944e-38, %v2250
  %v2252 = vsel %vm2249, %v2251, %v2247
  %v2253 = vmul.f32 1.0, %v2252
  %v2254 = vtanh.pop %v2094
  %v2255 = vtanh.pop %v2095
  %v2256 = vtanh.pop %v2096
  %v2257 = vtanh.pop %v2097
  %v2258 = vtanh.pop %v2098
  %v2259 = vtanh.pop %v2099
  %v2260 = vtanh.pop %v2100
  %v2261 = vtanh.pop %v2101
  %v2270 = vrot.slane %v1976, 7
  %v2271 = vrot.slane %v1977, 7
  %v2272 = vrot.slane %v1978, 7
  %v2273 = vrot.slane %v1979, 7
  %v2274 = vrot.slane %v1980, 7
  %v2275 = vrot.slane %v1981, 7
  %v2276 = vrot.slane %v1982, 7
  %v2277 = vrot.slane %v1983, 7
  %v2286 = vmul.f32 %v2148, %v2270
  %v2287 = vmul.f32 %v2163, %v2271
  %v2288 = vmul.f32 %v2178, %v2272
  %v2289 = vmul.f32 %v2193, %v2273
  %v2290 = vmul.f32 %v2208, %v2274
  %v2291 = vmul.f32 %v2223, %v2275
  %v2292 = vmul.f32 %v2238, %v2276
  %v2293 = vmul.f32 %v2253, %v2277
  %2302 = vrot.lane.b32.xlu0 %v2254, 64
  %v2303 = vpop.permute.xlu0 %2302
  %2304 = vrot.lane.b32.xlu0 %v2255, 64
  %v2305 = vpop.permute.xlu0 %2304
  %2306 = vrot.lane.b32.xlu0 %v2256, 64
  %v2307 = vpop.permute.xlu0 %2306
  %2308 = vrot.lane.b32.xlu0 %v2257, 64
  %v2309 = vpop.permute.xlu0 %2308
  %2310 = vrot.lane.b32.xlu0 %v2258, 64
  %v2311 = vpop.permute.xlu0 %2310
  %2312 = vrot.lane.b32.xlu0 %v2259, 64
  %v2313 = vpop.permute.xlu0 %2312
  %2314 = vrot.lane.b32.xlu0 %v2260, 64
  %v2315 = vpop.permute.xlu0 %2314
  %2316 = vrot.lane.b32.xlu0 %v2261, 64
  %v2317 = vpop.permute.xlu0 %2316
  %v2326 = vmul.f32 %v2148, %v2303
  %v2327 = vmul.f32 %v2163, %v2305
  %v2328 = vmul.f32 %v2178, %v2307
  %v2329 = vmul.f32 %v2193, %v2309
  %v2330 = vmul.f32 %v2208, %v2311
  %v2331 = vmul.f32 %v2223, %v2313
  %v2332 = vmul.f32 %v2238, %v2315
  %v2333 = vmul.f32 %v2253, %v2317
  %2342 = vrot.lane.b32.xlu0 %v2326, 32
  %v2343 = vpop.permute.xlu0 %2342
  %2344 = vrot.lane.b32.xlu0 %v2327, 32
  %v2345 = vpop.permute.xlu0 %2344
  %2346 = vrot.lane.b32.xlu0 %v2328, 32
  %v2347 = vpop.permute.xlu0 %2346
  %2348 = vrot.lane.b32.xlu0 %v2329, 32
  %v2349 = vpop.permute.xlu0 %2348
  %2350 = vrot.lane.b32.xlu0 %v2330, 32
  %v2351 = vpop.permute.xlu0 %2350
  %2352 = vrot.lane.b32.xlu0 %v2331, 32
  %v2353 = vpop.permute.xlu0 %2352
  %2354 = vrot.lane.b32.xlu0 %v2332, 32
  %v2355 = vpop.permute.xlu0 %2354
  %2356 = vrot.lane.b32.xlu0 %v2333, 32
  %v2357 = vpop.permute.xlu0 %2356
  %v2366 = vadd.f32 %v2286, %v2343
  %v2367 = vadd.f32 %v2287, %v2345
  %v2368 = vadd.f32 %v2288, %v2347
  %v2369 = vadd.f32 %v2289, %v2349
  %v2370 = vadd.f32 %v2290, %v2351
  %v2371 = vadd.f32 %v2291, %v2353
  %v2372 = vadd.f32 %v2292, %v2355
  %v2373 = vadd.f32 %v2293, %v2357
  %v2374 = vtanh.pop %v2366
  %v2375 = vtanh.pop %v2367
  %v2376 = vtanh.pop %v2368
  %v2377 = vtanh.pop %v2369
  %v2378 = vtanh.pop %v2370
  %v2379 = vtanh.pop %v2371
  %v2380 = vtanh.pop %v2372
  %v2381 = vtanh.pop %v2373
  %2390 = vrot.lane.b32.xlu0 %v2374, 64
  %v2391 = vpop.permute.xlu0 %2390
  %2392 = vrot.lane.b32.xlu0 %v2375, 64
  %v2393 = vpop.permute.xlu0 %2392
  %2394 = vrot.lane.b32.xlu0 %v2376, 64
  %v2395 = vpop.permute.xlu0 %2394
  %2396 = vrot.lane.b32.xlu0 %v2377, 64
  %v2397 = vpop.permute.xlu0 %2396
  %2398 = vrot.lane.b32.xlu0 %v2378, 64
  %v2399 = vpop.permute.xlu0 %2398
  %2400 = vrot.lane.b32.xlu0 %v2379, 64
  %v2401 = vpop.permute.xlu0 %2400
  %2402 = vrot.lane.b32.xlu0 %v2380, 64
  %v2403 = vpop.permute.xlu0 %2402
  %2404 = vrot.lane.b32.xlu0 %v2381, 64
  %v2405 = vpop.permute.xlu0 %2404
  %v2414 = vmul.f32 %v2148, %v2391
  %v2415 = vmul.f32 %v2163, %v2393
  %v2416 = vmul.f32 %v2178, %v2395
  %v2417 = vmul.f32 %v2193, %v2397
  %v2418 = vmul.f32 %v2208, %v2399
  %v2419 = vmul.f32 %v2223, %v2401
  %v2420 = vmul.f32 %v2238, %v2403
  %v2421 = vmul.f32 %v2253, %v2405
  %v2430 = vrot.slane %v2414, 5
  %v2431 = vrot.slane %v2415, 4
  %v2432 = vsel %vm474, %v2431, %v2430
  %v2433 = vrot.slane %v2416, 3
  %v2434 = vsel %vm477, %v2433, %v2432
  %v2435 = vrot.slane %v2417, 2
  %v2436 = vsel %vm480, %v2435, %v2434
  %v2437 = vrot.slane %v2418, 1
  %v2438 = vsel %vm483, %v2437, %v2436
  %v2439 = vsel %vm486, %v2419, %v2438
  %v2440 = vrot.slane %v2420, 7
  %v2441 = vsel %vm489, %v2440, %v2439
  %v2442 = vrot.slane %v2421, 6
  %v2443 = vsel %vm492, %v2442, %v2441
  %2444 = vrot.lane.b32.xlu0 %v2443, 32
  %v2445 = vpop.permute.xlu0 %2444
  %v2446 = vsel %vm52, %v2445, 0
  %2448 = vmatpush.msra.mxu0 0.0
  %2449 = vmatpush.msra.mxu0 0.0
  %2450 = vmatpush.msra.mxu0 0.0
  %2451 = vmatpush.msra.mxu0 0.0
  %2452 = vmatpush.msra.mxu0 0.0
  %2453 = vmatpush.msra.mxu0 0.0
  %2454 = vmatpush.msra.mxu0 0.0
  %2455 = vmatpush.msra.mxu0 0.0
  %2456 = vmatpush.msra.mxu0 0.0
  %2457 = vmatpush.msra.mxu0 0.0
  %2458 = vmatpush.msra.mxu0 0.0
  %2459 = vmatpush.msra.mxu0 0.0
  %2460 = vmatpush.msra.mxu0 %v121
  %2461 = vmatpush.msra.mxu0 %v120
  %2462 = vmatpush.msra.mxu0 %v119
  %2463 = vmatpush.msra.mxu0 %v118
  %2464 = vmatmul.f32.gmra.mxu0 %v2446
  %v2465 = vpop.f32.mrf.mxu0
  %v2466 = vadd.f32 0.0, %v2465
  %2467 = vdwg.mxu0
  %v2469 = vrot.slane %v2466, 2
  %v2470 = vrot.slane %v2466, 3
  %v2471 = vrot.slane %v2466, 4
  %v2472 = vrot.slane %v2466, 5
  %v2473 = vrot.slane %v2466, 6
  %v2474 = vrot.slane %v2466, 7
  %v2475 = vrot.slane %v2466, 1
  %v2484 = vadd.f32 %v95, %v2469
  %v2485 = vadd.f32 %v98, %v2470
  %v2486 = vadd.f32 %v101, %v2471
  %v2487 = vadd.f32 %v104, %v2472
  %v2488 = vadd.f32 %v107, %v2473
  %v2489 = vadd.f32 %v110, %v2474
  %v2490 = vadd.f32 %v113, %v2466
  %v2491 = vadd.f32 %v116, %v2475
  %v2492 = vxor.u32 %v2484, 2147483648
  %v2493 = vxor.u32 %v2485, 2147483648
  %v2494 = vxor.u32 %v2486, 2147483648
  %v2495 = vxor.u32 %v2487, 2147483648
  %v2496 = vxor.u32 %v2488, 2147483648
  %v2497 = vxor.u32 %v2489, 2147483648
  %v2498 = vxor.u32 %v2490, 2147483648
  %v2499 = vxor.u32 %v2491, 2147483648
  %v2500 = vmul.f32 %v2492, 1.442695
  %v2501 = vpow.pop %v2500
  %v2502 = vmul.f32 %v2493, 1.442695
  %v2503 = vpow.pop %v2502
  %v2504 = vmul.f32 %v2494, 1.442695
  %v2505 = vpow.pop %v2504
  %v2506 = vmul.f32 %v2495, 1.442695
  %v2507 = vpow.pop %v2506
  %v2508 = vmul.f32 %v2496, 1.442695
  %v2509 = vpow.pop %v2508
  %v2510 = vmul.f32 %v2497, 1.442695
  %v2511 = vpow.pop %v2510
  %v2512 = vmul.f32 %v2498, 1.442695
  %v2513 = vpow.pop %v2512
  %v2514 = vmul.f32 %v2499, 1.442695
  %v2515 = vpow.pop %v2514
  %v2516 = vadd.f32 %v2501, 1.0
  %v2517 = vadd.f32 %v2503, 1.0
  %v2518 = vadd.f32 %v2505, 1.0
  %v2519 = vadd.f32 %v2507, 1.0
  %v2520 = vadd.f32 %v2509, 1.0
  %v2521 = vadd.f32 %v2511, 1.0
  %v2522 = vadd.f32 %v2513, 1.0
  %v2523 = vadd.f32 %v2515, 1.0
  %v2524 = vrcp.pop %v2516
  %v2525 = vmul.f32 %v2516, %v2524
  %v2526 = vsub.f32 1.0, %v2525
  %v2527 = vmul.f32 %v2524, %v2526
  %v2528 = vadd.f32 %v2524, %v2527
  %vm2529 = vweird.f32 %v2516
  %vm2530 = vweird.f32 %v2524
  %vm2531 = vmor %vm2529, %vm2530
  %v2532 = vsel %vm2531, %v2524, %v2528
  %v2533 = vand.u32 2147483647, %v2516
  %vm2534 = vcmp.eq.f32.partialorder %v2533, 8.507059e+37
  %v2535 = vand.u32 %v2516, 2147483648
  %v2536 = vor.u32 1.1754944e-38, %v2535
  %v2537 = vsel %vm2534, %v2536, %v2532
  %v2538 = vmul.f32 1.0, %v2537
  %v2539 = vrcp.pop %v2517
  %v2540 = vmul.f32 %v2517, %v2539
  %v2541 = vsub.f32 1.0, %v2540
  %v2542 = vmul.f32 %v2539, %v2541
  %v2543 = vadd.f32 %v2539, %v2542
  %vm2544 = vweird.f32 %v2517
  %vm2545 = vweird.f32 %v2539
  %vm2546 = vmor %vm2544, %vm2545
  %v2547 = vsel %vm2546, %v2539, %v2543
  %v2548 = vand.u32 2147483647, %v2517
  %vm2549 = vcmp.eq.f32.partialorder %v2548, 8.507059e+37
  %v2550 = vand.u32 %v2517, 2147483648
  %v2551 = vor.u32 1.1754944e-38, %v2550
  %v2552 = vsel %vm2549, %v2551, %v2547
  %v2553 = vmul.f32 1.0, %v2552
  %v2554 = vrcp.pop %v2518
  %v2555 = vmul.f32 %v2518, %v2554
  %v2556 = vsub.f32 1.0, %v2555
  %v2557 = vmul.f32 %v2554, %v2556
  %v2558 = vadd.f32 %v2554, %v2557
  %vm2559 = vweird.f32 %v2518
  %vm2560 = vweird.f32 %v2554
  %vm2561 = vmor %vm2559, %vm2560
  %v2562 = vsel %vm2561, %v2554, %v2558
  %v2563 = vand.u32 2147483647, %v2518
  %vm2564 = vcmp.eq.f32.partialorder %v2563, 8.507059e+37
  %v2565 = vand.u32 %v2518, 2147483648
  %v2566 = vor.u32 1.1754944e-38, %v2565
  %v2567 = vsel %vm2564, %v2566, %v2562
  %v2568 = vmul.f32 1.0, %v2567
  %v2569 = vrcp.pop %v2519
  %v2570 = vmul.f32 %v2519, %v2569
  %v2571 = vsub.f32 1.0, %v2570
  %v2572 = vmul.f32 %v2569, %v2571
  %v2573 = vadd.f32 %v2569, %v2572
  %vm2574 = vweird.f32 %v2519
  %vm2575 = vweird.f32 %v2569
  %vm2576 = vmor %vm2574, %vm2575
  %v2577 = vsel %vm2576, %v2569, %v2573
  %v2578 = vand.u32 2147483647, %v2519
  %vm2579 = vcmp.eq.f32.partialorder %v2578, 8.507059e+37
  %v2580 = vand.u32 %v2519, 2147483648
  %v2581 = vor.u32 1.1754944e-38, %v2580
  %v2582 = vsel %vm2579, %v2581, %v2577
  %v2583 = vmul.f32 1.0, %v2582
  %v2584 = vrcp.pop %v2520
  %v2585 = vmul.f32 %v2520, %v2584
  %v2586 = vsub.f32 1.0, %v2585
  %v2587 = vmul.f32 %v2584, %v2586
  %v2588 = vadd.f32 %v2584, %v2587
  %vm2589 = vweird.f32 %v2520
  %vm2590 = vweird.f32 %v2584
  %vm2591 = vmor %vm2589, %vm2590
  %v2592 = vsel %vm2591, %v2584, %v2588
  %v2593 = vand.u32 2147483647, %v2520
  %vm2594 = vcmp.eq.f32.partialorder %v2593, 8.507059e+37
  %v2595 = vand.u32 %v2520, 2147483648
  %v2596 = vor.u32 1.1754944e-38, %v2595
  %v2597 = vsel %vm2594, %v2596, %v2592
  %v2598 = vmul.f32 1.0, %v2597
  %v2599 = vrcp.pop %v2521
  %v2600 = vmul.f32 %v2521, %v2599
  %v2601 = vsub.f32 1.0, %v2600
  %v2602 = vmul.f32 %v2599, %v2601
  %v2603 = vadd.f32 %v2599, %v2602
  %vm2604 = vweird.f32 %v2521
  %vm2605 = vweird.f32 %v2599
  %vm2606 = vmor %vm2604, %vm2605
  %v2607 = vsel %vm2606, %v2599, %v2603
  %v2608 = vand.u32 2147483647, %v2521
  %vm2609 = vcmp.eq.f32.partialorder %v2608, 8.507059e+37
  %v2610 = vand.u32 %v2521, 2147483648
  %v2611 = vor.u32 1.1754944e-38, %v2610
  %v2612 = vsel %vm2609, %v2611, %v2607
  %v2613 = vmul.f32 1.0, %v2612
  %v2614 = vrcp.pop %v2522
  %v2615 = vmul.f32 %v2522, %v2614
  %v2616 = vsub.f32 1.0, %v2615
  %v2617 = vmul.f32 %v2614, %v2616
  %v2618 = vadd.f32 %v2614, %v2617
  %vm2619 = vweird.f32 %v2522
  %vm2620 = vweird.f32 %v2614
  %vm2621 = vmor %vm2619, %vm2620
  %v2622 = vsel %vm2621, %v2614, %v2618
  %v2623 = vand.u32 2147483647, %v2522
  %vm2624 = vcmp.eq.f32.partialorder %v2623, 8.507059e+37
  %v2625 = vand.u32 %v2522, 2147483648
  %v2626 = vor.u32 1.1754944e-38, %v2625
  %v2627 = vsel %vm2624, %v2626, %v2622
  %v2628 = vmul.f32 1.0, %v2627
  %v2629 = vrcp.pop %v2523
  %v2630 = vmul.f32 %v2523, %v2629
  %v2631 = vsub.f32 1.0, %v2630
  %v2632 = vmul.f32 %v2629, %v2631
  %v2633 = vadd.f32 %v2629, %v2632
  %vm2634 = vweird.f32 %v2523
  %vm2635 = vweird.f32 %v2629
  %vm2636 = vmor %vm2634, %vm2635
  %v2637 = vsel %vm2636, %v2629, %v2633
  %v2638 = vand.u32 2147483647, %v2523
  %vm2639 = vcmp.eq.f32.partialorder %v2638, 8.507059e+37
  %v2640 = vand.u32 %v2523, 2147483648
  %v2641 = vor.u32 1.1754944e-38, %v2640
  %v2642 = vsel %vm2639, %v2641, %v2637
  %v2643 = vmul.f32 1.0, %v2642
  %v2644 = vtanh.pop %v2484
  %v2645 = vtanh.pop %v2485
  %v2646 = vtanh.pop %v2486
  %v2647 = vtanh.pop %v2487
  %v2648 = vtanh.pop %v2488
  %v2649 = vtanh.pop %v2489
  %v2650 = vtanh.pop %v2490
  %v2651 = vtanh.pop %v2491
  %v2660 = vrot.slane %v2366, 7
  %v2661 = vrot.slane %v2367, 7
  %v2662 = vrot.slane %v2368, 7
  %v2663 = vrot.slane %v2369, 7
  %v2664 = vrot.slane %v2370, 7
  %v2665 = vrot.slane %v2371, 7
  %v2666 = vrot.slane %v2372, 7
  %v2667 = vrot.slane %v2373, 7
  %v2676 = vmul.f32 %v2538, %v2660
  %v2677 = vmul.f32 %v2553, %v2661
  %v2678 = vmul.f32 %v2568, %v2662
  %v2679 = vmul.f32 %v2583, %v2663
  %v2680 = vmul.f32 %v2598, %v2664
  %v2681 = vmul.f32 %v2613, %v2665
  %v2682 = vmul.f32 %v2628, %v2666
  %v2683 = vmul.f32 %v2643, %v2667
  %2692 = vrot.lane.b32.xlu0 %v2644, 64
  %v2693 = vpop.permute.xlu0 %2692
  %2694 = vrot.lane.b32.xlu0 %v2645, 64
  %v2695 = vpop.permute.xlu0 %2694
  %2696 = vrot.lane.b32.xlu0 %v2646, 64
  %v2697 = vpop.permute.xlu0 %2696
  %2698 = vrot.lane.b32.xlu0 %v2647, 64
  %v2699 = vpop.permute.xlu0 %2698
  %2700 = vrot.lane.b32.xlu0 %v2648, 64
  %v2701 = vpop.permute.xlu0 %2700
  %2702 = vrot.lane.b32.xlu0 %v2649, 64
  %v2703 = vpop.permute.xlu0 %2702
  %2704 = vrot.lane.b32.xlu0 %v2650, 64
  %v2705 = vpop.permute.xlu0 %2704
  %2706 = vrot.lane.b32.xlu0 %v2651, 64
  %v2707 = vpop.permute.xlu0 %2706
  %v2716 = vmul.f32 %v2538, %v2693
  %v2717 = vmul.f32 %v2553, %v2695
  %v2718 = vmul.f32 %v2568, %v2697
  %v2719 = vmul.f32 %v2583, %v2699
  %v2720 = vmul.f32 %v2598, %v2701
  %v2721 = vmul.f32 %v2613, %v2703
  %v2722 = vmul.f32 %v2628, %v2705
  %v2723 = vmul.f32 %v2643, %v2707
  %2732 = vrot.lane.b32.xlu0 %v2716, 32
  %v2733 = vpop.permute.xlu0 %2732
  %2734 = vrot.lane.b32.xlu0 %v2717, 32
  %v2735 = vpop.permute.xlu0 %2734
  %2736 = vrot.lane.b32.xlu0 %v2718, 32
  %v2737 = vpop.permute.xlu0 %2736
  %2738 = vrot.lane.b32.xlu0 %v2719, 32
  %v2739 = vpop.permute.xlu0 %2738
  %2740 = vrot.lane.b32.xlu0 %v2720, 32
  %v2741 = vpop.permute.xlu0 %2740
  %2742 = vrot.lane.b32.xlu0 %v2721, 32
  %v2743 = vpop.permute.xlu0 %2742
  %2744 = vrot.lane.b32.xlu0 %v2722, 32
  %v2745 = vpop.permute.xlu0 %2744
  %2746 = vrot.lane.b32.xlu0 %v2723, 32
  %v2747 = vpop.permute.xlu0 %2746
  %v2756 = vadd.f32 %v2676, %v2733
  %v2757 = vadd.f32 %v2677, %v2735
  %v2758 = vadd.f32 %v2678, %v2737
  %v2759 = vadd.f32 %v2679, %v2739
  %v2760 = vadd.f32 %v2680, %v2741
  %v2761 = vadd.f32 %v2681, %v2743
  %v2762 = vadd.f32 %v2682, %v2745
  %v2763 = vadd.f32 %v2683, %v2747
  %v2764 = vtanh.pop %v2756
  %v2765 = vtanh.pop %v2757
  %v2766 = vtanh.pop %v2758
  %v2767 = vtanh.pop %v2759
  %v2768 = vtanh.pop %v2760
  %v2769 = vtanh.pop %v2761
  %v2770 = vtanh.pop %v2762
  %v2771 = vtanh.pop %v2763
  %2780 = vrot.lane.b32.xlu0 %v2764, 64
  %v2781 = vpop.permute.xlu0 %2780
  %2782 = vrot.lane.b32.xlu0 %v2765, 64
  %v2783 = vpop.permute.xlu0 %2782
  %2784 = vrot.lane.b32.xlu0 %v2766, 64
  %v2785 = vpop.permute.xlu0 %2784
  %2786 = vrot.lane.b32.xlu0 %v2767, 64
  %v2787 = vpop.permute.xlu0 %2786
  %2788 = vrot.lane.b32.xlu0 %v2768, 64
  %v2789 = vpop.permute.xlu0 %2788
  %2790 = vrot.lane.b32.xlu0 %v2769, 64
  %v2791 = vpop.permute.xlu0 %2790
  %2792 = vrot.lane.b32.xlu0 %v2770, 64
  %v2793 = vpop.permute.xlu0 %2792
  %2794 = vrot.lane.b32.xlu0 %v2771, 64
  %v2795 = vpop.permute.xlu0 %2794
  %v2804 = vmul.f32 %v2538, %v2781
  %v2805 = vmul.f32 %v2553, %v2783
  %v2806 = vmul.f32 %v2568, %v2785
  %v2807 = vmul.f32 %v2583, %v2787
  %v2808 = vmul.f32 %v2598, %v2789
  %v2809 = vmul.f32 %v2613, %v2791
  %v2810 = vmul.f32 %v2628, %v2793
  %v2811 = vmul.f32 %v2643, %v2795
  %v2820 = vrot.slane %v2804, 6
  %v2821 = vrot.slane %v2805, 5
  %v2822 = vsel %vm474, %v2821, %v2820
  %v2823 = vrot.slane %v2806, 4
  %v2824 = vsel %vm477, %v2823, %v2822
  %v2825 = vrot.slane %v2807, 3
  %v2826 = vsel %vm480, %v2825, %v2824
  %v2827 = vrot.slane %v2808, 2
  %v2828 = vsel %vm483, %v2827, %v2826
  %v2829 = vrot.slane %v2809, 1
  %v2830 = vsel %vm486, %v2829, %v2828
  %v2831 = vsel %vm489, %v2810, %v2830
  %v2832 = vrot.slane %v2811, 7
  %v2833 = vsel %vm492, %v2832, %v2831
  %2834 = vrot.lane.b32.xlu0 %v2833, 32
  %v2835 = vpop.permute.xlu0 %2834
  %v2836 = vsel %vm52, %v2835, 0
  %2838 = vmatpush.msra.mxu0 0.0
  %2839 = vmatpush.msra.mxu0 0.0
  %2840 = vmatpush.msra.mxu0 0.0
  %2841 = vmatpush.msra.mxu0 0.0
  %2842 = vmatpush.msra.mxu0 0.0
  %2843 = vmatpush.msra.mxu0 0.0
  %2844 = vmatpush.msra.mxu0 0.0
  %2845 = vmatpush.msra.mxu0 0.0
  %2846 = vmatpush.msra.mxu0 0.0
  %2847 = vmatpush.msra.mxu0 0.0
  %2848 = vmatpush.msra.mxu0 0.0
  %2849 = vmatpush.msra.mxu0 0.0
  %2850 = vmatpush.msra.mxu0 %v121
  %2851 = vmatpush.msra.mxu0 %v120
  %2852 = vmatpush.msra.mxu0 %v119
  %2853 = vmatpush.msra.mxu0 %v118
  %2854 = vmatmul.f32.gmra.mxu0 %v2836
  %v2855 = vpop.f32.mrf.mxu0
  %v2856 = vadd.f32 0.0, %v2855
  %2857 = vdwg.mxu0
  %v2859 = vrot.slane %v2856, 1
  %v2860 = vrot.slane %v2856, 2
  %v2861 = vrot.slane %v2856, 3
  %v2862 = vrot.slane %v2856, 4
  %v2863 = vrot.slane %v2856, 5
  %v2864 = vrot.slane %v2856, 6
  %v2865 = vrot.slane %v2856, 7
  %v2874 = vadd.f32 %v95, %v2859
  %v2875 = vadd.f32 %v98, %v2860
  %v2876 = vadd.f32 %v101, %v2861
  %v2877 = vadd.f32 %v104, %v2862
  %v2878 = vadd.f32 %v107, %v2863
  %v2879 = vadd.f32 %v110, %v2864
  %v2880 = vadd.f32 %v113, %v2865
  %v2881 = vadd.f32 %v116, %v2856
  %v2882 = vxor.u32 %v2874, 2147483648
  %v2883 = vxor.u32 %v2875, 2147483648
  %v2884 = vxor.u32 %v2876, 2147483648
  %v2885 = vxor.u32 %v2877, 2147483648
  %v2886 = vxor.u32 %v2878, 2147483648
  %v2887 = vxor.u32 %v2879, 2147483648
  %v2888 = vxor.u32 %v2880, 2147483648
  %v2889 = vxor.u32 %v2881, 2147483648
  %v2890 = vmul.f32 %v2882, 1.442695
  %v2891 = vpow.pop %v2890
  %v2892 = vmul.f32 %v2883, 1.442695
  %v2893 = vpow.pop %v2892
  %v2894 = vmul.f32 %v2884, 1.442695
  %v2895 = vpow.pop %v2894
  %v2896 = vmul.f32 %v2885, 1.442695
  %v2897 = vpow.pop %v2896
  %v2898 = vmul.f32 %v2886, 1.442695
  %v2899 = vpow.pop %v2898
  %v2900 = vmul.f32 %v2887, 1.442695
  %v2901 = vpow.pop %v2900
  %v2902 = vmul.f32 %v2888, 1.442695
  %v2903 = vpow.pop %v2902
  %v2904 = vmul.f32 %v2889, 1.442695
  %v2905 = vpow.pop %v2904
  %v2906 = vadd.f32 %v2891, 1.0
  %v2907 = vadd.f32 %v2893, 1.0
  %v2908 = vadd.f32 %v2895, 1.0
  %v2909 = vadd.f32 %v2897, 1.0
  %v2910 = vadd.f32 %v2899, 1.0
  %v2911 = vadd.f32 %v2901, 1.0
  %v2912 = vadd.f32 %v2903, 1.0
  %v2913 = vadd.f32 %v2905, 1.0
  %v2914 = vrcp.pop %v2906
  %v2915 = vmul.f32 %v2906, %v2914
  %v2916 = vsub.f32 1.0, %v2915
  %v2917 = vmul.f32 %v2914, %v2916
  %v2918 = vadd.f32 %v2914, %v2917
  %vm2919 = vweird.f32 %v2906
  %vm2920 = vweird.f32 %v2914
  %vm2921 = vmor %vm2919, %vm2920
  %v2922 = vsel %vm2921, %v2914, %v2918
  %v2923 = vand.u32 2147483647, %v2906
  %vm2924 = vcmp.eq.f32.partialorder %v2923, 8.507059e+37
  %v2925 = vand.u32 %v2906, 2147483648
  %v2926 = vor.u32 1.1754944e-38, %v2925
  %v2927 = vsel %vm2924, %v2926, %v2922
  %v2928 = vmul.f32 1.0, %v2927
  %v2929 = vrcp.pop %v2907
  %v2930 = vmul.f32 %v2907, %v2929
  %v2931 = vsub.f32 1.0, %v2930
  %v2932 = vmul.f32 %v2929, %v2931
  %v2933 = vadd.f32 %v2929, %v2932
  %vm2934 = vweird.f32 %v2907
  %vm2935 = vweird.f32 %v2929
  %vm2936 = vmor %vm2934, %vm2935
  %v2937 = vsel %vm2936, %v2929, %v2933
  %v2938 = vand.u32 2147483647, %v2907
  %vm2939 = vcmp.eq.f32.partialorder %v2938, 8.507059e+37
  %v2940 = vand.u32 %v2907, 2147483648
  %v2941 = vor.u32 1.1754944e-38, %v2940
  %v2942 = vsel %vm2939, %v2941, %v2937
  %v2943 = vmul.f32 1.0, %v2942
  %v2944 = vrcp.pop %v2908
  %v2945 = vmul.f32 %v2908, %v2944
  %v2946 = vsub.f32 1.0, %v2945
  %v2947 = vmul.f32 %v2944, %v2946
  %v2948 = vadd.f32 %v2944, %v2947
  %vm2949 = vweird.f32 %v2908
  %vm2950 = vweird.f32 %v2944
  %vm2951 = vmor %vm2949, %vm2950
  %v2952 = vsel %vm2951, %v2944, %v2948
  %v2953 = vand.u32 2147483647, %v2908
  %vm2954 = vcmp.eq.f32.partialorder %v2953, 8.507059e+37
  %v2955 = vand.u32 %v2908, 2147483648
  %v2956 = vor.u32 1.1754944e-38, %v2955
  %v2957 = vsel %vm2954, %v2956, %v2952
  %v2958 = vmul.f32 1.0, %v2957
  %v2959 = vrcp.pop %v2909
  %v2960 = vmul.f32 %v2909, %v2959
  %v2961 = vsub.f32 1.0, %v2960
  %v2962 = vmul.f32 %v2959, %v2961
  %v2963 = vadd.f32 %v2959, %v2962
  %vm2964 = vweird.f32 %v2909
  %vm2965 = vweird.f32 %v2959
  %vm2966 = vmor %vm2964, %vm2965
  %v2967 = vsel %vm2966, %v2959, %v2963
  %v2968 = vand.u32 2147483647, %v2909
  %vm2969 = vcmp.eq.f32.partialorder %v2968, 8.507059e+37
  %v2970 = vand.u32 %v2909, 2147483648
  %v2971 = vor.u32 1.1754944e-38, %v2970
  %v2972 = vsel %vm2969, %v2971, %v2967
  %v2973 = vmul.f32 1.0, %v2972
  %v2974 = vrcp.pop %v2910
  %v2975 = vmul.f32 %v2910, %v2974
  %v2976 = vsub.f32 1.0, %v2975
  %v2977 = vmul.f32 %v2974, %v2976
  %v2978 = vadd.f32 %v2974, %v2977
  %vm2979 = vweird.f32 %v2910
  %vm2980 = vweird.f32 %v2974
  %vm2981 = vmor %vm2979, %vm2980
  %v2982 = vsel %vm2981, %v2974, %v2978
  %v2983 = vand.u32 2147483647, %v2910
  %vm2984 = vcmp.eq.f32.partialorder %v2983, 8.507059e+37
  %v2985 = vand.u32 %v2910, 2147483648
  %v2986 = vor.u32 1.1754944e-38, %v2985
  %v2987 = vsel %vm2984, %v2986, %v2982
  %v2988 = vmul.f32 1.0, %v2987
  %v2989 = vrcp.pop %v2911
  %v2990 = vmul.f32 %v2911, %v2989
  %v2991 = vsub.f32 1.0, %v2990
  %v2992 = vmul.f32 %v2989, %v2991
  %v2993 = vadd.f32 %v2989, %v2992
  %vm2994 = vweird.f32 %v2911
  %vm2995 = vweird.f32 %v2989
  %vm2996 = vmor %vm2994, %vm2995
  %v2997 = vsel %vm2996, %v2989, %v2993
  %v2998 = vand.u32 2147483647, %v2911
  %vm2999 = vcmp.eq.f32.partialorder %v2998, 8.507059e+37
  %v3000 = vand.u32 %v2911, 2147483648
  %v3001 = vor.u32 1.1754944e-38, %v3000
  %v3002 = vsel %vm2999, %v3001, %v2997
  %v3003 = vmul.f32 1.0, %v3002
  %v3004 = vrcp.pop %v2912
  %v3005 = vmul.f32 %v2912, %v3004
  %v3006 = vsub.f32 1.0, %v3005
  %v3007 = vmul.f32 %v3004, %v3006
  %v3008 = vadd.f32 %v3004, %v3007
  %vm3009 = vweird.f32 %v2912
  %vm3010 = vweird.f32 %v3004
  %vm3011 = vmor %vm3009, %vm3010
  %v3012 = vsel %vm3011, %v3004, %v3008
  %v3013 = vand.u32 2147483647, %v2912
  %vm3014 = vcmp.eq.f32.partialorder %v3013, 8.507059e+37
  %v3015 = vand.u32 %v2912, 2147483648
  %v3016 = vor.u32 1.1754944e-38, %v3015
  %v3017 = vsel %vm3014, %v3016, %v3012
  %v3018 = vmul.f32 1.0, %v3017
  %v3019 = vrcp.pop %v2913
  %v3020 = vmul.f32 %v2913, %v3019
  %v3021 = vsub.f32 1.0, %v3020
  %v3022 = vmul.f32 %v3019, %v3021
  %v3023 = vadd.f32 %v3019, %v3022
  %vm3024 = vweird.f32 %v2913
  %vm3025 = vweird.f32 %v3019
  %vm3026 = vmor %vm3024, %vm3025
  %v3027 = vsel %vm3026, %v3019, %v3023
  %v3028 = vand.u32 2147483647, %v2913
  %vm3029 = vcmp.eq.f32.partialorder %v3028, 8.507059e+37
  %v3030 = vand.u32 %v2913, 2147483648
  %v3031 = vor.u32 1.1754944e-38, %v3030
  %v3032 = vsel %vm3029, %v3031, %v3027
  %v3033 = vmul.f32 1.0, %v3032
  %v3034 = vtanh.pop %v2874
  %v3035 = vtanh.pop %v2875
  %v3036 = vtanh.pop %v2876
  %v3037 = vtanh.pop %v2877
  %v3038 = vtanh.pop %v2878
  %v3039 = vtanh.pop %v2879
  %v3040 = vtanh.pop %v2880
  %v3041 = vtanh.pop %v2881
  %v3050 = vrot.slane %v2756, 7
  %v3051 = vrot.slane %v2757, 7
  %v3052 = vrot.slane %v2758, 7
  %v3053 = vrot.slane %v2759, 7
  %v3054 = vrot.slane %v2760, 7
  %v3055 = vrot.slane %v2761, 7
  %v3056 = vrot.slane %v2762, 7
  %v3057 = vrot.slane %v2763, 7
  %v3066 = vmul.f32 %v2928, %v3050
  %v3067 = vmul.f32 %v2943, %v3051
  %v3068 = vmul.f32 %v2958, %v3052
  %v3069 = vmul.f32 %v2973, %v3053
  %v3070 = vmul.f32 %v2988, %v3054
  %v3071 = vmul.f32 %v3003, %v3055
  %v3072 = vmul.f32 %v3018, %v3056
  %v3073 = vmul.f32 %v3033, %v3057
  %3082 = vrot.lane.b32.xlu0 %v3034, 64
  %v3083 = vpop.permute.xlu0 %3082
  %3084 = vrot.lane.b32.xlu0 %v3035, 64
  %v3085 = vpop.permute.xlu0 %3084
  %3086 = vrot.lane.b32.xlu0 %v3036, 64
  %v3087 = vpop.permute.xlu0 %3086
  %3088 = vrot.lane.b32.xlu0 %v3037, 64
  %v3089 = vpop.permute.xlu0 %3088
  %3090 = vrot.lane.b32.xlu0 %v3038, 64
  %v3091 = vpop.permute.xlu0 %3090
  %3092 = vrot.lane.b32.xlu0 %v3039, 64
  %v3093 = vpop.permute.xlu0 %3092
  %3094 = vrot.lane.b32.xlu0 %v3040, 64
  %v3095 = vpop.permute.xlu0 %3094
  %3096 = vrot.lane.b32.xlu0 %v3041, 64
  %v3097 = vpop.permute.xlu0 %3096
  %v3106 = vmul.f32 %v2928, %v3083
  %v3107 = vmul.f32 %v2943, %v3085
  %v3108 = vmul.f32 %v2958, %v3087
  %v3109 = vmul.f32 %v2973, %v3089
  %v3110 = vmul.f32 %v2988, %v3091
  %v3111 = vmul.f32 %v3003, %v3093
  %v3112 = vmul.f32 %v3018, %v3095
  %v3113 = vmul.f32 %v3033, %v3097
  %3122 = vrot.lane.b32.xlu0 %v3106, 32
  %v3123 = vpop.permute.xlu0 %3122
  %3124 = vrot.lane.b32.xlu0 %v3107, 32
  %v3125 = vpop.permute.xlu0 %3124
  %3126 = vrot.lane.b32.xlu0 %v3108, 32
  %v3127 = vpop.permute.xlu0 %3126
  %3128 = vrot.lane.b32.xlu0 %v3109, 32
  %v3129 = vpop.permute.xlu0 %3128
  %3130 = vrot.lane.b32.xlu0 %v3110, 32
  %v3131 = vpop.permute.xlu0 %3130
  %3132 = vrot.lane.b32.xlu0 %v3111, 32
  %v3133 = vpop.permute.xlu0 %3132
  %3134 = vrot.lane.b32.xlu0 %v3112, 32
  %v3135 = vpop.permute.xlu0 %3134
  %3136 = vrot.lane.b32.xlu0 %v3113, 32
  %v3137 = vpop.permute.xlu0 %3136
  %v3146 = vadd.f32 %v3066, %v3123
  %v3147 = vadd.f32 %v3067, %v3125
  %v3148 = vadd.f32 %v3068, %v3127
  %v3149 = vadd.f32 %v3069, %v3129
  %v3150 = vadd.f32 %v3070, %v3131
  %v3151 = vadd.f32 %v3071, %v3133
  %v3152 = vadd.f32 %v3072, %v3135
  %v3153 = vadd.f32 %v3073, %v3137
  %v3154 = vtanh.pop %v3146
  %v3155 = vtanh.pop %v3147
  %v3156 = vtanh.pop %v3148
  %v3157 = vtanh.pop %v3149
  %v3158 = vtanh.pop %v3150
  %v3159 = vtanh.pop %v3151
  %v3160 = vtanh.pop %v3152
  %v3161 = vtanh.pop %v3153
  %3170 = vrot.lane.b32.xlu0 %v3154, 64
  %v3171 = vpop.permute.xlu0 %3170
  %3172 = vrot.lane.b32.xlu0 %v3155, 64
  %v3173 = vpop.permute.xlu0 %3172
  %3174 = vrot.lane.b32.xlu0 %v3156, 64
  %v3175 = vpop.permute.xlu0 %3174
  %3176 = vrot.lane.b32.xlu0 %v3157, 64
  %v3177 = vpop.permute.xlu0 %3176
  %3178 = vrot.lane.b32.xlu0 %v3158, 64
  %v3179 = vpop.permute.xlu0 %3178
  %3180 = vrot.lane.b32.xlu0 %v3159, 64
  %v3181 = vpop.permute.xlu0 %3180
  %3182 = vrot.lane.b32.xlu0 %v3160, 64
  %v3183 = vpop.permute.xlu0 %3182
  %3184 = vrot.lane.b32.xlu0 %v3161, 64
  %v3185 = vpop.permute.xlu0 %3184
  %v3194 = vmul.f32 %v2928, %v3171
  %v3195 = vmul.f32 %v2943, %v3173
  %v3196 = vmul.f32 %v2958, %v3175
  %v3197 = vmul.f32 %v2973, %v3177
  %v3198 = vmul.f32 %v2988, %v3179
  %v3199 = vmul.f32 %v3003, %v3181
  %v3200 = vmul.f32 %v3018, %v3183
  %v3201 = vmul.f32 %v3033, %v3185
  %s3202 = sld [smem:[#allocation2]]
  %v3203 = vld [vmem:[%s8] sm:$0xff]
  %v3204 = vld [vmem:[%s9] sm:$0xff]
  %v3205 = vmul.f32 %v3203, %v3204
  %v3206 = vsel %vm52, %v3205, 0.0
  %3207 = vadd.xlane.f32.xlu0 %v3206
  %v3208 = vpop.xlane.xlu0 %3207
  %v3209 = vld [vmem:[%s5] sm:$0xff]
  %v3211 = vrot.slane %v3209, 1
  %v3212 = vrot.slane %v3209, 2
  %v3213 = vrot.slane %v3209, 3
  %v3214 = vrot.slane %v3209, 4
  %v3215 = vrot.slane %v3209, 5
  %v3216 = vrot.slane %v3209, 6
  %v3217 = vrot.slane %v3209, 7
  %3218 = vrot.lane.b32.xlu0 %v3211, 96
  %v3219 = vpop.permute.xlu0 %3218
  %3220 = vrot.lane.b32.xlu0 %v3212, 96
  %v3221 = vpop.permute.xlu0 %3220
  %3222 = vrot.lane.b32.xlu0 %v3213, 96
  %v3223 = vpop.permute.xlu0 %3222
  %3224 = vrot.lane.b32.xlu0 %v3214, 96
  %v3225 = vpop.permute.xlu0 %3224
  %3226 = vrot.lane.b32.xlu0 %v3215, 96
  %v3227 = vpop.permute.xlu0 %3226
  %3228 = vrot.lane.b32.xlu0 %v3216, 96
  %v3229 = vpop.permute.xlu0 %3228
  %3230 = vrot.lane.b32.xlu0 %v3217, 96
  %v3231 = vpop.permute.xlu0 %3230
  %3232 = vrot.lane.b32.xlu0 %v3209, 96
  %v3233 = vpop.permute.xlu0 %3232
  %v3242 = vmul.f32 %v3194, %v3219
  %v3243 = vmul.f32 %v3195, %v3221
  %v3244 = vmul.f32 %v3196, %v3223
  %v3245 = vmul.f32 %v3197, %v3225
  %v3246 = vmul.f32 %v3198, %v3227
  %v3247 = vmul.f32 %v3199, %v3229
  %v3248 = vmul.f32 %v3200, %v3231
  %v3249 = vmul.f32 %v3201, %v3233
  %v3258 = vrot.slane %v3243, 7
  %v3259 = vrot.slane %v3244, 6
  %v3260 = vsel %vm474, %v3259, %v3258
  %v3261 = vrot.slane %v3245, 5
  %v3262 = vsel %vm477, %v3261, %v3260
  %v3263 = vrot.slane %v3246, 4
  %v3264 = vsel %vm480, %v3263, %v3262
  %v3265 = vrot.slane %v3247, 3
  %v3266 = vsel %vm483, %v3265, %v3264
  %v3267 = vrot.slane %v3248, 2
  %v3268 = vsel %vm486, %v3267, %v3266
  %v3269 = vrot.slane %v3249, 1
  %v3270 = vsel %vm489, %v3269, %v3268
  %3271 = vrot.lane.b32.xlu0 %v3242, 32
  %v3272 = vpop.permute.xlu0 %3271
  %3273 = vrot.lane.b32.xlu0 %v3270, 32
  %v3274 = vpop.permute.xlu0 %3273
  %vm3277 = vcmask 261127
  %v3278 = vsel %vm3277, %v3272, 0.0
  %3279 = vadd.xlane.f32.xlu0 %v3278
  %v3280 = vpop.xlane.xlu0 %3279
  %vm3281 = vcmask 260096
  %v3282 = vsel %vm3281, %v3274, 0.0
  %3283 = vadd.xlane.f32.xlu0 %v3282
  %v3284 = vpop.xlane.xlu0 %3283
  %v3285 = vld [vmem:[%s6] sm:$0xff]
  %v3286 = vadd.f32 %v3285, 3.5814779
  %v3287 = vld [vmem:[%s7] sm:$0xff]
  %v3288 = vadd.f32 %v3286, %v3287
  %v3289 = vstv %s3202
  %v3290 = vmul.f32 %v3289, %v3208
  %v3291 = vadd.f32 %v3288, %v3290
  %s3292 = ssub.f32 1.0, %s3202
  %v3293 = vstv %s3292
  %v3294 = vmul.f32 %v3293, %v3280
  %v3295 = vmul.f32 %v3293, %v3284
  %vm3298 = vcmask 1040384
  %v3299 = vrot.slane %v3294, 7
  %v3300 = vrot.slane %v3295, 7
  %v3301 = vsel %vm3298, %v3299, %v3300
  %v3303 = vadd.f32 %v3291, %v3301
  %vm3304 = vcmask 7168
  %3305 = vst.msk [vmem:[%s10] sm:$0xff] %vm3304, %v3303
  // Predicated region
  $region42: #{hybrid_forward.3} parent=0 // pred_check
    _
  $region43: #{hybrid_forward.3} parent=0 // pred_check_branch
    %3307 = sbr.rel (0) target = $region45
  $region44: #{hybrid_forward.3} parent=0 // pred_region
    _
  $region45: #{hybrid_forward.3} parent=0 // pred_fallthru
    _
  // Predicated region
  $region46: #{hybrid_forward.3} parent=0 // pred_check
    _
  $region47: #{hybrid_forward.3} parent=0 // pred_check_branch
    %3309 = sbr.rel (0) target = $region49
  $region48: #{hybrid_forward.3} parent=0 // pred_region
    _
  $region49: #{hybrid_forward.3} parent=0 // pred_fallthru
    _

</llo_original>
